<compile_context>
chip_gen: v7x
topology: tpu7x:2x2x1
jax: 0.10.0
libtpu: 0.0.40
codegen_flags: <defaults>
</compile_context>

<pallas_src>
import functools

import jax
import jax.numpy as jnp
import numpy as np
from jax import lax
from jax.experimental import pallas as pl
from jax.experimental.pallas import tpu as pltpu


# --------------------------------------------------------------------------
# Hardware / tiling heuristics
# --------------------------------------------------------------------------
def _vmem_capacity_bytes():
    try:
        info = pltpu.get_tpu_info()
        for attr in ("vmem_capacity_bytes", "vmem_size_bytes", "vmem_bytes"):
            v = getattr(info, attr, None)
            if v:
                return int(v)
    except Exception:
        pass
    return 64 * 1024 * 1024  # conservative default (v7x per-core VMEM)


def _device_kind():
    try:
        return jax.devices()[0].device_kind.lower()
    except Exception:
        return ""


def _estimate_vmem_bytes(TB, T, D_in, H, O, num_layers, mm_bytes,
                         single_buffer_weights):
    """Rough per-batch-tile VMEM footprint (lane-padded to 128)."""
    Hp = max(H, 128)
    proj = T * TB * Hp * mm_bytes
    seq = T * TB * Hp * mm_bytes if num_layers > 1 else 0
    x_blk = 2 * T * TB * max(D_in, 128) * mm_bytes        # double-buffered input
    out_blk = 2 * TB * max(O, 128) * 4
    wbuf = 1 if single_buffer_weights else 2
    weights = 0
    for l in range(num_layers):
        d = D_in if l == 0 else H
        weights += (max(d, 8) * Hp + max(H, 8) * Hp) * mm_bytes + Hp * 4
    weights += max(H, 8) * max(O, 128) * mm_bytes + max(O, 128) * 4
    return proj + seq + x_blk + out_blk + wbuf * weights


def _select_batch_tile(B, T, D_in, H, O, num_layers, mm_bytes,
                       single_buffer_weights, vmem_budget, device_kind):
    B8 = -(-B // 8) * 8
    # Big tiles fill the MXU M-dim; cap by vreg pressure of the f32 h carry.
    cap = 256 if H <= 128 else 128
    TB = min(B8, cap)
    # v7x has 2 TensorCores: prefer >= 2 balanced batch tiles when possible.
    if ("v7" in device_kind or "7x" in device_kind) and B8 >= 16 and TB >= B8:
        TB = (B8 // 2 + 7) // 8 * 8
    TB = max(8, -(-TB // 8) * 8)
    # Shrink until the per-tile footprint fits comfortably in the VMEM budget.
    while TB > 8 and (_estimate_vmem_bytes(TB, T, D_in, H, O, num_layers,
                                           mm_bytes, single_buffer_weights)
                      > 0.75 * vmem_budget):
        TB -= 8
    return TB


def _pick_time_unroll(seq_len, batch_tile, hidden):
    """Unroll factor for the time loop, bounded by (TB,H) f32 carry pressure."""
    carry_bytes = batch_tile * hidden * 4
    cap = 8 if carry_bytes <= (64 << 10) else (4 if carry_bytes <= (128 << 10) else 2)
    if seq_len <= 2 * cap:
        return True                       # fully unroll short sequences
    for u in (cap, 4, 2):
        if u <= cap and seq_len % u == 0:
            return u
    return 1


# --------------------------------------------------------------------------
# Kernel
# --------------------------------------------------------------------------
def _make_rnn_kernel(num_layers, seq_len, batch_tile, hidden_size,
                     compute_dtype, time_unroll):
    """Kernel body; layer loop unrolled at trace time, time loop is fori_loop."""
    TB = batch_tile
    has_seq = num_layers > 1

    def kernel(x_ref, *args):
        # args = [w_ih_T, w_hh_T, bias] * L + [w_lin_T, b_lin]
        #        + out_ref + [proj] (+ [seq] iff num_layers > 1)
        layer_refs = args[: 3 * num_layers]
        rest = args[3 * num_layers:]
        if has_seq:
            w_lin_ref, b_lin_ref, out_ref, proj_ref, seq_ref = rest
        else:
            w_lin_ref, b_lin_ref, out_ref, proj_ref = rest
            seq_ref = None

        h_last = None
        for l in range(num_layers):
            w_ih = layer_refs[3 * l][...]       # (D_l, H), compute_dtype
            w_hh = layer_refs[3 * l + 1][...]   # (H, H),  compute_dtype
            bias = layer_refs[3 * l + 2][...]   # (1, H),  f32  (= b_ih + b_hh)

            # Hoisted input projection for the whole sequence: one big MXU
            # matmul + one f32 bias add, stored to the VMEM scratch
            # (time-major rows: row = t*TB + b).
            layer_in = x_ref[...] if l == 0 else seq_ref[...]
            proj_ref[...] = (
                jnp.dot(layer_in, w_ih, preferred_element_type=jnp.float32) + bias
            ).astype(proj_ref.dtype)

            is_last = l == num_layers - 1

            # TODO(synk): holding W_hh in MXU weight staging across the T-step
            # recurrence (pltpu.matmul_push_rhs / matmul_acc_lhs / matmul_pop)
            # would cut the per-step weight re-push off the serial critical
            # path; kept on jnp.dot here for lowering robustness at small H.
            def step(t, h, *, _w_hh=w_hh, _is_last=is_last):
                row = pl.multiple_of(t * TB, TB)
                pre = proj_ref[pl.ds(row, TB), :].astype(jnp.float32) + jnp.dot(
                    h.astype(compute_dtype), _w_hh,
                    preferred_element_type=jnp.float32)
                h_new = jnp.tanh(pre)          # f32 on VPU/EUP
                if not _is_last:
                    # Next layer's input; dead for the final layer -> skipped
                    # there (saves T vector stores).
                    seq_ref[pl.ds(row, TB), :] = h_new.astype(seq_ref.dtype)
                return h_new

            h0 = jnp.zeros((TB, hidden_size), jnp.float32)
            h_last = lax.fori_loop(0, seq_len, step, h0, unroll=time_unroll)

        # Linear on the last timestep's hidden state of the last layer.
        out_ref[...] = (
            jnp.dot(h_last.astype(compute_dtype), w_lin_ref[...],
                    preferred_element_type=jnp.float32)
            + b_lin_ref[...]
        ).astype(out_ref.dtype)

    return kernel


def _full_spec(shape, single_buffer):
    """Whole-array block, constant index map (resident across the grid)."""
    zeros = (0,) * len(shape)
    idx = lambda i, _z=zeros: _z
    if single_buffer:
        # Constant-index blocks never re-DMA; single-buffer them to halve
        # their VMEM footprint.
        return pl.BlockSpec(tuple(shape), idx, pipeline_mode=pl.Buffered(1))
    return pl.BlockSpec(tuple(shape), idx)


# --------------------------------------------------------------------------
# Forward pass
# --------------------------------------------------------------------------
@functools.partial(
    jax.jit,
    static_argnames=("hidden_size", "output_size", "num_layers", "batch_tile",
                     "matmul_dtype", "vmem_limit_bytes",
                     "single_buffer_weights"))
def _rnn_forward_impl(x, params, *, hidden_size, output_size, num_layers,
                      batch_tile, matmul_dtype, vmem_limit_bytes,
                      single_buffer_weights):
    B, T, D_in = x.shape
    TB = batch_tile
    B_pad = -(-B // TB) * TB
    nbt = B_pad // TB
    mm = matmul_dtype

    x_p = x if B_pad == B else jnp.pad(x, ((0, B_pad - B), (0, 0), (0, 0)))
    # (nbt, T*TB, D_in): one 2-D time-major slab per batch tile (row = t*TB+b).
    x_tiles = (x_p.reshape(nbt, TB, T, D_in)
                  .transpose(0, 2, 1, 3)
                  .reshape(nbt, T * TB, D_in)
                  .astype(mm))

    flat = [x_tiles]
    in_specs = [pl.BlockSpec((None, T * TB, D_in), lambda i: (i, 0, 0))]
    for (w_ih, w_hh, b_ih, b_hh) in params["layers"]:
        w_ih_t = w_ih.T.astype(mm)                               # (D_l, H)
        w_hh_t = w_hh.T.astype(mm)                               # (H, H)
        bias = (b_ih + b_hh).reshape(1, hidden_size).astype(jnp.float32)
        flat += [w_ih_t, w_hh_t, bias]
        in_specs += [_full_spec(w_ih_t.shape, single_buffer_weights),
                     _full_spec(w_hh_t.shape, single_buffer_weights),
                     _full_spec(bias.shape, single_buffer_weights)]
    w_lin_t = params["w_lin"].T.astype(mm)                       # (H, O)
    b_lin = params["b_lin"].reshape(1, output_size).astype(jnp.float32)
    flat += [w_lin_t, b_lin]
    in_specs += [_full_spec(w_lin_t.shape, single_buffer_weights),
                 _full_spec(b_lin.shape, single_buffer_weights)]

    time_unroll = _pick_time_unroll(T, TB, hidden_size)
    kernel = _make_rnn_kernel(num_layers, T, TB, hidden_size, mm, time_unroll)

    # Projection slab in matmul dtype (halves the dominant VMEM consumer on
    # the bf16 path); inter-layer sequence slab only when there is a layer
    # that actually reads it.
    scratch_shapes = [pltpu.VMEM((T * TB, hidden_size), mm)]
    if num_layers > 1:
        scratch_shapes.append(pltpu.VMEM((T * TB, hidden_size), mm))

    out3 = pl.pallas_call(
        kernel,
        grid=(nbt,),
        out_shape=jax.ShapeDtypeStruct((nbt, TB, output_size), jnp.float32),
        in_specs=in_specs,
        out_specs=pl.BlockSpec((None, TB, output_size), lambda i: (i, 0, 0)),
        scratch_shapes=scratch_shapes,
        compiler_params=pltpu.CompilerParams(
            dimension_semantics=("parallel",),
            vmem_limit_bytes=vmem_limit_bytes),
    )(*flat)

    return out3.reshape(B_pad, output_size)[:B]


def rnn_model_forward(x, params, *, hidden_size, output_size, num_layers,
                      batch_tile=None, matmul_dtype=jnp.bfloat16):
    """RNNModel forward. batch_tile=None -> auto-select per device / VMEM."""
    B, T, D_in = x.shape
    if T < 1 or num_layers < 1:
        raise ValueError("seq_len and num_layers must be >= 1")

    mm_bytes = jnp.dtype(matmul_dtype).itemsize
    vmem_cap = _vmem_capacity_bytes()
    # Scoped-VMEM defaults (16/32 MiB) sit far below physical; raise the limit
    # (~100+ MiB on v5e/v6e, ~54 MiB on v7x's 64 MiB) so big tiles can fit.
    vmem_limit = max(32 << 20, int(0.85 * vmem_cap))
    kind = _device_kind()

    if batch_tile is None:
        TB = _select_batch_tile(B, T, D_in, hidden_size, output_size,
                                num_layers, mm_bytes, True, vmem_limit, kind)
    else:
        if batch_tile % 8 != 0:
            raise ValueError("batch_tile must be a multiple of 8 (TPU sublanes)")
        TB = int(batch_tile)

    kwargs = dict(hidden_size=hidden_size, output_size=output_size,
                  num_layers=num_layers, batch_tile=TB,
                  matmul_dtype=matmul_dtype, vmem_limit_bytes=vmem_limit)
    try:
        return _rnn_forward_impl(x, params, single_buffer_weights=True, **kwargs)
    except Exception:
        # Fallback for runtimes where pl.Buffered(1) on constant-index blocks
        # is unsupported; identical semantics, just double-buffered weights.
        return _rnn_forward_impl(x, params, single_buffer_weights=False, **kwargs)


# --------------------------------------------------------------------------
# Params + pure-JAX reference
# --------------------------------------------------------------------------
def init_params(key, input_size, hidden_size, output_size, num_layers):
    """Deterministic parameter init mimicking PyTorch's U(-1/sqrt(H), 1/sqrt(H))."""
    bound = 1.0 / np.sqrt(hidden_size)
    params = {"layers": []}
    for l in range(num_layers):
        d_in = input_size if l == 0 else hidden_size
        key, k1, k2, k3, k4 = jax.random.split(key, 5)
        w_ih = jax.random.uniform(k1, (hidden_size, d_in), jnp.float32, -bound, bound)
        w_hh = jax.random.uniform(k2, (hidden_size, hidden_size), jnp.float32, -bound, bound)
        b_ih = jax.random.uniform(k3, (hidden_size,), jnp.float32, -bound, bound)
        b_hh = jax.random.uniform(k4, (hidden_size,), jnp.float32, -bound, bound)
        params["layers"].append((w_ih, w_hh, b_ih, b_hh))
    key, k1, k2 = jax.random.split(key, 3)
    params["w_lin"] = jax.random.uniform(
        k1, (output_size, hidden_size), jnp.float32, -bound, bound)
    params["b_lin"] = jax.random.uniform(
        k2, (output_size,), jnp.float32, -bound, bound)
    return params


def rnn_model_forward_ref(x, params):
    """Pure-JAX f32 reference (mirrors PyTorch nn.RNN + Linear, eval mode)."""
    seq = x
    h_last = None
    for (w_ih, w_hh, b_ih, b_hh) in params["layers"]:
        B = x.shape[0]
        H = w_hh.shape[0]
        h = jnp.zeros((B, H), jnp.float32)
        outs = []
        for t in range(seq.shape[1]):
            h = jnp.tanh(seq[:, t, :] @ w_ih.T + b_ih + h @ w_hh.T + b_hh)
            outs.append(h)
        seq = jnp.stack(outs, axis=1)
        h_last = h
    return h_last @ params["w_lin"].T + params["b_lin"]


if __name__ == "__main__":
    # Small shapes consistent with the module's forward: x (batch, seq, input)
    B, T = 2, 8
    input_size, hidden_size, output_size, num_layers = 16, 32, 10, 2

    key = jax.random.PRNGKey(0)
    key, xk = jax.random.split(key)
    x = jax.random.normal(xk, (B, T, input_size), jnp.float32)
    params = init_params(key, input_size, hidden_size, output_size, num_layers)

    ref = rnn_model_forward_ref(x, params)

    # Exact-precision path (f32 matmul operands + f32 proj scratch).
    out_f32 = rnn_model_forward(
        x, params, hidden_size=hidden_size, output_size=output_size,
        num_layers=num_layers, matmul_dtype=jnp.float32)
    out_f32 = jax.block_until_ready(out_f32)
    np.testing.assert_allclose(np.asarray(out_f32), np.asarray(ref),
                               rtol=1e-5, atol=1e-5)

    # Fast path (bf16 matmul operands / proj scratch, f32 accumulation,
    # bias adds, tanh and h carry): looser tolerance from bf16 rounding only.
    out_bf16 = rnn_model_forward(
        x, params, hidden_size=hidden_size, output_size=output_size,
        num_layers=num_layers, matmul_dtype=jnp.bfloat16)
    out_bf16 = jax.block_until_ready(out_bf16)
    np.testing.assert_allclose(np.asarray(out_bf16), np.asarray(ref),
                               rtol=5e-2, atol=5e-2)

    print("KERNEL_OK")
</pallas_src>

<mosaic_0001>
module attributes {stable_mosaic.version = 11 : i64} {
  func.func @kernel(%arg0: i32, %arg1: memref<1x64x16xf32, #tpu.memory_space<vmem>>, %arg2: memref<16x32xf32, #tpu.memory_space<vmem>>, %arg3: memref<32x32xf32, #tpu.memory_space<vmem>>, %arg4: memref<1x32xf32, #tpu.memory_space<vmem>>, %arg5: memref<32x32xf32, #tpu.memory_space<vmem>>, %arg6: memref<32x32xf32, #tpu.memory_space<vmem>>, %arg7: memref<1x32xf32, #tpu.memory_space<vmem>>, %arg8: memref<32x10xf32, #tpu.memory_space<vmem>>, %arg9: memref<1x10xf32, #tpu.memory_space<vmem>>, %arg10: memref<1x8x10xf32, #tpu.memory_space<vmem>>, %arg11: memref<64x32xf32, #tpu.memory_space<vmem>>, %arg12: memref<64x32xf32, #tpu.memory_space<vmem>>) attributes {dimension_semantics = [#tpu.dimension_semantics<parallel>], iteration_bounds = array<i64: 1>, scalar_prefetch = 0 : i64, scratch_operands = 2 : i64, tpu.core_type = #tpu.core_type<tc>, window_params = [{transform_indices = @transform_0, window_bounds = array<i64: 1, 64, 16>}, {pipeline_mode = #tpu.pipeline_mode<synchronous>, transform_indices = @transform_1, window_bounds = array<i64: 16, 32>}, {pipeline_mode = #tpu.pipeline_mode<synchronous>, transform_indices = @transform_2, window_bounds = array<i64: 32, 32>}, {pipeline_mode = #tpu.pipeline_mode<synchronous>, transform_indices = @transform_3, window_bounds = array<i64: 1, 32>}, {pipeline_mode = #tpu.pipeline_mode<synchronous>, transform_indices = @transform_4, window_bounds = array<i64: 32, 32>}, {pipeline_mode = #tpu.pipeline_mode<synchronous>, transform_indices = @transform_5, window_bounds = array<i64: 32, 32>}, {pipeline_mode = #tpu.pipeline_mode<synchronous>, transform_indices = @transform_6, window_bounds = array<i64: 1, 32>}, {pipeline_mode = #tpu.pipeline_mode<synchronous>, transform_indices = @transform_7, window_bounds = array<i64: 32, 10>}, {pipeline_mode = #tpu.pipeline_mode<synchronous>, transform_indices = @transform_8, window_bounds = array<i64: 1, 10>}, {transform_indices = @transform_9, window_bounds = array<i64: 1, 8, 10>}]} {
    %c0 = arith.constant 0 : index
    %c0_0 = arith.constant 0 : index
    %0 = vector.load %arg2[%c0, %c0_0] : memref<16x32xf32, #tpu.memory_space<vmem>>, vector<16x32xf32>
    %c0_1 = arith.constant 0 : index
    %c0_2 = arith.constant 0 : index
    %1 = vector.load %arg3[%c0_1, %c0_2] : memref<32x32xf32, #tpu.memory_space<vmem>>, vector<32x32xf32>
    %c0_3 = arith.constant 0 : index
    %c0_4 = arith.constant 0 : index
    %2 = vector.load %arg4[%c0_3, %c0_4] : memref<1x32xf32, #tpu.memory_space<vmem>>, vector<1x32xf32>
    %c0_5 = arith.constant 0 : index
    %c0_6 = arith.constant 0 : index
    %c0_7 = arith.constant 0 : index
    %3 = vector.load %arg1[%c0_5, %c0_6, %c0_7] : memref<1x64x16xf32, #tpu.memory_space<vmem>>, vector<1x64x16xf32>
    %4 = vector.shape_cast %3 : vector<1x64x16xf32> to vector<64x16xf32>
    %cst = arith.constant dense<0.000000e+00> : vector<64x32xf32>
    %5 = tpu.matmul %4, %0, %cst {dimension_numbers = #tpu.dot_dimension_numbers<[1], [0], [0], [1], [0, 0, 1, 1], [], []>} : vector<64x16xf32>, vector<16x32xf32>, vector<64x32xf32> -> vector<64x32xf32>
    %6 = vector.broadcast %2 : vector<1x32xf32> to vector<64x32xf32>
    %7 = arith.addf %5, %6 : vector<64x32xf32>
    %c0_8 = arith.constant 0 : index
    %c0_9 = arith.constant 0 : index
    %8 = vector.load %arg11[%c0_8, %c0_9] : memref<64x32xf32, #tpu.memory_space<vmem>>, vector<64x32xf32>
    tpu.vector_store %arg11[%c0_8, %c0_9], %7 {strides = array<i32>} : memref<64x32xf32, #tpu.memory_space<vmem>>, vector<64x32xf32>,
    %cst_10 = arith.constant 0.000000e+00 : f32
    %9 = vector.broadcast %cst_10 : f32 to vector<8x32xf32>
    %c0_i32 = arith.constant 0 : i32
    %c8_i32 = arith.constant 8 : i32
    %10 = arith.muli %c0_i32, %c8_i32 : i32
    %11 = tpu.assume_multiple %10, 8 : i32
    %12 = arith.index_cast %11 : i32 to index
    %c0_11 = arith.constant 0 : index
    %13 = vector.load %arg11[%12, %c0_11] : memref<64x32xf32, #tpu.memory_space<vmem>>, vector<8x32xf32>
    %cst_12 = arith.constant dense<0.000000e+00> : vector<8x32xf32>
    %14 = tpu.matmul %9, %1, %cst_12 {dimension_numbers = #tpu.dot_dimension_numbers<[1], [0], [0], [1], [0, 0, 1, 1], [], []>} : vector<8x32xf32>, vector<32x32xf32>, vector<8x32xf32> -> vector<8x32xf32>
    %15 = arith.addf %13, %14 : vector<8x32xf32>
    %16 = math.tanh %15 : vector<8x32xf32>
    %17 = arith.index_cast %11 : i32 to index
    %c0_13 = arith.constant 0 : index
    %18 = vector.load %arg12[%17, %c0_13] : memref<64x32xf32, #tpu.memory_space<vmem>>, vector<8x32xf32>
    tpu.vector_store %arg12[%17, %c0_13], %16 {strides = array<i32>} : memref<64x32xf32, #tpu.memory_space<vmem>>, vector<8x32xf32>,
    %c1_i32 = arith.constant 1 : i32
    %c8_i32_14 = arith.constant 8 : i32
    %19 = arith.muli %c1_i32, %c8_i32_14 : i32
    %20 = tpu.assume_multiple %19, 8 : i32
    %21 = arith.index_cast %20 : i32 to index
    %c0_15 = arith.constant 0 : index
    %22 = vector.load %arg11[%21, %c0_15] : memref<64x32xf32, #tpu.memory_space<vmem>>, vector<8x32xf32>
    %cst_16 = arith.constant dense<0.000000e+00> : vector<8x32xf32>
    %23 = tpu.matmul %16, %1, %cst_16 {dimension_numbers = #tpu.dot_dimension_numbers<[1], [0], [0], [1], [0, 0, 1, 1], [], []>} : vector<8x32xf32>, vector<32x32xf32>, vector<8x32xf32> -> vector<8x32xf32>
    %24 = arith.addf %22, %23 : vector<8x32xf32>
    %25 = math.tanh %24 : vector<8x32xf32>
    %26 = arith.index_cast %20 : i32 to index
    %c0_17 = arith.constant 0 : index
    %27 = vector.load %arg12[%26, %c0_17] : memref<64x32xf32, #tpu.memory_space<vmem>>, vector<8x32xf32>
    tpu.vector_store %arg12[%26, %c0_17], %25 {strides = array<i32>} : memref<64x32xf32, #tpu.memory_space<vmem>>, vector<8x32xf32>,
    %c2_i32 = arith.constant 2 : i32
    %c8_i32_18 = arith.constant 8 : i32
    %28 = arith.muli %c2_i32, %c8_i32_18 : i32
    %29 = tpu.assume_multiple %28, 8 : i32
    %30 = arith.index_cast %29 : i32 to index
    %c0_19 = arith.constant 0 : index
    %31 = vector.load %arg11[%30, %c0_19] : memref<64x32xf32, #tpu.memory_space<vmem>>, vector<8x32xf32>
    %cst_20 = arith.constant dense<0.000000e+00> : vector<8x32xf32>
    %32 = tpu.matmul %25, %1, %cst_20 {dimension_numbers = #tpu.dot_dimension_numbers<[1], [0], [0], [1], [0, 0, 1, 1], [], []>} : vector<8x32xf32>, vector<32x32xf32>, vector<8x32xf32> -> vector<8x32xf32>
    %33 = arith.addf %31, %32 : vector<8x32xf32>
    %34 = math.tanh %33 : vector<8x32xf32>
    %35 = arith.index_cast %29 : i32 to index
    %c0_21 = arith.constant 0 : index
    %36 = vector.load %arg12[%35, %c0_21] : memref<64x32xf32, #tpu.memory_space<vmem>>, vector<8x32xf32>
    tpu.vector_store %arg12[%35, %c0_21], %34 {strides = array<i32>} : memref<64x32xf32, #tpu.memory_space<vmem>>, vector<8x32xf32>,
    %c3_i32 = arith.constant 3 : i32
    %c8_i32_22 = arith.constant 8 : i32
    %37 = arith.muli %c3_i32, %c8_i32_22 : i32
    %38 = tpu.assume_multiple %37, 8 : i32
    %39 = arith.index_cast %38 : i32 to index
    %c0_23 = arith.constant 0 : index
    %40 = vector.load %arg11[%39, %c0_23] : memref<64x32xf32, #tpu.memory_space<vmem>>, vector<8x32xf32>
    %cst_24 = arith.constant dense<0.000000e+00> : vector<8x32xf32>
    %41 = tpu.matmul %34, %1, %cst_24 {dimension_numbers = #tpu.dot_dimension_numbers<[1], [0], [0], [1], [0, 0, 1, 1], [], []>} : vector<8x32xf32>, vector<32x32xf32>, vector<8x32xf32> -> vector<8x32xf32>
    %42 = arith.addf %40, %41 : vector<8x32xf32>
    %43 = math.tanh %42 : vector<8x32xf32>
    %44 = arith.index_cast %38 : i32 to index
    %c0_25 = arith.constant 0 : index
    %45 = vector.load %arg12[%44, %c0_25] : memref<64x32xf32, #tpu.memory_space<vmem>>, vector<8x32xf32>
    tpu.vector_store %arg12[%44, %c0_25], %43 {strides = array<i32>} : memref<64x32xf32, #tpu.memory_space<vmem>>, vector<8x32xf32>,
    %c4_i32 = arith.constant 4 : i32
    %c8_i32_26 = arith.constant 8 : i32
    %46 = arith.muli %c4_i32, %c8_i32_26 : i32
    %47 = tpu.assume_multiple %46, 8 : i32
    %48 = arith.index_cast %47 : i32 to index
    %c0_27 = arith.constant 0 : index
    %49 = vector.load %arg11[%48, %c0_27] : memref<64x32xf32, #tpu.memory_space<vmem>>, vector<8x32xf32>
    %cst_28 = arith.constant dense<0.000000e+00> : vector<8x32xf32>
    %50 = tpu.matmul %43, %1, %cst_28 {dimension_numbers = #tpu.dot_dimension_numbers<[1], [0], [0], [1], [0, 0, 1, 1], [], []>} : vector<8x32xf32>, vector<32x32xf32>, vector<8x32xf32> -> vector<8x32xf32>
    %51 = arith.addf %49, %50 : vector<8x32xf32>
    %52 = math.tanh %51 : vector<8x32xf32>
    %53 = arith.index_cast %47 : i32 to index
    %c0_29 = arith.constant 0 : index
    %54 = vector.load %arg12[%53, %c0_29] : memref<64x32xf32, #tpu.memory_space<vmem>>, vector<8x32xf32>
    tpu.vector_store %arg12[%53, %c0_29], %52 {strides = array<i32>} : memref<64x32xf32, #tpu.memory_space<vmem>>, vector<8x32xf32>,
    %c5_i32 = arith.constant 5 : i32
    %c8_i32_30 = arith.constant 8 : i32
    %55 = arith.muli %c5_i32, %c8_i32_30 : i32
    %56 = tpu.assume_multiple %55, 8 : i32
    %57 = arith.index_cast %56 : i32 to index
    %c0_31 = arith.constant 0 : index
    %58 = vector.load %arg11[%57, %c0_31] : memref<64x32xf32, #tpu.memory_space<vmem>>, vector<8x32xf32>
    %cst_32 = arith.constant dense<0.000000e+00> : vector<8x32xf32>
    %59 = tpu.matmul %52, %1, %cst_32 {dimension_numbers = #tpu.dot_dimension_numbers<[1], [0], [0], [1], [0, 0, 1, 1], [], []>} : vector<8x32xf32>, vector<32x32xf32>, vector<8x32xf32> -> vector<8x32xf32>
    %60 = arith.addf %58, %59 : vector<8x32xf32>
    %61 = math.tanh %60 : vector<8x32xf32>
    %62 = arith.index_cast %56 : i32 to index
    %c0_33 = arith.constant 0 : index
    %63 = vector.load %arg12[%62, %c0_33] : memref<64x32xf32, #tpu.memory_space<vmem>>, vector<8x32xf32>
    tpu.vector_store %arg12[%62, %c0_33], %61 {strides = array<i32>} : memref<64x32xf32, #tpu.memory_space<vmem>>, vector<8x32xf32>,
    %c6_i32 = arith.constant 6 : i32
    %c8_i32_34 = arith.constant 8 : i32
    %64 = arith.muli %c6_i32, %c8_i32_34 : i32
    %65 = tpu.assume_multiple %64, 8 : i32
    %66 = arith.index_cast %65 : i32 to index
    %c0_35 = arith.constant 0 : index
    %67 = vector.load %arg11[%66, %c0_35] : memref<64x32xf32, #tpu.memory_space<vmem>>, vector<8x32xf32>
    %cst_36 = arith.constant dense<0.000000e+00> : vector<8x32xf32>
    %68 = tpu.matmul %61, %1, %cst_36 {dimension_numbers = #tpu.dot_dimension_numbers<[1], [0], [0], [1], [0, 0, 1, 1], [], []>} : vector<8x32xf32>, vector<32x32xf32>, vector<8x32xf32> -> vector<8x32xf32>
    %69 = arith.addf %67, %68 : vector<8x32xf32>
    %70 = math.tanh %69 : vector<8x32xf32>
    %71 = arith.index_cast %65 : i32 to index
    %c0_37 = arith.constant 0 : index
    %72 = vector.load %arg12[%71, %c0_37] : memref<64x32xf32, #tpu.memory_space<vmem>>, vector<8x32xf32>
    tpu.vector_store %arg12[%71, %c0_37], %70 {strides = array<i32>} : memref<64x32xf32, #tpu.memory_space<vmem>>, vector<8x32xf32>,
    %c7_i32 = arith.constant 7 : i32
    %c8_i32_38 = arith.constant 8 : i32
    %73 = arith.muli %c7_i32, %c8_i32_38 : i32
    %74 = tpu.assume_multiple %73, 8 : i32
    %75 = arith.index_cast %74 : i32 to index
    %c0_39 = arith.constant 0 : index
    %76 = vector.load %arg11[%75, %c0_39] : memref<64x32xf32, #tpu.memory_space<vmem>>, vector<8x32xf32>
    %cst_40 = arith.constant dense<0.000000e+00> : vector<8x32xf32>
    %77 = tpu.matmul %70, %1, %cst_40 {dimension_numbers = #tpu.dot_dimension_numbers<[1], [0], [0], [1], [0, 0, 1, 1], [], []>} : vector<8x32xf32>, vector<32x32xf32>, vector<8x32xf32> -> vector<8x32xf32>
    %78 = arith.addf %76, %77 : vector<8x32xf32>
    %79 = math.tanh %78 : vector<8x32xf32>
    %80 = arith.index_cast %74 : i32 to index
    %c0_41 = arith.constant 0 : index
    %81 = vector.load %arg12[%80, %c0_41] : memref<64x32xf32, #tpu.memory_space<vmem>>, vector<8x32xf32>
    tpu.vector_store %arg12[%80, %c0_41], %79 {strides = array<i32>} : memref<64x32xf32, #tpu.memory_space<vmem>>, vector<8x32xf32>,
    %c8_i32_42 = arith.constant 8 : i32
    %c0_43 = arith.constant 0 : index
    %c0_44 = arith.constant 0 : index
    %82 = vector.load %arg5[%c0_43, %c0_44] : memref<32x32xf32, #tpu.memory_space<vmem>>, vector<32x32xf32>
    %c0_45 = arith.constant 0 : index
    %c0_46 = arith.constant 0 : index
    %83 = vector.load %arg6[%c0_45, %c0_46] : memref<32x32xf32, #tpu.memory_space<vmem>>, vector<32x32xf32>
    %c0_47 = arith.constant 0 : index
    %c0_48 = arith.constant 0 : index
    %84 = vector.load %arg7[%c0_47, %c0_48] : memref<1x32xf32, #tpu.memory_space<vmem>>, vector<1x32xf32>
    %c0_49 = arith.constant 0 : index
    %c0_50 = arith.constant 0 : index
    %85 = vector.load %arg12[%c0_49, %c0_50] : memref<64x32xf32, #tpu.memory_space<vmem>>, vector<64x32xf32>
    %cst_51 = arith.constant dense<0.000000e+00> : vector<64x32xf32>
    %86 = tpu.matmul %85, %82, %cst_51 {dimension_numbers = #tpu.dot_dimension_numbers<[1], [0], [0], [1], [0, 0, 1, 1], [], []>} : vector<64x32xf32>, vector<32x32xf32>, vector<64x32xf32> -> vector<64x32xf32>
    %87 = vector.broadcast %84 : vector<1x32xf32> to vector<64x32xf32>
    %88 = arith.addf %86, %87 : vector<64x32xf32>
    %c0_52 = arith.constant 0 : index
    %c0_53 = arith.constant 0 : index
    %89 = vector.load %arg11[%c0_52, %c0_53] : memref<64x32xf32, #tpu.memory_space<vmem>>, vector<64x32xf32>
    tpu.vector_store %arg11[%c0_52, %c0_53], %88 {strides = array<i32>} : memref<64x32xf32, #tpu.memory_space<vmem>>, vector<64x32xf32>,
    %cst_54 = arith.constant 0.000000e+00 : f32
    %90 = vector.broadcast %cst_54 : f32 to vector<8x32xf32>
    %c0_i32_55 = arith.constant 0 : i32
    %c8_i32_56 = arith.constant 8 : i32
    %91 = arith.muli %c0_i32_55, %c8_i32_56 : i32
    %92 = tpu.assume_multiple %91, 8 : i32
    %93 = arith.index_cast %92 : i32 to index
    %c0_57 = arith.constant 0 : index
    %94 = vector.load %arg11[%93, %c0_57] : memref<64x32xf32, #tpu.memory_space<vmem>>, vector<8x32xf32>
    %cst_58 = arith.constant dense<0.000000e+00> : vector<8x32xf32>
    %95 = tpu.matmul %90, %83, %cst_58 {dimension_numbers = #tpu.dot_dimension_numbers<[1], [0], [0], [1], [0, 0, 1, 1], [], []>} : vector<8x32xf32>, vector<32x32xf32>, vector<8x32xf32> -> vector<8x32xf32>
    %96 = arith.addf %94, %95 : vector<8x32xf32>
    %97 = math.tanh %96 : vector<8x32xf32>
    %c1_i32_59 = arith.constant 1 : i32
    %c8_i32_60 = arith.constant 8 : i32
    %98 = arith.muli %c1_i32_59, %c8_i32_60 : i32
    %99 = tpu.assume_multiple %98, 8 : i32
    %100 = arith.index_cast %99 : i32 to index
    %c0_61 = arith.constant 0 : index
    %101 = vector.load %arg11[%100, %c0_61] : memref<64x32xf32, #tpu.memory_space<vmem>>, vector<8x32xf32>
    %cst_62 = arith.constant dense<0.000000e+00> : vector<8x32xf32>
    %102 = tpu.matmul %97, %83, %cst_62 {dimension_numbers = #tpu.dot_dimension_numbers<[1], [0], [0], [1], [0, 0, 1, 1], [], []>} : vector<8x32xf32>, vector<32x32xf32>, vector<8x32xf32> -> vector<8x32xf32>
    %103 = arith.addf %101, %102 : vector<8x32xf32>
    %104 = math.tanh %103 : vector<8x32xf32>
    %c2_i32_63 = arith.constant 2 : i32
    %c8_i32_64 = arith.constant 8 : i32
    %105 = arith.muli %c2_i32_63, %c8_i32_64 : i32
    %106 = tpu.assume_multiple %105, 8 : i32
    %107 = arith.index_cast %106 : i32 to index
    %c0_65 = arith.constant 0 : index
    %108 = vector.load %arg11[%107, %c0_65] : memref<64x32xf32, #tpu.memory_space<vmem>>, vector<8x32xf32>
    %cst_66 = arith.constant dense<0.000000e+00> : vector<8x32xf32>
    %109 = tpu.matmul %104, %83, %cst_66 {dimension_numbers = #tpu.dot_dimension_numbers<[1], [0], [0], [1], [0, 0, 1, 1], [], []>} : vector<8x32xf32>, vector<32x32xf32>, vector<8x32xf32> -> vector<8x32xf32>
    %110 = arith.addf %108, %109 : vector<8x32xf32>
    %111 = math.tanh %110 : vector<8x32xf32>
    %c3_i32_67 = arith.constant 3 : i32
    %c8_i32_68 = arith.constant 8 : i32
    %112 = arith.muli %c3_i32_67, %c8_i32_68 : i32
    %113 = tpu.assume_multiple %112, 8 : i32
    %114 = arith.index_cast %113 : i32 to index
    %c0_69 = arith.constant 0 : index
    %115 = vector.load %arg11[%114, %c0_69] : memref<64x32xf32, #tpu.memory_space<vmem>>, vector<8x32xf32>
    %cst_70 = arith.constant dense<0.000000e+00> : vector<8x32xf32>
    %116 = tpu.matmul %111, %83, %cst_70 {dimension_numbers = #tpu.dot_dimension_numbers<[1], [0], [0], [1], [0, 0, 1, 1], [], []>} : vector<8x32xf32>, vector<32x32xf32>, vector<8x32xf32> -> vector<8x32xf32>
    %117 = arith.addf %115, %116 : vector<8x32xf32>
    %118 = math.tanh %117 : vector<8x32xf32>
    %c4_i32_71 = arith.constant 4 : i32
    %c8_i32_72 = arith.constant 8 : i32
    %119 = arith.muli %c4_i32_71, %c8_i32_72 : i32
    %120 = tpu.assume_multiple %119, 8 : i32
    %121 = arith.index_cast %120 : i32 to index
    %c0_73 = arith.constant 0 : index
    %122 = vector.load %arg11[%121, %c0_73] : memref<64x32xf32, #tpu.memory_space<vmem>>, vector<8x32xf32>
    %cst_74 = arith.constant dense<0.000000e+00> : vector<8x32xf32>
    %123 = tpu.matmul %118, %83, %cst_74 {dimension_numbers = #tpu.dot_dimension_numbers<[1], [0], [0], [1], [0, 0, 1, 1], [], []>} : vector<8x32xf32>, vector<32x32xf32>, vector<8x32xf32> -> vector<8x32xf32>
    %124 = arith.addf %122, %123 : vector<8x32xf32>
    %125 = math.tanh %124 : vector<8x32xf32>
    %c5_i32_75 = arith.constant 5 : i32
    %c8_i32_76 = arith.constant 8 : i32
    %126 = arith.muli %c5_i32_75, %c8_i32_76 : i32
    %127 = tpu.assume_multiple %126, 8 : i32
    %128 = arith.index_cast %127 : i32 to index
    %c0_77 = arith.constant 0 : index
    %129 = vector.load %arg11[%128, %c0_77] : memref<64x32xf32, #tpu.memory_space<vmem>>, vector<8x32xf32>
    %cst_78 = arith.constant dense<0.000000e+00> : vector<8x32xf32>
    %130 = tpu.matmul %125, %83, %cst_78 {dimension_numbers = #tpu.dot_dimension_numbers<[1], [0], [0], [1], [0, 0, 1, 1], [], []>} : vector<8x32xf32>, vector<32x32xf32>, vector<8x32xf32> -> vector<8x32xf32>
    %131 = arith.addf %129, %130 : vector<8x32xf32>
    %132 = math.tanh %131 : vector<8x32xf32>
    %c6_i32_79 = arith.constant 6 : i32
    %c8_i32_80 = arith.constant 8 : i32
    %133 = arith.muli %c6_i32_79, %c8_i32_80 : i32
    %134 = tpu.assume_multiple %133, 8 : i32
    %135 = arith.index_cast %134 : i32 to index
    %c0_81 = arith.constant 0 : index
    %136 = vector.load %arg11[%135, %c0_81] : memref<64x32xf32, #tpu.memory_space<vmem>>, vector<8x32xf32>
    %cst_82 = arith.constant dense<0.000000e+00> : vector<8x32xf32>
    %137 = tpu.matmul %132, %83, %cst_82 {dimension_numbers = #tpu.dot_dimension_numbers<[1], [0], [0], [1], [0, 0, 1, 1], [], []>} : vector<8x32xf32>, vector<32x32xf32>, vector<8x32xf32> -> vector<8x32xf32>
    %138 = arith.addf %136, %137 : vector<8x32xf32>
    %139 = math.tanh %138 : vector<8x32xf32>
    %c7_i32_83 = arith.constant 7 : i32
    %c8_i32_84 = arith.constant 8 : i32
    %140 = arith.muli %c7_i32_83, %c8_i32_84 : i32
    %141 = tpu.assume_multiple %140, 8 : i32
    %142 = arith.index_cast %141 : i32 to index
    %c0_85 = arith.constant 0 : index
    %143 = vector.load %arg11[%142, %c0_85] : memref<64x32xf32, #tpu.memory_space<vmem>>, vector<8x32xf32>
    %cst_86 = arith.constant dense<0.000000e+00> : vector<8x32xf32>
    %144 = tpu.matmul %139, %83, %cst_86 {dimension_numbers = #tpu.dot_dimension_numbers<[1], [0], [0], [1], [0, 0, 1, 1], [], []>} : vector<8x32xf32>, vector<32x32xf32>, vector<8x32xf32> -> vector<8x32xf32>
    %145 = arith.addf %143, %144 : vector<8x32xf32>
    %146 = math.tanh %145 : vector<8x32xf32>
    %c8_i32_87 = arith.constant 8 : i32
    %c0_88 = arith.constant 0 : index
    %c0_89 = arith.constant 0 : index
    %147 = vector.load %arg8[%c0_88, %c0_89] : memref<32x10xf32, #tpu.memory_space<vmem>>, vector<32x10xf32>
    %cst_90 = arith.constant dense<0.000000e+00> : vector<8x10xf32>
    %148 = tpu.matmul %146, %147, %cst_90 {dimension_numbers = #tpu.dot_dimension_numbers<[1], [0], [0], [1], [0, 0, 1, 1], [], []>} : vector<8x32xf32>, vector<32x10xf32>, vector<8x10xf32> -> vector<8x10xf32>
    %c0_91 = arith.constant 0 : index
    %c0_92 = arith.constant 0 : index
    %149 = vector.load %arg9[%c0_91, %c0_92] : memref<1x10xf32, #tpu.memory_space<vmem>>, vector<1x10xf32>
    %150 = vector.broadcast %149 : vector<1x10xf32> to vector<8x10xf32>
    %151 = arith.addf %148, %150 : vector<8x10xf32>
    %c0_93 = arith.constant 0 : index
    %c0_94 = arith.constant 0 : index
    %c0_95 = arith.constant 0 : index
    %152 = vector.load %arg10[%c0_93, %c0_94, %c0_95] : memref<1x8x10xf32, #tpu.memory_space<vmem>>, vector<1x8x10xf32>
    %153 = vector.shape_cast %152 : vector<1x8x10xf32> to vector<8x10xf32>
    %154 = vector.shape_cast %151 : vector<8x10xf32> to vector<1x8x10xf32>
    tpu.vector_store %arg10[%c0_93, %c0_94, %c0_95], %154 {strides = array<i32>} : memref<1x8x10xf32, #tpu.memory_space<vmem>>, vector<1x8x10xf32>,
    return
  }
  func.func @transform_0(%arg0: i32) -> (i32, i32, i32) {
    %c0_i32 = arith.constant 0 : i32
    %c0_i32_0 = arith.constant 0 : i32
    %c0_i32_1 = arith.constant 0 : i32
    return %arg0, %c0_i32, %c0_i32_0 : i32, i32, i32
  }
  func.func @transform_1(%arg0: i32) -> (i32, i32) {
    %c0_i32 = arith.constant 0 : i32
    %c0_i32_0 = arith.constant 0 : i32
    %c0_i32_1 = arith.constant 0 : i32
    return %c0_i32, %c0_i32_0 : i32, i32
  }
  func.func @transform_2(%arg0: i32) -> (i32, i32) {
    %c0_i32 = arith.constant 0 : i32
    %c0_i32_0 = arith.constant 0 : i32
    %c0_i32_1 = arith.constant 0 : i32
    return %c0_i32, %c0_i32_0 : i32, i32
  }
  func.func @transform_3(%arg0: i32) -> (i32, i32) {
    %c0_i32 = arith.constant 0 : i32
    %c0_i32_0 = arith.constant 0 : i32
    %c0_i32_1 = arith.constant 0 : i32
    return %c0_i32, %c0_i32_0 : i32, i32
  }
  func.func @transform_4(%arg0: i32) -> (i32, i32) {
    %c0_i32 = arith.constant 0 : i32
    %c0_i32_0 = arith.constant 0 : i32
    %c0_i32_1 = arith.constant 0 : i32
    return %c0_i32, %c0_i32_0 : i32, i32
  }
  func.func @transform_5(%arg0: i32) -> (i32, i32) {
    %c0_i32 = arith.constant 0 : i32
    %c0_i32_0 = arith.constant 0 : i32
    %c0_i32_1 = arith.constant 0 : i32
    return %c0_i32, %c0_i32_0 : i32, i32
  }
  func.func @transform_6(%arg0: i32) -> (i32, i32) {
    %c0_i32 = arith.constant 0 : i32
    %c0_i32_0 = arith.constant 0 : i32
    %c0_i32_1 = arith.constant 0 : i32
    return %c0_i32, %c0_i32_0 : i32, i32
  }
  func.func @transform_7(%arg0: i32) -> (i32, i32) {
    %c0_i32 = arith.constant 0 : i32
    %c0_i32_0 = arith.constant 0 : i32
    %c0_i32_1 = arith.constant 0 : i32
    return %c0_i32, %c0_i32_0 : i32, i32
  }
  func.func @transform_8(%arg0: i32) -> (i32, i32) {
    %c0_i32 = arith.constant 0 : i32
    %c0_i32_0 = arith.constant 0 : i32
    %c0_i32_1 = arith.constant 0 : i32
    return %c0_i32, %c0_i32_0 : i32, i32
  }
  func.func @transform_9(%arg0: i32) -> (i32, i32, i32) {
    %c0_i32 = arith.constant 0 : i32
    %c0_i32_0 = arith.constant 0 : i32
    %c0_i32_1 = arith.constant 0 : i32
    return %arg0, %c0_i32, %c0_i32_0 : i32, i32, i32
  }
}

module attributes {stable_mosaic.version = 11 : i64} {
  func.func @kernel(%arg0: i32, %arg1: memref<1x64x16xf32, #tpu.memory_space<vmem>>, %arg2: memref<16x32xf32, #tpu.memory_space<vmem>>, %arg3: memref<32x32xf32, #tpu.memory_space<vmem>>, %arg4: memref<1x32xf32, #tpu.memory_space<vmem>>, %arg5: memref<32x32xf32, #tpu.memory_space<vmem>>, %arg6: memref<32x32xf32, #tpu.memory_space<vmem>>, %arg7: memref<1x32xf32, #tpu.memory_space<vmem>>, %arg8: memref<32x10xf32, #tpu.memory_space<vmem>>, %arg9: memref<1x10xf32, #tpu.memory_space<vmem>>, %arg10: memref<1x8x10xf32, #tpu.memory_space<vmem>>, %arg11: memref<64x32xf32, #tpu.memory_space<vmem>>, %arg12: memref<64x32xf32, #tpu.memory_space<vmem>>) attributes {dimension_semantics = [#tpu.dimension_semantics<parallel>], iteration_bounds = array<i64: 1>, scalar_prefetch = 0 : i64, scratch_operands = 2 : i64, tpu.core_type = #tpu.core_type<tc>, window_params = [{transform_indices = @transform_0, window_bounds = array<i64: 1, 64, 16>}, {pipeline_mode = #tpu.pipeline_mode<synchronous>, transform_indices = @transform_1, window_bounds = array<i64: 16, 32>}, {pipeline_mode = #tpu.pipeline_mode<synchronous>, transform_indices = @transform_2, window_bounds = array<i64: 32, 32>}, {pipeline_mode = #tpu.pipeline_mode<synchronous>, transform_indices = @transform_3, window_bounds = array<i64: 1, 32>}, {pipeline_mode = #tpu.pipeline_mode<synchronous>, transform_indices = @transform_4, window_bounds = array<i64: 32, 32>}, {pipeline_mode = #tpu.pipeline_mode<synchronous>, transform_indices = @transform_5, window_bounds = array<i64: 32, 32>}, {pipeline_mode = #tpu.pipeline_mode<synchronous>, transform_indices = @transform_6, window_bounds = array<i64: 1, 32>}, {pipeline_mode = #tpu.pipeline_mode<synchronous>, transform_indices = @transform_7, window_bounds = array<i64: 32, 10>}, {pipeline_mode = #tpu.pipeline_mode<synchronous>, transform_indices = @transform_8, window_bounds = array<i64: 1, 10>}, {transform_indices = @transform_9, window_bounds = array<i64: 1, 8, 10>}]} {
    %c0 = arith.constant 0 : index
    %c0_0 = arith.constant 0 : index
    %0 = vector.load %arg2[%c0, %c0_0] : memref<16x32xf32, #tpu.memory_space<vmem>>, vector<16x32xf32>
    %c0_1 = arith.constant 0 : index
    %c0_2 = arith.constant 0 : index
    %1 = vector.load %arg3[%c0_1, %c0_2] : memref<32x32xf32, #tpu.memory_space<vmem>>, vector<32x32xf32>
    %c0_3 = arith.constant 0 : index
    %c0_4 = arith.constant 0 : index
    %2 = vector.load %arg4[%c0_3, %c0_4] : memref<1x32xf32, #tpu.memory_space<vmem>>, vector<1x32xf32>
    %c0_5 = arith.constant 0 : index
    %c0_6 = arith.constant 0 : index
    %c0_7 = arith.constant 0 : index
    %3 = vector.load %arg1[%c0_5, %c0_6, %c0_7] : memref<1x64x16xf32, #tpu.memory_space<vmem>>, vector<1x64x16xf32>
    %4 = vector.shape_cast %3 : vector<1x64x16xf32> to vector<64x16xf32>
    %cst = arith.constant dense<0.000000e+00> : vector<64x32xf32>
    %5 = tpu.matmul %4, %0, %cst {dimension_numbers = #tpu.dot_dimension_numbers<[1], [0], [0], [1], [0, 0, 1, 1], [], []>} : vector<64x16xf32>, vector<16x32xf32>, vector<64x32xf32> -> vector<64x32xf32>
    %6 = vector.broadcast %2 : vector<1x32xf32> to vector<64x32xf32>
    %7 = arith.addf %5, %6 : vector<64x32xf32>
    %c0_8 = arith.constant 0 : index
    %c0_9 = arith.constant 0 : index
    %8 = vector.load %arg11[%c0_8, %c0_9] : memref<64x32xf32, #tpu.memory_space<vmem>>, vector<64x32xf32>
    tpu.vector_store %arg11[%c0_8, %c0_9], %7 {strides = array<i32>} : memref<64x32xf32, #tpu.memory_space<vmem>>, vector<64x32xf32>,
    %cst_10 = arith.constant 0.000000e+00 : f32
    %9 = vector.broadcast %cst_10 : f32 to vector<8x32xf32>
    %c0_i32 = arith.constant 0 : i32
    %c8_i32 = arith.constant 8 : i32
    %10 = arith.muli %c0_i32, %c8_i32 : i32
    %11 = tpu.assume_multiple %10, 8 : i32
    %12 = arith.index_cast %11 : i32 to index
    %c0_11 = arith.constant 0 : index
    %13 = vector.load %arg11[%12, %c0_11] : memref<64x32xf32, #tpu.memory_space<vmem>>, vector<8x32xf32>
    %cst_12 = arith.constant dense<0.000000e+00> : vector<8x32xf32>
    %14 = tpu.matmul %9, %1, %cst_12 {dimension_numbers = #tpu.dot_dimension_numbers<[1], [0], [0], [1], [0, 0, 1, 1], [], []>} : vector<8x32xf32>, vector<32x32xf32>, vector<8x32xf32> -> vector<8x32xf32>
    %15 = arith.addf %13, %14 : vector<8x32xf32>
    %16 = math.tanh %15 : vector<8x32xf32>
    %17 = arith.index_cast %11 : i32 to index
    %c0_13 = arith.constant 0 : index
    %18 = vector.load %arg12[%17, %c0_13] : memref<64x32xf32, #tpu.memory_space<vmem>>, vector<8x32xf32>
    tpu.vector_store %arg12[%17, %c0_13], %16 {strides = array<i32>} : memref<64x32xf32, #tpu.memory_space<vmem>>, vector<8x32xf32>,
    %c1_i32 = arith.constant 1 : i32
    %c8_i32_14 = arith.constant 8 : i32
    %19 = arith.muli %c1_i32, %c8_i32_14 : i32
    %20 = tpu.assume_multiple %19, 8 : i32
    %21 = arith.index_cast %20 : i32 to index
    %c0_15 = arith.constant 0 : index
    %22 = vector.load %arg11[%21, %c0_15] : memref<64x32xf32, #tpu.memory_space<vmem>>, vector<8x32xf32>
    %cst_16 = arith.constant dense<0.000000e+00> : vector<8x32xf32>
    %23 = tpu.matmul %16, %1, %cst_16 {dimension_numbers = #tpu.dot_dimension_numbers<[1], [0], [0], [1], [0, 0, 1, 1], [], []>} : vector<8x32xf32>, vector<32x32xf32>, vector<8x32xf32> -> vector<8x32xf32>
    %24 = arith.addf %22, %23 : vector<8x32xf32>
    %25 = math.tanh %24 : vector<8x32xf32>
    %26 = arith.index_cast %20 : i32 to index
    %c0_17 = arith.constant 0 : index
    %27 = vector.load %arg12[%26, %c0_17] : memref<64x32xf32, #tpu.memory_space<vmem>>, vector<8x32xf32>
    tpu.vector_store %arg12[%26, %c0_17], %25 {strides = array<i32>} : memref<64x32xf32, #tpu.memory_space<vmem>>, vector<8x32xf32>,
    %c2_i32 = arith.constant 2 : i32
    %c8_i32_18 = arith.constant 8 : i32
    %28 = arith.muli %c2_i32, %c8_i32_18 : i32
    %29 = tpu.assume_multiple %28, 8 : i32
    %30 = arith.index_cast %29 : i32 to index
    %c0_19 = arith.constant 0 : index
    %31 = vector.load %arg11[%30, %c0_19] : memref<64x32xf32, #tpu.memory_space<vmem>>, vector<8x32xf32>
    %cst_20 = arith.constant dense<0.000000e+00> : vector<8x32xf32>
    %32 = tpu.matmul %25, %1, %cst_20 {dimension_numbers = #tpu.dot_dimension_numbers<[1], [0], [0], [1], [0, 0, 1, 1], [], []>} : vector<8x32xf32>, vector<32x32xf32>, vector<8x32xf32> -> vector<8x32xf32>
    %33 = arith.addf %31, %32 : vector<8x32xf32>
    %34 = math.tanh %33 : vector<8x32xf32>
    %35 = arith.index_cast %29 : i32 to index
    %c0_21 = arith.constant 0 : index
    %36 = vector.load %arg12[%35, %c0_21] : memref<64x32xf32, #tpu.memory_space<vmem>>, vector<8x32xf32>
    tpu.vector_store %arg12[%35, %c0_21], %34 {strides = array<i32>} : memref<64x32xf32, #tpu.memory_space<vmem>>, vector<8x32xf32>,
    %c3_i32 = arith.constant 3 : i32
    %c8_i32_22 = arith.constant 8 : i32
    %37 = arith.muli %c3_i32, %c8_i32_22 : i32
    %38 = tpu.assume_multiple %37, 8 : i32
    %39 = arith.index_cast %38 : i32 to index
    %c0_23 = arith.constant 0 : index
    %40 = vector.load %arg11[%39, %c0_23] : memref<64x32xf32, #tpu.memory_space<vmem>>, vector<8x32xf32>
    %cst_24 = arith.constant dense<0.000000e+00> : vector<8x32xf32>
    %41 = tpu.matmul %34, %1, %cst_24 {dimension_numbers = #tpu.dot_dimension_numbers<[1], [0], [0], [1], [0, 0, 1, 1], [], []>} : vector<8x32xf32>, vector<32x32xf32>, vector<8x32xf32> -> vector<8x32xf32>
    %42 = arith.addf %40, %41 : vector<8x32xf32>
    %43 = math.tanh %42 : vector<8x32xf32>
    %44 = arith.index_cast %38 : i32 to index
    %c0_25 = arith.constant 0 : index
    %45 = vector.load %arg12[%44, %c0_25] : memref<64x32xf32, #tpu.memory_space<vmem>>, vector<8x32xf32>
    tpu.vector_store %arg12[%44, %c0_25], %43 {strides = array<i32>} : memref<64x32xf32, #tpu.memory_space<vmem>>, vector<8x32xf32>,
    %c4_i32 = arith.constant 4 : i32
    %c8_i32_26 = arith.constant 8 : i32
    %46 = arith.muli %c4_i32, %c8_i32_26 : i32
    %47 = tpu.assume_multiple %46, 8 : i32
    %48 = arith.index_cast %47 : i32 to index
    %c0_27 = arith.constant 0 : index
    %49 = vector.load %arg11[%48, %c0_27] : memref<64x32xf32, #tpu.memory_space<vmem>>, vector<8x32xf32>
    %cst_28 = arith.constant dense<0.000000e+00> : vector<8x32xf32>
    %50 = tpu.matmul %43, %1, %cst_28 {dimension_numbers = #tpu.dot_dimension_numbers<[1], [0], [0], [1], [0, 0, 1, 1], [], []>} : vector<8x32xf32>, vector<32x32xf32>, vector<8x32xf32> -> vector<8x32xf32>
    %51 = arith.addf %49, %50 : vector<8x32xf32>
    %52 = math.tanh %51 : vector<8x32xf32>
    %53 = arith.index_cast %47 : i32 to index
    %c0_29 = arith.constant 0 : index
    %54 = vector.load %arg12[%53, %c0_29] : memref<64x32xf32, #tpu.memory_space<vmem>>, vector<8x32xf32>
    tpu.vector_store %arg12[%53, %c0_29], %52 {strides = array<i32>} : memref<64x32xf32, #tpu.memory_space<vmem>>, vector<8x32xf32>,
    %c5_i32 = arith.constant 5 : i32
    %c8_i32_30 = arith.constant 8 : i32
    %55 = arith.muli %c5_i32, %c8_i32_30 : i32
    %56 = tpu.assume_multiple %55, 8 : i32
    %57 = arith.index_cast %56 : i32 to index
    %c0_31 = arith.constant 0 : index
    %58 = vector.load %arg11[%57, %c0_31] : memref<64x32xf32, #tpu.memory_space<vmem>>, vector<8x32xf32>
    %cst_32 = arith.constant dense<0.000000e+00> : vector<8x32xf32>
    %59 = tpu.matmul %52, %1, %cst_32 {dimension_numbers = #tpu.dot_dimension_numbers<[1], [0], [0], [1], [0, 0, 1, 1], [], []>} : vector<8x32xf32>, vector<32x32xf32>, vector<8x32xf32> -> vector<8x32xf32>
    %60 = arith.addf %58, %59 : vector<8x32xf32>
    %61 = math.tanh %60 : vector<8x32xf32>
    %62 = arith.index_cast %56 : i32 to index
    %c0_33 = arith.constant 0 : index
    %63 = vector.load %arg12[%62, %c0_33] : memref<64x32xf32, #tpu.memory_space<vmem>>, vector<8x32xf32>
    tpu.vector_store %arg12[%62, %c0_33], %61 {strides = array<i32>} : memref<64x32xf32, #tpu.memory_space<vmem>>, vector<8x32xf32>,
    %c6_i32 = arith.constant 6 : i32
    %c8_i32_34 = arith.constant 8 : i32
    %64 = arith.muli %c6_i32, %c8_i32_34 : i32
    %65 = tpu.assume_multiple %64, 8 : i32
    %66 = arith.index_cast %65 : i32 to index
    %c0_35 = arith.constant 0 : index
    %67 = vector.load %arg11[%66, %c0_35] : memref<64x32xf32, #tpu.memory_space<vmem>>, vector<8x32xf32>
    %cst_36 = arith.constant dense<0.000000e+00> : vector<8x32xf32>
    %68 = tpu.matmul %61, %1, %cst_36 {dimension_numbers = #tpu.dot_dimension_numbers<[1], [0], [0], [1], [0, 0, 1, 1], [], []>} : vector<8x32xf32>, vector<32x32xf32>, vector<8x32xf32> -> vector<8x32xf32>
    %69 = arith.addf %67, %68 : vector<8x32xf32>
    %70 = math.tanh %69 : vector<8x32xf32>
    %71 = arith.index_cast %65 : i32 to index
    %c0_37 = arith.constant 0 : index
    %72 = vector.load %arg12[%71, %c0_37] : memref<64x32xf32, #tpu.memory_space<vmem>>, vector<8x32xf32>
    tpu.vector_store %arg12[%71, %c0_37], %70 {strides = array<i32>} : memref<64x32xf32, #tpu.memory_space<vmem>>, vector<8x32xf32>,
    %c7_i32 = arith.constant 7 : i32
    %c8_i32_38 = arith.constant 8 : i32
    %73 = arith.muli %c7_i32, %c8_i32_38 : i32
    %74 = tpu.assume_multiple %73, 8 : i32
    %75 = arith.index_cast %74 : i32 to index
    %c0_39 = arith.constant 0 : index
    %76 = vector.load %arg11[%75, %c0_39] : memref<64x32xf32, #tpu.memory_space<vmem>>, vector<8x32xf32>
    %cst_40 = arith.constant dense<0.000000e+00> : vector<8x32xf32>
    %77 = tpu.matmul %70, %1, %cst_40 {dimension_numbers = #tpu.dot_dimension_numbers<[1], [0], [0], [1], [0, 0, 1, 1], [], []>} : vector<8x32xf32>, vector<32x32xf32>, vector<8x32xf32> -> vector<8x32xf32>
    %78 = arith.addf %76, %77 : vector<8x32xf32>
    %79 = math.tanh %78 : vector<8x32xf32>
    %80 = arith.index_cast %74 : i32 to index
    %c0_41 = arith.constant 0 : index
    %81 = vector.load %arg12[%80, %c0_41] : memref<64x32xf32, #tpu.memory_space<vmem>>, vector<8x32xf32>
    tpu.vector_store %arg12[%80, %c0_41], %79 {strides = array<i32>} : memref<64x32xf32, #tpu.memory_space<vmem>>, vector<8x32xf32>,
    %c8_i32_42 = arith.constant 8 : i32
    %c0_43 = arith.constant 0 : index
    %c0_44 = arith.constant 0 : index
    %82 = vector.load %arg5[%c0_43, %c0_44] : memref<32x32xf32, #tpu.memory_space<vmem>>, vector<32x32xf32>
    %c0_45 = arith.constant 0 : index
    %c0_46 = arith.constant 0 : index
    %83 = vector.load %arg6[%c0_45, %c0_46] : memref<32x32xf32, #tpu.memory_space<vmem>>, vector<32x32xf32>
    %c0_47 = arith.constant 0 : index
    %c0_48 = arith.constant 0 : index
    %84 = vector.load %arg7[%c0_47, %c0_48] : memref<1x32xf32, #tpu.memory_space<vmem>>, vector<1x32xf32>
    %c0_49 = arith.constant 0 : index
    %c0_50 = arith.constant 0 : index
    %85 = vector.load %arg12[%c0_49, %c0_50] : memref<64x32xf32, #tpu.memory_space<vmem>>, vector<64x32xf32>
    %cst_51 = arith.constant dense<0.000000e+00> : vector<64x32xf32>
    %86 = tpu.matmul %85, %82, %cst_51 {dimension_numbers = #tpu.dot_dimension_numbers<[1], [0], [0], [1], [0, 0, 1, 1], [], []>} : vector<64x32xf32>, vector<32x32xf32>, vector<64x32xf32> -> vector<64x32xf32>
    %87 = vector.broadcast %84 : vector<1x32xf32> to vector<64x32xf32>
    %88 = arith.addf %86, %87 : vector<64x32xf32>
    %c0_52 = arith.constant 0 : index
    %c0_53 = arith.constant 0 : index
    %89 = vector.load %arg11[%c0_52, %c0_53] : memref<64x32xf32, #tpu.memory_space<vmem>>, vector<64x32xf32>
    tpu.vector_store %arg11[%c0_52, %c0_53], %88 {strides = array<i32>} : memref<64x32xf32, #tpu.memory_space<vmem>>, vector<64x32xf32>,
    %cst_54 = arith.constant 0.000000e+00 : f32
    %90 = vector.broadcast %cst_54 : f32 to vector<8x32xf32>
    %c0_i32_55 = arith.constant 0 : i32
    %c8_i32_56 = arith.constant 8 : i32
    %91 = arith.muli %c0_i32_55, %c8_i32_56 : i32
    %92 = tpu.assume_multiple %91, 8 : i32
    %93 = arith.index_cast %92 : i32 to index
    %c0_57 = arith.constant 0 : index
    %94 = vector.load %arg11[%93, %c0_57] : memref<64x32xf32, #tpu.memory_space<vmem>>, vector<8x32xf32>
    %cst_58 = arith.constant dense<0.000000e+00> : vector<8x32xf32>
    %95 = tpu.matmul %90, %83, %cst_58 {dimension_numbers = #tpu.dot_dimension_numbers<[1], [0], [0], [1], [0, 0, 1, 1], [], []>} : vector<8x32xf32>, vector<32x32xf32>, vector<8x32xf32> -> vector<8x32xf32>
    %96 = arith.addf %94, %95 : vector<8x32xf32>
    %97 = math.tanh %96 : vector<8x32xf32>
    %c1_i32_59 = arith.constant 1 : i32
    %c8_i32_60 = arith.constant 8 : i32
    %98 = arith.muli %c1_i32_59, %c8_i32_60 : i32
    %99 = tpu.assume_multiple %98, 8 : i32
    %100 = arith.index_cast %99 : i32 to index
    %c0_61 = arith.constant 0 : index
    %101 = vector.load %arg11[%100, %c0_61] : memref<64x32xf32, #tpu.memory_space<vmem>>, vector<8x32xf32>
    %cst_62 = arith.constant dense<0.000000e+00> : vector<8x32xf32>
    %102 = tpu.matmul %97, %83, %cst_62 {dimension_numbers = #tpu.dot_dimension_numbers<[1], [0], [0], [1], [0, 0, 1, 1], [], []>} : vector<8x32xf32>, vector<32x32xf32>, vector<8x32xf32> -> vector<8x32xf32>
    %103 = arith.addf %101, %102 : vector<8x32xf32>
    %104 = math.tanh %103 : vector<8x32xf32>
    %c2_i32_63 = arith.constant 2 : i32
    %c8_i32_64 = arith.constant 8 : i32
    %105 = arith.muli %c2_i32_63, %c8_i32_64 : i32
    %106 = tpu.assume_multiple %105, 8 : i32
    %107 = arith.index_cast %106 : i32 to index
    %c0_65 = arith.constant 0 : index
    %108 = vector.load %arg11[%107, %c0_65] : memref<64x32xf32, #tpu.memory_space<vmem>>, vector<8x32xf32>
    %cst_66 = arith.constant dense<0.000000e+00> : vector<8x32xf32>
    %109 = tpu.matmul %104, %83, %cst_66 {dimension_numbers = #tpu.dot_dimension_numbers<[1], [0], [0], [1], [0, 0, 1, 1], [], []>} : vector<8x32xf32>, vector<32x32xf32>, vector<8x32xf32> -> vector<8x32xf32>
    %110 = arith.addf %108, %109 : vector<8x32xf32>
    %111 = math.tanh %110 : vector<8x32xf32>
    %c3_i32_67 = arith.constant 3 : i32
    %c8_i32_68 = arith.constant 8 : i32
    %112 = arith.muli %c3_i32_67, %c8_i32_68 : i32
    %113 = tpu.assume_multiple %112, 8 : i32
    %114 = arith.index_cast %113 : i32 to index
    %c0_69 = arith.constant 0 : index
    %115 = vector.load %arg11[%114, %c0_69] : memref<64x32xf32, #tpu.memory_space<vmem>>, vector<8x32xf32>
    %cst_70 = arith.constant dense<0.000000e+00> : vector<8x32xf32>
    %116 = tpu.matmul %111, %83, %cst_70 {dimension_numbers = #tpu.dot_dimension_numbers<[1], [0], [0], [1], [0, 0, 1, 1], [], []>} : vector<8x32xf32>, vector<32x32xf32>, vector<8x32xf32> -> vector<8x32xf32>
    %117 = arith.addf %115, %116 : vector<8x32xf32>
    %118 = math.tanh %117 : vector<8x32xf32>
    %c4_i32_71 = arith.constant 4 : i32
    %c8_i32_72 = arith.constant 8 : i32
    %119 = arith.muli %c4_i32_71, %c8_i32_72 : i32
    %120 = tpu.assume_multiple %119, 8 : i32
    %121 = arith.index_cast %120 : i32 to index
    %c0_73 = arith.constant 0 : index
    %122 = vector.load %arg11[%121, %c0_73] : memref<64x32xf32, #tpu.memory_space<vmem>>, vector<8x32xf32>
    %cst_74 = arith.constant dense<0.000000e+00> : vector<8x32xf32>
    %123 = tpu.matmul %118, %83, %cst_74 {dimension_numbers = #tpu.dot_dimension_numbers<[1], [0], [0], [1], [0, 0, 1, 1], [], []>} : vector<8x32xf32>, vector<32x32xf32>, vector<8x32xf32> -> vector<8x32xf32>
    %124 = arith.addf %122, %123 : vector<8x32xf32>
    %125 = math.tanh %124 : vector<8x32xf32>
    %c5_i32_75 = arith.constant 5 : i32
    %c8_i32_76 = arith.constant 8 : i32
    %126 = arith.muli %c5_i32_75, %c8_i32_76 : i32
    %127 = tpu.assume_multiple %126, 8 : i32
    %128 = arith.index_cast %127 : i32 to index
    %c0_77 = arith.constant 0 : index
    %129 = vector.load %arg11[%128, %c0_77] : memref<64x32xf32, #tpu.memory_space<vmem>>, vector<8x32xf32>
    %cst_78 = arith.constant dense<0.000000e+00> : vector<8x32xf32>
    %130 = tpu.matmul %125, %83, %cst_78 {dimension_numbers = #tpu.dot_dimension_numbers<[1], [0], [0], [1], [0, 0, 1, 1], [], []>} : vector<8x32xf32>, vector<32x32xf32>, vector<8x32xf32> -> vector<8x32xf32>
    %131 = arith.addf %129, %130 : vector<8x32xf32>
    %132 = math.tanh %131 : vector<8x32xf32>
    %c6_i32_79 = arith.constant 6 : i32
    %c8_i32_80 = arith.constant 8 : i32
    %133 = arith.muli %c6_i32_79, %c8_i32_80 : i32
    %134 = tpu.assume_multiple %133, 8 : i32
    %135 = arith.index_cast %134 : i32 to index
    %c0_81 = arith.constant 0 : index
    %136 = vector.load %arg11[%135, %c0_81] : memref<64x32xf32, #tpu.memory_space<vmem>>, vector<8x32xf32>
    %cst_82 = arith.constant dense<0.000000e+00> : vector<8x32xf32>
    %137 = tpu.matmul %132, %83, %cst_82 {dimension_numbers = #tpu.dot_dimension_numbers<[1], [0], [0], [1], [0, 0, 1, 1], [], []>} : vector<8x32xf32>, vector<32x32xf32>, vector<8x32xf32> -> vector<8x32xf32>
    %138 = arith.addf %136, %137 : vector<8x32xf32>
    %139 = math.tanh %138 : vector<8x32xf32>
    %c7_i32_83 = arith.constant 7 : i32
    %c8_i32_84 = arith.constant 8 : i32
    %140 = arith.muli %c7_i32_83, %c8_i32_84 : i32
    %141 = tpu.assume_multiple %140, 8 : i32
    %142 = arith.index_cast %141 : i32 to index
    %c0_85 = arith.constant 0 : index
    %143 = vector.load %arg11[%142, %c0_85] : memref<64x32xf32, #tpu.memory_space<vmem>>, vector<8x32xf32>
    %cst_86 = arith.constant dense<0.000000e+00> : vector<8x32xf32>
    %144 = tpu.matmul %139, %83, %cst_86 {dimension_numbers = #tpu.dot_dimension_numbers<[1], [0], [0], [1], [0, 0, 1, 1], [], []>} : vector<8x32xf32>, vector<32x32xf32>, vector<8x32xf32> -> vector<8x32xf32>
    %145 = arith.addf %143, %144 : vector<8x32xf32>
    %146 = math.tanh %145 : vector<8x32xf32>
    %c8_i32_87 = arith.constant 8 : i32
    %c0_88 = arith.constant 0 : index
    %c0_89 = arith.constant 0 : index
    %147 = vector.load %arg8[%c0_88, %c0_89] : memref<32x10xf32, #tpu.memory_space<vmem>>, vector<32x10xf32>
    %cst_90 = arith.constant dense<0.000000e+00> : vector<8x10xf32>
    %148 = tpu.matmul %146, %147, %cst_90 {dimension_numbers = #tpu.dot_dimension_numbers<[1], [0], [0], [1], [0, 0, 1, 1], [], []>} : vector<8x32xf32>, vector<32x10xf32>, vector<8x10xf32> -> vector<8x10xf32>
    %c0_91 = arith.constant 0 : index
    %c0_92 = arith.constant 0 : index
    %149 = vector.load %arg9[%c0_91, %c0_92] : memref<1x10xf32, #tpu.memory_space<vmem>>, vector<1x10xf32>
    %150 = vector.broadcast %149 : vector<1x10xf32> to vector<8x10xf32>
    %151 = arith.addf %148, %150 : vector<8x10xf32>
    %c0_93 = arith.constant 0 : index
    %c0_94 = arith.constant 0 : index
    %c0_95 = arith.constant 0 : index
    %152 = vector.load %arg10[%c0_93, %c0_94, %c0_95] : memref<1x8x10xf32, #tpu.memory_space<vmem>>, vector<1x8x10xf32>
    %153 = vector.shape_cast %152 : vector<1x8x10xf32> to vector<8x10xf32>
    %154 = vector.shape_cast %151 : vector<8x10xf32> to vector<1x8x10xf32>
    tpu.vector_store %arg10[%c0_93, %c0_94, %c0_95], %154 {strides = array<i32>} : memref<1x8x10xf32, #tpu.memory_space<vmem>>, vector<1x8x10xf32>,
    return
  }
  func.func @transform_0(%arg0: i32) -> (i32, i32, i32) {
    %c0_i32 = arith.constant 0 : i32
    %c0_i32_0 = arith.constant 0 : i32
    %c0_i32_1 = arith.constant 0 : i32
    return %arg0, %c0_i32, %c0_i32_0 : i32, i32, i32
  }
  func.func @transform_1(%arg0: i32) -> (i32, i32) {
    %c0_i32 = arith.constant 0 : i32
    %c0_i32_0 = arith.constant 0 : i32
    %c0_i32_1 = arith.constant 0 : i32
    return %c0_i32, %c0_i32_0 : i32, i32
  }
  func.func @transform_2(%arg0: i32) -> (i32, i32) {
    %c0_i32 = arith.constant 0 : i32
    %c0_i32_0 = arith.constant 0 : i32
    %c0_i32_1 = arith.constant 0 : i32
    return %c0_i32, %c0_i32_0 : i32, i32
  }
  func.func @transform_3(%arg0: i32) -> (i32, i32) {
    %c0_i32 = arith.constant 0 : i32
    %c0_i32_0 = arith.constant 0 : i32
    %c0_i32_1 = arith.constant 0 : i32
    return %c0_i32, %c0_i32_0 : i32, i32
  }
  func.func @transform_4(%arg0: i32) -> (i32, i32) {
    %c0_i32 = arith.constant 0 : i32
    %c0_i32_0 = arith.constant 0 : i32
    %c0_i32_1 = arith.constant 0 : i32
    return %c0_i32, %c0_i32_0 : i32, i32
  }
  func.func @transform_5(%arg0: i32) -> (i32, i32) {
    %c0_i32 = arith.constant 0 : i32
    %c0_i32_0 = arith.constant 0 : i32
    %c0_i32_1 = arith.constant 0 : i32
    return %c0_i32, %c0_i32_0 : i32, i32
  }
  func.func @transform_6(%arg0: i32) -> (i32, i32) {
    %c0_i32 = arith.constant 0 : i32
    %c0_i32_0 = arith.constant 0 : i32
    %c0_i32_1 = arith.constant 0 : i32
    return %c0_i32, %c0_i32_0 : i32, i32
  }
  func.func @transform_7(%arg0: i32) -> (i32, i32) {
    %c0_i32 = arith.constant 0 : i32
    %c0_i32_0 = arith.constant 0 : i32
    %c0_i32_1 = arith.constant 0 : i32
    return %c0_i32, %c0_i32_0 : i32, i32
  }
  func.func @transform_8(%arg0: i32) -> (i32, i32) {
    %c0_i32 = arith.constant 0 : i32
    %c0_i32_0 = arith.constant 0 : i32
    %c0_i32_1 = arith.constant 0 : i32
    return %c0_i32, %c0_i32_0 : i32, i32
  }
  func.func @transform_9(%arg0: i32) -> (i32, i32, i32) {
    %c0_i32 = arith.constant 0 : i32
    %c0_i32_0 = arith.constant 0 : i32
    %c0_i32_1 = arith.constant 0 : i32
    return %arg0, %c0_i32, %c0_i32_0 : i32, i32, i32
  }
}

</mosaic_0001>

<llo_original>
// kernel: _rnn_forward_impl.1
$region0: #{_rnn_forward_impl.1}
  #allocation0 [shape = 'u32[]', space=smem, size = 0x4, offset = 0x4, fixed_abs, tag = 'smem constant byte address 0x4 - core index']
  #allocation1 [shape = 'u32[144,128]{1,0:T(1,128)}', space=vmem, size = 0x12000, scoped, tag = 'internal scratch']
  #allocation2 [shape = 'f32[64,32]{1,0:T(8,128)}', space=vmem, size = 0x8000, scoped, tag = 'scratch operand']
  #allocation3 [shape = 'f32[64,32]{1,0:T(8,128)}', space=vmem, size = 0x8000, scoped, tag = 'scratch operand']
  %s0 = inlined_call_operand.vmem [shape: f32[1,64,16], index: 0, kind: input, shape index: {}]
  %s1 = inlined_call_operand.vmem [shape: f32[16,32], index: 1, kind: input, shape index: {}]
  %s2 = inlined_call_operand.vmem [shape: f32[32,32], index: 2, kind: input, shape index: {}]
  %s3 = inlined_call_operand.vmem [shape: f32[1,32], index: 3, kind: input, shape index: {}]
  %s4 = inlined_call_operand.vmem [shape: f32[32,32], index: 4, kind: input, shape index: {}]
  %s5 = inlined_call_operand.vmem [shape: f32[32,32], index: 5, kind: input, shape index: {}]
  %s6 = inlined_call_operand.vmem [shape: f32[1,32], index: 6, kind: input, shape index: {}]
  %s7 = inlined_call_operand.vmem [shape: f32[32,10], index: 7, kind: input, shape index: {}]
  %s8 = inlined_call_operand.vmem [shape: f32[1,10], index: 8, kind: input, shape index: {}]
  %s9 = inlined_call_operand.vmem [shape: f32[1,8,10], index: 9, kind: output, shape index: {}]
  %s10 = sld [smem:[#allocation0]]
  $region46: #{_rnn_forward_impl.1} parent=0
    _
  %s12 = ssub.s32 1, %s10
  %s13 = scalar_select 0, %s12, %s10
  // Predicated region
  $region2: #{_rnn_forward_impl.1} parent=0 // pred_check
    _
  $region3: #{_rnn_forward_impl.1} parent=0 // pred_check_branch
    %15 = sbr.rel (0) target = $region5
  $region4: #{_rnn_forward_impl.1} parent=0 // pred_region
    _
  $region5: #{_rnn_forward_impl.1} parent=0 // pred_fallthru
    _
  // Predicated region
  $region6: #{_rnn_forward_impl.1} parent=0 // pred_check
    _
  $region7: #{_rnn_forward_impl.1} parent=0 // pred_check_branch
    %17 = sbr.rel (0) target = $region9
  $region8: #{_rnn_forward_impl.1} parent=0 // pred_region
    _
  $region9: #{_rnn_forward_impl.1} parent=0 // pred_fallthru
    _
  // Predicated region
  $region10: #{_rnn_forward_impl.1} parent=0 // pred_check
    _
  $region11: #{_rnn_forward_impl.1} parent=0 // pred_check_branch
    %19 = sbr.rel (0) target = $region13
  $region12: #{_rnn_forward_impl.1} parent=0 // pred_region
    _
  $region13: #{_rnn_forward_impl.1} parent=0 // pred_fallthru
    _
  // Predicated region
  $region14: #{_rnn_forward_impl.1} parent=0 // pred_check
    _
  $region15: #{_rnn_forward_impl.1} parent=0 // pred_check_branch
    %21 = sbr.rel (0) target = $region17
  $region16: #{_rnn_forward_impl.1} parent=0 // pred_region
    _
  $region17: #{_rnn_forward_impl.1} parent=0 // pred_fallthru
    _
  // Predicated region
  $region18: #{_rnn_forward_impl.1} parent=0 // pred_check
    _
  $region19: #{_rnn_forward_impl.1} parent=0 // pred_check_branch
    %23 = sbr.rel (0) target = $region21
  $region20: #{_rnn_forward_impl.1} parent=0 // pred_region
    _
  $region21: #{_rnn_forward_impl.1} parent=0 // pred_fallthru
    _
  // Predicated region
  $region22: #{_rnn_forward_impl.1} parent=0 // pred_check
    _
  $region23: #{_rnn_forward_impl.1} parent=0 // pred_check_branch
    %25 = sbr.rel (0) target = $region25
  $region24: #{_rnn_forward_impl.1} parent=0 // pred_region
    _
  $region25: #{_rnn_forward_impl.1} parent=0 // pred_fallthru
    _
  // Predicated region
  $region26: #{_rnn_forward_impl.1} parent=0 // pred_check
    _
  $region27: #{_rnn_forward_impl.1} parent=0 // pred_check_branch
    %27 = sbr.rel (0) target = $region29
  $region28: #{_rnn_forward_impl.1} parent=0 // pred_region
    _
  $region29: #{_rnn_forward_impl.1} parent=0 // pred_fallthru
    _
  // Predicated region
  $region30: #{_rnn_forward_impl.1} parent=0 // pred_check
    _
  $region31: #{_rnn_forward_impl.1} parent=0 // pred_check_branch
    %29 = sbr.rel (0) target = $region33
  $region32: #{_rnn_forward_impl.1} parent=0 // pred_region
    _
  $region33: #{_rnn_forward_impl.1} parent=0 // pred_fallthru
    _
  // Predicated region
  $region34: #{_rnn_forward_impl.1} parent=0 // pred_check
    _
  $region35: #{_rnn_forward_impl.1} parent=0 // pred_check_branch
    %31 = sbr.rel (0) target = $region37
  $region36: #{_rnn_forward_impl.1} parent=0 // pred_region
    _
  $region37: #{_rnn_forward_impl.1} parent=0 // pred_fallthru
    _
  %v32 = vld [vmem:[%s1] sm:$0xff]
  %v33 = vld [vmem:[%s1 + $0x8] sm:$0xff]
  %v34 = vld [vmem:[%s2] sm:$0xff]
  %v35 = vld [vmem:[%s2 + $0x8] sm:$0xff]
  %v36 = vld [vmem:[%s2 + $0x10] sm:$0xff]
  %v37 = vld [vmem:[%s2 + $0x18] sm:$0xff]
  %v38 = vld [vmem:[%s3] sm:$0x1]
  %v39 = vld [vmem:[%s0] sm:$0xff]
  %v40 = vld [vmem:[%s0 + $0x8] sm:$0xff]
  %v41 = vld [vmem:[%s0 + $0x10] sm:$0xff]
  %v42 = vld [vmem:[%s0 + $0x18] sm:$0xff]
  %v43 = vld [vmem:[%s0 + $0x20] sm:$0xff]
  %v44 = vld [vmem:[%s0 + $0x28] sm:$0xff]
  %v45 = vld [vmem:[%s0 + $0x30] sm:$0xff]
  %v46 = vld [vmem:[%s0 + $0x38] sm:$0xff]
  %v48 = vlaneseq
  %v49 = vshrl.u32 %v48, 7
  %v50 = vsub.s32 0, %v49
  %v51 = vrot.slane %v38, %v50
  %vm53 = vcmask 130048
  %v55 = vsel %vm53, %v39, 0
  %v58 = vsel %vm53, %v40, 0
  %v61 = vsel %vm53, %v41, 0
  %v64 = vsel %vm53, %v42, 0
  %v67 = vsel %vm53, %v43, 0
  %v70 = vsel %vm53, %v44, 0
  %v73 = vsel %vm53, %v45, 0
  %v76 = vsel %vm53, %v46, 0
  %78 = vmatprep.subr.mxu0 0.0
  %79 = vmatpush1.msra.mxu0 %v32
  %80 = vmatprep.subr.mxu0 0.0
  %81 = vmatpush1.msra.mxu0 %v33
  %82 = vmatprep.subr.mxu0 0.0
  %83 = vmatpush1.msra.mxu0 0.0
  %84 = vmatprep.subr.mxu0 0.0
  %85 = vmatpush1.msra.mxu0 0.0
  %86 = vmatprep.subr.mxu0 0.0
  %87 = vmatpush1.msra.mxu0 0.0
  %88 = vmatprep.subr.mxu0 0.0
  %89 = vmatpush1.msra.mxu0 0.0
  %90 = vmatprep.subr.mxu0 0.0
  %91 = vmatpush1.msra.mxu0 0.0
  %92 = vmatprep.subr.mxu0 0.0
  %93 = vmatpush1.msra.mxu0 0.0
  %94 = vmatprep.subr.mxu0 0.0
  %95 = vmatpush1.msra.mxu0 0.0
  %96 = vmatprep.subr.mxu0 0.0
  %97 = vmatpush1.msra.mxu0 0.0
  %98 = vmatprep.subr.mxu0 0.0
  %99 = vmatpush1.msra.mxu0 0.0
  %100 = vmatprep.subr.mxu0 0.0
  %101 = vmatpush1.msra.mxu0 0.0
  %102 = vmatprep.subr.mxu0 0.0
  %103 = vmatpush1.msra.mxu0 0.0
  %104 = vmatprep.subr.mxu0 0.0
  %105 = vmatpush1.msra.mxu0 0.0
  %106 = vmatprep.subr.mxu0 0.0
  %107 = vmatpush1.msra.mxu0 0.0
  %108 = vmatprep.subr.mxu0 0.0
  %109 = vmatpush1.msra.mxu0 0.0
  %110 = vmatprep.subr.mxu0 0.0
  %111 = vmatpush1.msra.mxu0 0.0
  %112 = vmatprep.subr.mxu0 0.0
  %113 = vmatpush1.msra.mxu0 0.0
  %114 = vmatprep.subr.mxu0 0.0
  %115 = vmatpush1.msra.mxu0 0.0
  %116 = vmatprep.subr.mxu0 0.0
  %117 = vmatpush1.msra.mxu0 0.0
  %118 = vmatprep.subr.mxu0 0.0
  %119 = vmatpush1.msra.mxu0 0.0
  %120 = vmatprep.subr.mxu0 0.0
  %121 = vmatpush1.msra.mxu0 0.0
  %122 = vmatprep.subr.mxu0 0.0
  %123 = vmatpush1.msra.mxu0 0.0
  %124 = vmatprep.subr.mxu0 0.0
  %125 = vmatpush1.msra.mxu0 0.0
  %126 = vmatprep.subr.mxu0 0.0
  %127 = vmatpush1.msra.mxu0 0.0
  %128 = vmatprep.subr.mxu0 0.0
  %129 = vmatpush1.msra.mxu0 0.0
  %130 = vmatprep.subr.mxu0 0.0
  %131 = vmatpush1.msra.mxu0 0.0
  %132 = vmatprep.subr.mxu0 0.0
  %133 = vmatpush1.msra.mxu0 0.0
  %134 = vmatprep.subr.mxu0 0.0
  %135 = vmatpush1.msra.mxu0 0.0
  %136 = vmatprep.subr.mxu0 0.0
  %137 = vmatpush1.msra.mxu0 0.0
  %138 = vmatprep.subr.mxu0 0.0
  %139 = vmatpush1.msra.mxu0 0.0
  %140 = vmatprep.subr.mxu0 0.0
  %141 = vmatpush1.msra.mxu0 0.0
  %142 = vmatprep.mubr.f32.mxu0 0.0
  %143 = vmatmul.mubr.f32.gmra.mrb[0].mxu0 %v55
  %v144 = vpop.f32.mrb[0].mxu0
  %v145 = vadd.f32 %v51, %v144
  %v146 = vpop.f32.mrb[0].mxu0
  %147 = vmatprep.mubr.f32.mxu0 0.0
  %148 = vmatmul.mubr.f32.gmra.mrb[0].mxu0 %v58
  %v149 = vpop.f32.mrb[0].mxu0
  %v150 = vadd.f32 %v51, %v149
  %v151 = vpop.f32.mrb[0].mxu0
  %152 = vmatprep.mubr.f32.mxu0 0.0
  %153 = vmatmul.mubr.f32.gmra.mrb[0].mxu0 %v61
  %v154 = vpop.f32.mrb[0].mxu0
  %v155 = vadd.f32 %v51, %v154
  %v156 = vpop.f32.mrb[0].mxu0
  %157 = vmatprep.mubr.f32.mxu0 0.0
  %158 = vmatmul.mubr.f32.gmra.mrb[0].mxu0 %v64
  %v159 = vpop.f32.mrb[0].mxu0
  %v160 = vadd.f32 %v51, %v159
  %v161 = vpop.f32.mrb[0].mxu0
  %162 = vmatprep.mubr.f32.mxu0 0.0
  %163 = vmatmul.mubr.f32.gmra.mrb[0].mxu0 %v67
  %v164 = vpop.f32.mrb[0].mxu0
  %v165 = vadd.f32 %v51, %v164
  %v166 = vpop.f32.mrb[0].mxu0
  %167 = vmatprep.mubr.f32.mxu0 0.0
  %168 = vmatmul.mubr.f32.gmra.mrb[0].mxu0 %v70
  %v169 = vpop.f32.mrb[0].mxu0
  %v170 = vadd.f32 %v51, %v169
  %v171 = vpop.f32.mrb[0].mxu0
  %172 = vmatprep.mubr.f32.mxu0 0.0
  %173 = vmatmul.mubr.f32.gmra.mrb[0].mxu0 %v73
  %v174 = vpop.f32.mrb[0].mxu0
  %v175 = vadd.f32 %v51, %v174
  %v176 = vpop.f32.mrb[0].mxu0
  %177 = vmatprep.mubr.f32.mxu0 0.0
  %178 = vmatmul.mubr.f32.gmra.mrb[0].mxu0 %v76
  %v179 = vpop.f32.mrb[0].mxu0
  %v180 = vadd.f32 %v51, %v179
  %v181 = vpop.f32.mrb[0].mxu0
  %182 = vdwg.mxu0
  %vm183 = vcmask 261120
  %184 = vst.msk [vmem:[#allocation2] sm:$0xff] %vm183, %v145
  %185 = vst.msk [vmem:[#allocation2 + $0x8] sm:$0xff] %vm183, %v150
  %186 = vst.msk [vmem:[#allocation2 + $0x10] sm:$0xff] %vm183, %v155
  %187 = vst.msk [vmem:[#allocation2 + $0x18] sm:$0xff] %vm183, %v160
  %188 = vst.msk [vmem:[#allocation2 + $0x20] sm:$0xff] %vm183, %v165
  %189 = vst.msk [vmem:[#allocation2 + $0x28] sm:$0xff] %vm183, %v170
  %190 = vst.msk [vmem:[#allocation2 + $0x30] sm:$0xff] %vm183, %v175
  %191 = vst.msk [vmem:[#allocation2 + $0x38] sm:$0xff] %vm183, %v180
  %v192 = vld [vmem:[#allocation2] sm:$0xff]
  %v194 = vsel %vm183, 0.0, 0
  %196 = vmatprep.subr.mxu0 0.0
  %197 = vmatpush1.msra.mxu0 %v34
  %198 = vmatprep.subr.mxu0 0.0
  %199 = vmatpush1.msra.mxu0 %v35
  %200 = vmatprep.subr.mxu0 0.0
  %201 = vmatpush1.msra.mxu0 %v36
  %202 = vmatprep.subr.mxu0 0.0
  %203 = vmatpush1.msra.mxu0 %v37
  %204 = vmatprep.subr.mxu0 0.0
  %205 = vmatpush1.msra.mxu0 0.0
  %206 = vmatprep.subr.mxu0 0.0
  %207 = vmatpush1.msra.mxu0 0.0
  %208 = vmatprep.subr.mxu0 0.0
  %209 = vmatpush1.msra.mxu0 0.0
  %210 = vmatprep.subr.mxu0 0.0
  %211 = vmatpush1.msra.mxu0 0.0
  %212 = vmatprep.subr.mxu0 0.0
  %213 = vmatpush1.msra.mxu0 0.0
  %214 = vmatprep.subr.mxu0 0.0
  %215 = vmatpush1.msra.mxu0 0.0
  %216 = vmatprep.subr.mxu0 0.0
  %217 = vmatpush1.msra.mxu0 0.0
  %218 = vmatprep.subr.mxu0 0.0
  %219 = vmatpush1.msra.mxu0 0.0
  %220 = vmatprep.subr.mxu0 0.0
  %221 = vmatpush1.msra.mxu0 0.0
  %222 = vmatprep.subr.mxu0 0.0
  %223 = vmatpush1.msra.mxu0 0.0
  %224 = vmatprep.subr.mxu0 0.0
  %225 = vmatpush1.msra.mxu0 0.0
  %226 = vmatprep.subr.mxu0 0.0
  %227 = vmatpush1.msra.mxu0 0.0
  %228 = vmatprep.subr.mxu0 0.0
  %229 = vmatpush1.msra.mxu0 0.0
  %230 = vmatprep.subr.mxu0 0.0
  %231 = vmatpush1.msra.mxu0 0.0
  %232 = vmatprep.subr.mxu0 0.0
  %233 = vmatpush1.msra.mxu0 0.0
  %234 = vmatprep.subr.mxu0 0.0
  %235 = vmatpush1.msra.mxu0 0.0
  %236 = vmatprep.subr.mxu0 0.0
  %237 = vmatpush1.msra.mxu0 0.0
  %238 = vmatprep.subr.mxu0 0.0
  %239 = vmatpush1.msra.mxu0 0.0
  %240 = vmatprep.subr.mxu0 0.0
  %241 = vmatpush1.msra.mxu0 0.0
  %242 = vmatprep.subr.mxu0 0.0
  %243 = vmatpush1.msra.mxu0 0.0
  %244 = vmatprep.subr.mxu0 0.0
  %245 = vmatpush1.msra.mxu0 0.0
  %246 = vmatprep.subr.mxu0 0.0
  %247 = vmatpush1.msra.mxu0 0.0
  %248 = vmatprep.subr.mxu0 0.0
  %249 = vmatpush1.msra.mxu0 0.0
  %250 = vmatprep.subr.mxu0 0.0
  %251 = vmatpush1.msra.mxu0 0.0
  %252 = vmatprep.subr.mxu0 0.0
  %253 = vmatpush1.msra.mxu0 0.0
  %254 = vmatprep.subr.mxu0 0.0
  %255 = vmatpush1.msra.mxu0 0.0
  %256 = vmatprep.subr.mxu0 0.0
  %257 = vmatpush1.msra.mxu0 0.0
  %258 = vmatprep.subr.mxu0 0.0
  %259 = vmatpush1.msra.mxu0 0.0
  %260 = vmatprep.mubr.f32.mxu0 0.0
  %261 = vmatmul.mubr.f32.gmra.mrb[0].mxu0 %v194
  %v262 = vpop.f32.mrb[0].mxu0
  %v263 = vadd.f32 0.0, %v262
  %v264 = vpop.f32.mrb[0].mxu0
  %265 = vdwg.mxu0
  %v266 = vadd.f32 %v192, %v263
  %v267 = vtanh.pop %v266
  %268 = vst.msk [vmem:[#allocation3] sm:$0xff] %vm183, %v267
  %s269 = scalar_lea.vmem [#allocation2], 8
  %v270 = vld [vmem:[%s269] sm:$0xff]
  %v272 = vsel %vm183, %v267, 0
  %274 = vmatprep.subr.mxu0 0.0
  %275 = vmatpush1.msra.mxu0 %v34
  %276 = vmatprep.subr.mxu0 0.0
  %277 = vmatpush1.msra.mxu0 %v35
  %278 = vmatprep.subr.mxu0 0.0
  %279 = vmatpush1.msra.mxu0 %v36
  %280 = vmatprep.subr.mxu0 0.0
  %281 = vmatpush1.msra.mxu0 %v37
  %282 = vmatprep.subr.mxu0 0.0
  %283 = vmatpush1.msra.mxu0 0.0
  %284 = vmatprep.subr.mxu0 0.0
  %285 = vmatpush1.msra.mxu0 0.0
  %286 = vmatprep.subr.mxu0 0.0
  %287 = vmatpush1.msra.mxu0 0.0
  %288 = vmatprep.subr.mxu0 0.0
  %289 = vmatpush1.msra.mxu0 0.0
  %290 = vmatprep.subr.mxu0 0.0
  %291 = vmatpush1.msra.mxu0 0.0
  %292 = vmatprep.subr.mxu0 0.0
  %293 = vmatpush1.msra.mxu0 0.0
  %294 = vmatprep.subr.mxu0 0.0
  %295 = vmatpush1.msra.mxu0 0.0
  %296 = vmatprep.subr.mxu0 0.0
  %297 = vmatpush1.msra.mxu0 0.0
  %298 = vmatprep.subr.mxu0 0.0
  %299 = vmatpush1.msra.mxu0 0.0
  %300 = vmatprep.subr.mxu0 0.0
  %301 = vmatpush1.msra.mxu0 0.0
  %302 = vmatprep.subr.mxu0 0.0
  %303 = vmatpush1.msra.mxu0 0.0
  %304 = vmatprep.subr.mxu0 0.0
  %305 = vmatpush1.msra.mxu0 0.0
  %306 = vmatprep.subr.mxu0 0.0
  %307 = vmatpush1.msra.mxu0 0.0
  %308 = vmatprep.subr.mxu0 0.0
  %309 = vmatpush1.msra.mxu0 0.0
  %310 = vmatprep.subr.mxu0 0.0
  %311 = vmatpush1.msra.mxu0 0.0
  %312 = vmatprep.subr.mxu0 0.0
  %313 = vmatpush1.msra.mxu0 0.0
  %314 = vmatprep.subr.mxu0 0.0
  %315 = vmatpush1.msra.mxu0 0.0
  %316 = vmatprep.subr.mxu0 0.0
  %317 = vmatpush1.msra.mxu0 0.0
  %318 = vmatprep.subr.mxu0 0.0
  %319 = vmatpush1.msra.mxu0 0.0
  %320 = vmatprep.subr.mxu0 0.0
  %321 = vmatpush1.msra.mxu0 0.0
  %322 = vmatprep.subr.mxu0 0.0
  %323 = vmatpush1.msra.mxu0 0.0
  %324 = vmatprep.subr.mxu0 0.0
  %325 = vmatpush1.msra.mxu0 0.0
  %326 = vmatprep.subr.mxu0 0.0
  %327 = vmatpush1.msra.mxu0 0.0
  %328 = vmatprep.subr.mxu0 0.0
  %329 = vmatpush1.msra.mxu0 0.0
  %330 = vmatprep.subr.mxu0 0.0
  %331 = vmatpush1.msra.mxu0 0.0
  %332 = vmatprep.subr.mxu0 0.0
  %333 = vmatpush1.msra.mxu0 0.0
  %334 = vmatprep.subr.mxu0 0.0
  %335 = vmatpush1.msra.mxu0 0.0
  %336 = vmatprep.subr.mxu0 0.0
  %337 = vmatpush1.msra.mxu0 0.0
  %338 = vmatprep.mubr.f32.mxu0 0.0
  %339 = vmatmul.mubr.f32.gmra.mrb[0].mxu0 %v272
  %v340 = vpop.f32.mrb[0].mxu0
  %v341 = vadd.f32 0.0, %v340
  %v342 = vpop.f32.mrb[0].mxu0
  %343 = vdwg.mxu0
  %v344 = vadd.f32 %v270, %v341
  %v345 = vtanh.pop %v344
  %s346 = scalar_lea.vmem [#allocation3], 8
  %347 = vst.msk [vmem:[%s346] sm:$0xff] %vm183, %v345
  %s348 = scalar_lea.vmem [#allocation2], 16
  %v349 = vld [vmem:[%s348] sm:$0xff]
  %v351 = vsel %vm183, %v345, 0
  %353 = vmatprep.subr.mxu0 0.0
  %354 = vmatpush1.msra.mxu0 %v34
  %355 = vmatprep.subr.mxu0 0.0
  %356 = vmatpush1.msra.mxu0 %v35
  %357 = vmatprep.subr.mxu0 0.0
  %358 = vmatpush1.msra.mxu0 %v36
  %359 = vmatprep.subr.mxu0 0.0
  %360 = vmatpush1.msra.mxu0 %v37
  %361 = vmatprep.subr.mxu0 0.0
  %362 = vmatpush1.msra.mxu0 0.0
  %363 = vmatprep.subr.mxu0 0.0
  %364 = vmatpush1.msra.mxu0 0.0
  %365 = vmatprep.subr.mxu0 0.0
  %366 = vmatpush1.msra.mxu0 0.0
  %367 = vmatprep.subr.mxu0 0.0
  %368 = vmatpush1.msra.mxu0 0.0
  %369 = vmatprep.subr.mxu0 0.0
  %370 = vmatpush1.msra.mxu0 0.0
  %371 = vmatprep.subr.mxu0 0.0
  %372 = vmatpush1.msra.mxu0 0.0
  %373 = vmatprep.subr.mxu0 0.0
  %374 = vmatpush1.msra.mxu0 0.0
  %375 = vmatprep.subr.mxu0 0.0
  %376 = vmatpush1.msra.mxu0 0.0
  %377 = vmatprep.subr.mxu0 0.0
  %378 = vmatpush1.msra.mxu0 0.0
  %379 = vmatprep.subr.mxu0 0.0
  %380 = vmatpush1.msra.mxu0 0.0
  %381 = vmatprep.subr.mxu0 0.0
  %382 = vmatpush1.msra.mxu0 0.0
  %383 = vmatprep.subr.mxu0 0.0
  %384 = vmatpush1.msra.mxu0 0.0
  %385 = vmatprep.subr.mxu0 0.0
  %386 = vmatpush1.msra.mxu0 0.0
  %387 = vmatprep.subr.mxu0 0.0
  %388 = vmatpush1.msra.mxu0 0.0
  %389 = vmatprep.subr.mxu0 0.0
  %390 = vmatpush1.msra.mxu0 0.0
  %391 = vmatprep.subr.mxu0 0.0
  %392 = vmatpush1.msra.mxu0 0.0
  %393 = vmatprep.subr.mxu0 0.0
  %394 = vmatpush1.msra.mxu0 0.0
  %395 = vmatprep.subr.mxu0 0.0
  %396 = vmatpush1.msra.mxu0 0.0
  %397 = vmatprep.subr.mxu0 0.0
  %398 = vmatpush1.msra.mxu0 0.0
  %399 = vmatprep.subr.mxu0 0.0
  %400 = vmatpush1.msra.mxu0 0.0
  %401 = vmatprep.subr.mxu0 0.0
  %402 = vmatpush1.msra.mxu0 0.0
  %403 = vmatprep.subr.mxu0 0.0
  %404 = vmatpush1.msra.mxu0 0.0
  %405 = vmatprep.subr.mxu0 0.0
  %406 = vmatpush1.msra.mxu0 0.0
  %407 = vmatprep.subr.mxu0 0.0
  %408 = vmatpush1.msra.mxu0 0.0
  %409 = vmatprep.subr.mxu0 0.0
  %410 = vmatpush1.msra.mxu0 0.0
  %411 = vmatprep.subr.mxu0 0.0
  %412 = vmatpush1.msra.mxu0 0.0
  %413 = vmatprep.subr.mxu0 0.0
  %414 = vmatpush1.msra.mxu0 0.0
  %415 = vmatprep.subr.mxu0 0.0
  %416 = vmatpush1.msra.mxu0 0.0
  %417 = vmatprep.mubr.f32.mxu0 0.0
  %418 = vmatmul.mubr.f32.gmra.mrb[0].mxu0 %v351
  %v419 = vpop.f32.mrb[0].mxu0
  %v420 = vadd.f32 0.0, %v419
  %v421 = vpop.f32.mrb[0].mxu0
  %422 = vdwg.mxu0
  %v423 = vadd.f32 %v349, %v420
  %v424 = vtanh.pop %v423
  %s425 = scalar_lea.vmem [#allocation3], 16
  %426 = vst.msk [vmem:[%s425] sm:$0xff] %vm183, %v424
  %s427 = scalar_lea.vmem [#allocation2], 24
  %v428 = vld [vmem:[%s427] sm:$0xff]
  %v430 = vsel %vm183, %v424, 0
  %432 = vmatprep.subr.mxu0 0.0
  %433 = vmatpush1.msra.mxu0 %v34
  %434 = vmatprep.subr.mxu0 0.0
  %435 = vmatpush1.msra.mxu0 %v35
  %436 = vmatprep.subr.mxu0 0.0
  %437 = vmatpush1.msra.mxu0 %v36
  %438 = vmatprep.subr.mxu0 0.0
  %439 = vmatpush1.msra.mxu0 %v37
  %440 = vmatprep.subr.mxu0 0.0
  %441 = vmatpush1.msra.mxu0 0.0
  %442 = vmatprep.subr.mxu0 0.0
  %443 = vmatpush1.msra.mxu0 0.0
  %444 = vmatprep.subr.mxu0 0.0
  %445 = vmatpush1.msra.mxu0 0.0
  %446 = vmatprep.subr.mxu0 0.0
  %447 = vmatpush1.msra.mxu0 0.0
  %448 = vmatprep.subr.mxu0 0.0
  %449 = vmatpush1.msra.mxu0 0.0
  %450 = vmatprep.subr.mxu0 0.0
  %451 = vmatpush1.msra.mxu0 0.0
  %452 = vmatprep.subr.mxu0 0.0
  %453 = vmatpush1.msra.mxu0 0.0
  %454 = vmatprep.subr.mxu0 0.0
  %455 = vmatpush1.msra.mxu0 0.0
  %456 = vmatprep.subr.mxu0 0.0
  %457 = vmatpush1.msra.mxu0 0.0
  %458 = vmatprep.subr.mxu0 0.0
  %459 = vmatpush1.msra.mxu0 0.0
  %460 = vmatprep.subr.mxu0 0.0
  %461 = vmatpush1.msra.mxu0 0.0
  %462 = vmatprep.subr.mxu0 0.0
  %463 = vmatpush1.msra.mxu0 0.0
  %464 = vmatprep.subr.mxu0 0.0
  %465 = vmatpush1.msra.mxu0 0.0
  %466 = vmatprep.subr.mxu0 0.0
  %467 = vmatpush1.msra.mxu0 0.0
  %468 = vmatprep.subr.mxu0 0.0
  %469 = vmatpush1.msra.mxu0 0.0
  %470 = vmatprep.subr.mxu0 0.0
  %471 = vmatpush1.msra.mxu0 0.0
  %472 = vmatprep.subr.mxu0 0.0
  %473 = vmatpush1.msra.mxu0 0.0
  %474 = vmatprep.subr.mxu0 0.0
  %475 = vmatpush1.msra.mxu0 0.0
  %476 = vmatprep.subr.mxu0 0.0
  %477 = vmatpush1.msra.mxu0 0.0
  %478 = vmatprep.subr.mxu0 0.0
  %479 = vmatpush1.msra.mxu0 0.0
  %480 = vmatprep.subr.mxu0 0.0
  %481 = vmatpush1.msra.mxu0 0.0
  %482 = vmatprep.subr.mxu0 0.0
  %483 = vmatpush1.msra.mxu0 0.0
  %484 = vmatprep.subr.mxu0 0.0
  %485 = vmatpush1.msra.mxu0 0.0
  %486 = vmatprep.subr.mxu0 0.0
  %487 = vmatpush1.msra.mxu0 0.0
  %488 = vmatprep.subr.mxu0 0.0
  %489 = vmatpush1.msra.mxu0 0.0
  %490 = vmatprep.subr.mxu0 0.0
  %491 = vmatpush1.msra.mxu0 0.0
  %492 = vmatprep.subr.mxu0 0.0
  %493 = vmatpush1.msra.mxu0 0.0
  %494 = vmatprep.subr.mxu0 0.0
  %495 = vmatpush1.msra.mxu0 0.0
  %496 = vmatprep.mubr.f32.mxu0 0.0
  %497 = vmatmul.mubr.f32.gmra.mrb[0].mxu0 %v430
  %v498 = vpop.f32.mrb[0].mxu0
  %v499 = vadd.f32 0.0, %v498
  %v500 = vpop.f32.mrb[0].mxu0
  %501 = vdwg.mxu0
  %v502 = vadd.f32 %v428, %v499
  %v503 = vtanh.pop %v502
  %s504 = scalar_lea.vmem [#allocation3], 24
  %505 = vst.msk [vmem:[%s504] sm:$0xff] %vm183, %v503
  %s506 = scalar_lea.vmem [#allocation2], 32
  %v507 = vld [vmem:[%s506] sm:$0xff]
  %v509 = vsel %vm183, %v503, 0
  %511 = vmatprep.subr.mxu0 0.0
  %512 = vmatpush1.msra.mxu0 %v34
  %513 = vmatprep.subr.mxu0 0.0
  %514 = vmatpush1.msra.mxu0 %v35
  %515 = vmatprep.subr.mxu0 0.0
  %516 = vmatpush1.msra.mxu0 %v36
  %517 = vmatprep.subr.mxu0 0.0
  %518 = vmatpush1.msra.mxu0 %v37
  %519 = vmatprep.subr.mxu0 0.0
  %520 = vmatpush1.msra.mxu0 0.0
  %521 = vmatprep.subr.mxu0 0.0
  %522 = vmatpush1.msra.mxu0 0.0
  %523 = vmatprep.subr.mxu0 0.0
  %524 = vmatpush1.msra.mxu0 0.0
  %525 = vmatprep.subr.mxu0 0.0
  %526 = vmatpush1.msra.mxu0 0.0
  %527 = vmatprep.subr.mxu0 0.0
  %528 = vmatpush1.msra.mxu0 0.0
  %529 = vmatprep.subr.mxu0 0.0
  %530 = vmatpush1.msra.mxu0 0.0
  %531 = vmatprep.subr.mxu0 0.0
  %532 = vmatpush1.msra.mxu0 0.0
  %533 = vmatprep.subr.mxu0 0.0
  %534 = vmatpush1.msra.mxu0 0.0
  %535 = vmatprep.subr.mxu0 0.0
  %536 = vmatpush1.msra.mxu0 0.0
  %537 = vmatprep.subr.mxu0 0.0
  %538 = vmatpush1.msra.mxu0 0.0
  %539 = vmatprep.subr.mxu0 0.0
  %540 = vmatpush1.msra.mxu0 0.0
  %541 = vmatprep.subr.mxu0 0.0
  %542 = vmatpush1.msra.mxu0 0.0
  %543 = vmatprep.subr.mxu0 0.0
  %544 = vmatpush1.msra.mxu0 0.0
  %545 = vmatprep.subr.mxu0 0.0
  %546 = vmatpush1.msra.mxu0 0.0
  %547 = vmatprep.subr.mxu0 0.0
  %548 = vmatpush1.msra.mxu0 0.0
  %549 = vmatprep.subr.mxu0 0.0
  %550 = vmatpush1.msra.mxu0 0.0
  %551 = vmatprep.subr.mxu0 0.0
  %552 = vmatpush1.msra.mxu0 0.0
  %553 = vmatprep.subr.mxu0 0.0
  %554 = vmatpush1.msra.mxu0 0.0
  %555 = vmatprep.subr.mxu0 0.0
  %556 = vmatpush1.msra.mxu0 0.0
  %557 = vmatprep.subr.mxu0 0.0
  %558 = vmatpush1.msra.mxu0 0.0
  %559 = vmatprep.subr.mxu0 0.0
  %560 = vmatpush1.msra.mxu0 0.0
  %561 = vmatprep.subr.mxu0 0.0
  %562 = vmatpush1.msra.mxu0 0.0
  %563 = vmatprep.subr.mxu0 0.0
  %564 = vmatpush1.msra.mxu0 0.0
  %565 = vmatprep.subr.mxu0 0.0
  %566 = vmatpush1.msra.mxu0 0.0
  %567 = vmatprep.subr.mxu0 0.0
  %568 = vmatpush1.msra.mxu0 0.0
  %569 = vmatprep.subr.mxu0 0.0
  %570 = vmatpush1.msra.mxu0 0.0
  %571 = vmatprep.subr.mxu0 0.0
  %572 = vmatpush1.msra.mxu0 0.0
  %573 = vmatprep.subr.mxu0 0.0
  %574 = vmatpush1.msra.mxu0 0.0
  %575 = vmatprep.mubr.f32.mxu0 0.0
  %576 = vmatmul.mubr.f32.gmra.mrb[0].mxu0 %v509
  %v577 = vpop.f32.mrb[0].mxu0
  %v578 = vadd.f32 0.0, %v577
  %v579 = vpop.f32.mrb[0].mxu0
  %580 = vdwg.mxu0
  %v581 = vadd.f32 %v507, %v578
  %v582 = vtanh.pop %v581
  %s583 = scalar_lea.vmem [#allocation3], 32
  %584 = vst.msk [vmem:[%s583] sm:$0xff] %vm183, %v582
  %s585 = scalar_lea.vmem [#allocation2], 40
  %v586 = vld [vmem:[%s585] sm:$0xff]
  %v588 = vsel %vm183, %v582, 0
  %590 = vmatprep.subr.mxu0 0.0
  %591 = vmatpush1.msra.mxu0 %v34
  %592 = vmatprep.subr.mxu0 0.0
  %593 = vmatpush1.msra.mxu0 %v35
  %594 = vmatprep.subr.mxu0 0.0
  %595 = vmatpush1.msra.mxu0 %v36
  %596 = vmatprep.subr.mxu0 0.0
  %597 = vmatpush1.msra.mxu0 %v37
  %598 = vmatprep.subr.mxu0 0.0
  %599 = vmatpush1.msra.mxu0 0.0
  %600 = vmatprep.subr.mxu0 0.0
  %601 = vmatpush1.msra.mxu0 0.0
  %602 = vmatprep.subr.mxu0 0.0
  %603 = vmatpush1.msra.mxu0 0.0
  %604 = vmatprep.subr.mxu0 0.0
  %605 = vmatpush1.msra.mxu0 0.0
  %606 = vmatprep.subr.mxu0 0.0
  %607 = vmatpush1.msra.mxu0 0.0
  %608 = vmatprep.subr.mxu0 0.0
  %609 = vmatpush1.msra.mxu0 0.0
  %610 = vmatprep.subr.mxu0 0.0
  %611 = vmatpush1.msra.mxu0 0.0
  %612 = vmatprep.subr.mxu0 0.0
  %613 = vmatpush1.msra.mxu0 0.0
  %614 = vmatprep.subr.mxu0 0.0
  %615 = vmatpush1.msra.mxu0 0.0
  %616 = vmatprep.subr.mxu0 0.0
  %617 = vmatpush1.msra.mxu0 0.0
  %618 = vmatprep.subr.mxu0 0.0
  %619 = vmatpush1.msra.mxu0 0.0
  %620 = vmatprep.subr.mxu0 0.0
  %621 = vmatpush1.msra.mxu0 0.0
  %622 = vmatprep.subr.mxu0 0.0
  %623 = vmatpush1.msra.mxu0 0.0
  %624 = vmatprep.subr.mxu0 0.0
  %625 = vmatpush1.msra.mxu0 0.0
  %626 = vmatprep.subr.mxu0 0.0
  %627 = vmatpush1.msra.mxu0 0.0
  %628 = vmatprep.subr.mxu0 0.0
  %629 = vmatpush1.msra.mxu0 0.0
  %630 = vmatprep.subr.mxu0 0.0
  %631 = vmatpush1.msra.mxu0 0.0
  %632 = vmatprep.subr.mxu0 0.0
  %633 = vmatpush1.msra.mxu0 0.0
  %634 = vmatprep.subr.mxu0 0.0
  %635 = vmatpush1.msra.mxu0 0.0
  %636 = vmatprep.subr.mxu0 0.0
  %637 = vmatpush1.msra.mxu0 0.0
  %638 = vmatprep.subr.mxu0 0.0
  %639 = vmatpush1.msra.mxu0 0.0
  %640 = vmatprep.subr.mxu0 0.0
  %641 = vmatpush1.msra.mxu0 0.0
  %642 = vmatprep.subr.mxu0 0.0
  %643 = vmatpush1.msra.mxu0 0.0
  %644 = vmatprep.subr.mxu0 0.0
  %645 = vmatpush1.msra.mxu0 0.0
  %646 = vmatprep.subr.mxu0 0.0
  %647 = vmatpush1.msra.mxu0 0.0
  %648 = vmatprep.subr.mxu0 0.0
  %649 = vmatpush1.msra.mxu0 0.0
  %650 = vmatprep.subr.mxu0 0.0
  %651 = vmatpush1.msra.mxu0 0.0
  %652 = vmatprep.subr.mxu0 0.0
  %653 = vmatpush1.msra.mxu0 0.0
  %654 = vmatprep.mubr.f32.mxu0 0.0
  %655 = vmatmul.mubr.f32.gmra.mrb[0].mxu0 %v588
  %v656 = vpop.f32.mrb[0].mxu0
  %v657 = vadd.f32 0.0, %v656
  %v658 = vpop.f32.mrb[0].mxu0
  %659 = vdwg.mxu0
  %v660 = vadd.f32 %v586, %v657
  %v661 = vtanh.pop %v660
  %s662 = scalar_lea.vmem [#allocation3], 40
  %663 = vst.msk [vmem:[%s662] sm:$0xff] %vm183, %v661
  %s664 = scalar_lea.vmem [#allocation2], 48
  %v665 = vld [vmem:[%s664] sm:$0xff]
  %v667 = vsel %vm183, %v661, 0
  %669 = vmatprep.subr.mxu0 0.0
  %670 = vmatpush1.msra.mxu0 %v34
  %671 = vmatprep.subr.mxu0 0.0
  %672 = vmatpush1.msra.mxu0 %v35
  %673 = vmatprep.subr.mxu0 0.0
  %674 = vmatpush1.msra.mxu0 %v36
  %675 = vmatprep.subr.mxu0 0.0
  %676 = vmatpush1.msra.mxu0 %v37
  %677 = vmatprep.subr.mxu0 0.0
  %678 = vmatpush1.msra.mxu0 0.0
  %679 = vmatprep.subr.mxu0 0.0
  %680 = vmatpush1.msra.mxu0 0.0
  %681 = vmatprep.subr.mxu0 0.0
  %682 = vmatpush1.msra.mxu0 0.0
  %683 = vmatprep.subr.mxu0 0.0
  %684 = vmatpush1.msra.mxu0 0.0
  %685 = vmatprep.subr.mxu0 0.0
  %686 = vmatpush1.msra.mxu0 0.0
  %687 = vmatprep.subr.mxu0 0.0
  %688 = vmatpush1.msra.mxu0 0.0
  %689 = vmatprep.subr.mxu0 0.0
  %690 = vmatpush1.msra.mxu0 0.0
  %691 = vmatprep.subr.mxu0 0.0
  %692 = vmatpush1.msra.mxu0 0.0
  %693 = vmatprep.subr.mxu0 0.0
  %694 = vmatpush1.msra.mxu0 0.0
  %695 = vmatprep.subr.mxu0 0.0
  %696 = vmatpush1.msra.mxu0 0.0
  %697 = vmatprep.subr.mxu0 0.0
  %698 = vmatpush1.msra.mxu0 0.0
  %699 = vmatprep.subr.mxu0 0.0
  %700 = vmatpush1.msra.mxu0 0.0
  %701 = vmatprep.subr.mxu0 0.0
  %702 = vmatpush1.msra.mxu0 0.0
  %703 = vmatprep.subr.mxu0 0.0
  %704 = vmatpush1.msra.mxu0 0.0
  %705 = vmatprep.subr.mxu0 0.0
  %706 = vmatpush1.msra.mxu0 0.0
  %707 = vmatprep.subr.mxu0 0.0
  %708 = vmatpush1.msra.mxu0 0.0
  %709 = vmatprep.subr.mxu0 0.0
  %710 = vmatpush1.msra.mxu0 0.0
  %711 = vmatprep.subr.mxu0 0.0
  %712 = vmatpush1.msra.mxu0 0.0
  %713 = vmatprep.subr.mxu0 0.0
  %714 = vmatpush1.msra.mxu0 0.0
  %715 = vmatprep.subr.mxu0 0.0
  %716 = vmatpush1.msra.mxu0 0.0
  %717 = vmatprep.subr.mxu0 0.0
  %718 = vmatpush1.msra.mxu0 0.0
  %719 = vmatprep.subr.mxu0 0.0
  %720 = vmatpush1.msra.mxu0 0.0
  %721 = vmatprep.subr.mxu0 0.0
  %722 = vmatpush1.msra.mxu0 0.0
  %723 = vmatprep.subr.mxu0 0.0
  %724 = vmatpush1.msra.mxu0 0.0
  %725 = vmatprep.subr.mxu0 0.0
  %726 = vmatpush1.msra.mxu0 0.0
  %727 = vmatprep.subr.mxu0 0.0
  %728 = vmatpush1.msra.mxu0 0.0
  %729 = vmatprep.subr.mxu0 0.0
  %730 = vmatpush1.msra.mxu0 0.0
  %731 = vmatprep.subr.mxu0 0.0
  %732 = vmatpush1.msra.mxu0 0.0
  %733 = vmatprep.mubr.f32.mxu0 0.0
  %734 = vmatmul.mubr.f32.gmra.mrb[0].mxu0 %v667
  %v735 = vpop.f32.mrb[0].mxu0
  %v736 = vadd.f32 0.0, %v735
  %v737 = vpop.f32.mrb[0].mxu0
  %738 = vdwg.mxu0
  %v739 = vadd.f32 %v665, %v736
  %v740 = vtanh.pop %v739
  %s741 = scalar_lea.vmem [#allocation3], 48
  %742 = vst.msk [vmem:[%s741] sm:$0xff] %vm183, %v740
  %s743 = scalar_lea.vmem [#allocation2], 56
  %v744 = vld [vmem:[%s743] sm:$0xff]
  %v746 = vsel %vm183, %v740, 0
  %748 = vmatprep.subr.mxu0 0.0
  %749 = vmatpush1.msra.mxu0 %v34
  %750 = vmatprep.subr.mxu0 0.0
  %751 = vmatpush1.msra.mxu0 %v35
  %752 = vmatprep.subr.mxu0 0.0
  %753 = vmatpush1.msra.mxu0 %v36
  %754 = vmatprep.subr.mxu0 0.0
  %755 = vmatpush1.msra.mxu0 %v37
  %756 = vmatprep.subr.mxu0 0.0
  %757 = vmatpush1.msra.mxu0 0.0
  %758 = vmatprep.subr.mxu0 0.0
  %759 = vmatpush1.msra.mxu0 0.0
  %760 = vmatprep.subr.mxu0 0.0
  %761 = vmatpush1.msra.mxu0 0.0
  %762 = vmatprep.subr.mxu0 0.0
  %763 = vmatpush1.msra.mxu0 0.0
  %764 = vmatprep.subr.mxu0 0.0
  %765 = vmatpush1.msra.mxu0 0.0
  %766 = vmatprep.subr.mxu0 0.0
  %767 = vmatpush1.msra.mxu0 0.0
  %768 = vmatprep.subr.mxu0 0.0
  %769 = vmatpush1.msra.mxu0 0.0
  %770 = vmatprep.subr.mxu0 0.0
  %771 = vmatpush1.msra.mxu0 0.0
  %772 = vmatprep.subr.mxu0 0.0
  %773 = vmatpush1.msra.mxu0 0.0
  %774 = vmatprep.subr.mxu0 0.0
  %775 = vmatpush1.msra.mxu0 0.0
  %776 = vmatprep.subr.mxu0 0.0
  %777 = vmatpush1.msra.mxu0 0.0
  %778 = vmatprep.subr.mxu0 0.0
  %779 = vmatpush1.msra.mxu0 0.0
  %780 = vmatprep.subr.mxu0 0.0
  %781 = vmatpush1.msra.mxu0 0.0
  %782 = vmatprep.subr.mxu0 0.0
  %783 = vmatpush1.msra.mxu0 0.0
  %784 = vmatprep.subr.mxu0 0.0
  %785 = vmatpush1.msra.mxu0 0.0
  %786 = vmatprep.subr.mxu0 0.0
  %787 = vmatpush1.msra.mxu0 0.0
  %788 = vmatprep.subr.mxu0 0.0
  %789 = vmatpush1.msra.mxu0 0.0
  %790 = vmatprep.subr.mxu0 0.0
  %791 = vmatpush1.msra.mxu0 0.0
  %792 = vmatprep.subr.mxu0 0.0
  %793 = vmatpush1.msra.mxu0 0.0
  %794 = vmatprep.subr.mxu0 0.0
  %795 = vmatpush1.msra.mxu0 0.0
  %796 = vmatprep.subr.mxu0 0.0
  %797 = vmatpush1.msra.mxu0 0.0
  %798 = vmatprep.subr.mxu0 0.0
  %799 = vmatpush1.msra.mxu0 0.0
  %800 = vmatprep.subr.mxu0 0.0
  %801 = vmatpush1.msra.mxu0 0.0
  %802 = vmatprep.subr.mxu0 0.0
  %803 = vmatpush1.msra.mxu0 0.0
  %804 = vmatprep.subr.mxu0 0.0
  %805 = vmatpush1.msra.mxu0 0.0
  %806 = vmatprep.subr.mxu0 0.0
  %807 = vmatpush1.msra.mxu0 0.0
  %808 = vmatprep.subr.mxu0 0.0
  %809 = vmatpush1.msra.mxu0 0.0
  %810 = vmatprep.subr.mxu0 0.0
  %811 = vmatpush1.msra.mxu0 0.0
  %812 = vmatprep.mubr.f32.mxu0 0.0
  %813 = vmatmul.mubr.f32.gmra.mrb[0].mxu0 %v746
  %v814 = vpop.f32.mrb[0].mxu0
  %v815 = vadd.f32 0.0, %v814
  %v816 = vpop.f32.mrb[0].mxu0
  %817 = vdwg.mxu0
  %v818 = vadd.f32 %v744, %v815
  %v819 = vtanh.pop %v818
  %s820 = scalar_lea.vmem [#allocation3], 56
  %821 = vst.msk [vmem:[%s820] sm:$0xff] %vm183, %v819
  %v822 = vld [vmem:[%s4] sm:$0xff]
  %v823 = vld [vmem:[%s4 + $0x8] sm:$0xff]
  %v824 = vld [vmem:[%s4 + $0x10] sm:$0xff]
  %v825 = vld [vmem:[%s4 + $0x18] sm:$0xff]
  %v826 = vld [vmem:[%s5] sm:$0xff]
  %v827 = vld [vmem:[%s5 + $0x8] sm:$0xff]
  %v828 = vld [vmem:[%s5 + $0x10] sm:$0xff]
  %v829 = vld [vmem:[%s5 + $0x18] sm:$0xff]
  %v830 = vld [vmem:[%s6] sm:$0x1]
  %v831 = vld [vmem:[#allocation3] sm:$0xff]
  %v832 = vld [vmem:[#allocation3 + $0x8] sm:$0xff]
  %v833 = vld [vmem:[#allocation3 + $0x10] sm:$0xff]
  %v834 = vld [vmem:[#allocation3 + $0x18] sm:$0xff]
  %v835 = vld [vmem:[#allocation3 + $0x20] sm:$0xff]
  %v836 = vld [vmem:[#allocation3 + $0x28] sm:$0xff]
  %v837 = vld [vmem:[#allocation3 + $0x30] sm:$0xff]
  %v838 = vld [vmem:[#allocation3 + $0x38] sm:$0xff]
  %v840 = vlaneseq
  %v841 = vshrl.u32 %v840, 7
  %v842 = vsub.s32 0, %v841
  %v843 = vrot.slane %v830, %v842
  %v846 = vsel %vm183, %v831, 0
  %v849 = vsel %vm183, %v832, 0
  %v852 = vsel %vm183, %v833, 0
  %v855 = vsel %vm183, %v834, 0
  %v858 = vsel %vm183, %v835, 0
  %v861 = vsel %vm183, %v836, 0
  %v864 = vsel %vm183, %v837, 0
  %v867 = vsel %vm183, %v838, 0
  %869 = vmatprep.subr.mxu0 0.0
  %870 = vmatpush1.msra.mxu0 %v822
  %871 = vmatprep.subr.mxu0 0.0
  %872 = vmatpush1.msra.mxu0 %v823
  %873 = vmatprep.subr.mxu0 0.0
  %874 = vmatpush1.msra.mxu0 %v824
  %875 = vmatprep.subr.mxu0 0.0
  %876 = vmatpush1.msra.mxu0 %v825
  %877 = vmatprep.subr.mxu0 0.0
  %878 = vmatpush1.msra.mxu0 0.0
  %879 = vmatprep.subr.mxu0 0.0
  %880 = vmatpush1.msra.mxu0 0.0
  %881 = vmatprep.subr.mxu0 0.0
  %882 = vmatpush1.msra.mxu0 0.0
  %883 = vmatprep.subr.mxu0 0.0
  %884 = vmatpush1.msra.mxu0 0.0
  %885 = vmatprep.subr.mxu0 0.0
  %886 = vmatpush1.msra.mxu0 0.0
  %887 = vmatprep.subr.mxu0 0.0
  %888 = vmatpush1.msra.mxu0 0.0
  %889 = vmatprep.subr.mxu0 0.0
  %890 = vmatpush1.msra.mxu0 0.0
  %891 = vmatprep.subr.mxu0 0.0
  %892 = vmatpush1.msra.mxu0 0.0
  %893 = vmatprep.subr.mxu0 0.0
  %894 = vmatpush1.msra.mxu0 0.0
  %895 = vmatprep.subr.mxu0 0.0
  %896 = vmatpush1.msra.mxu0 0.0
  %897 = vmatprep.subr.mxu0 0.0
  %898 = vmatpush1.msra.mxu0 0.0
  %899 = vmatprep.subr.mxu0 0.0
  %900 = vmatpush1.msra.mxu0 0.0
  %901 = vmatprep.subr.mxu0 0.0
  %902 = vmatpush1.msra.mxu0 0.0
  %903 = vmatprep.subr.mxu0 0.0
  %904 = vmatpush1.msra.mxu0 0.0
  %905 = vmatprep.subr.mxu0 0.0
  %906 = vmatpush1.msra.mxu0 0.0
  %907 = vmatprep.subr.mxu0 0.0
  %908 = vmatpush1.msra.mxu0 0.0
  %909 = vmatprep.subr.mxu0 0.0
  %910 = vmatpush1.msra.mxu0 0.0
  %911 = vmatprep.subr.mxu0 0.0
  %912 = vmatpush1.msra.mxu0 0.0
  %913 = vmatprep.subr.mxu0 0.0
  %914 = vmatpush1.msra.mxu0 0.0
  %915 = vmatprep.subr.mxu0 0.0
  %916 = vmatpush1.msra.mxu0 0.0
  %917 = vmatprep.subr.mxu0 0.0
  %918 = vmatpush1.msra.mxu0 0.0
  %919 = vmatprep.subr.mxu0 0.0
  %920 = vmatpush1.msra.mxu0 0.0
  %921 = vmatprep.subr.mxu0 0.0
  %922 = vmatpush1.msra.mxu0 0.0
  %923 = vmatprep.subr.mxu0 0.0
  %924 = vmatpush1.msra.mxu0 0.0
  %925 = vmatprep.subr.mxu0 0.0
  %926 = vmatpush1.msra.mxu0 0.0
  %927 = vmatprep.subr.mxu0 0.0
  %928 = vmatpush1.msra.mxu0 0.0
  %929 = vmatprep.subr.mxu0 0.0
  %930 = vmatpush1.msra.mxu0 0.0
  %931 = vmatprep.subr.mxu0 0.0
  %932 = vmatpush1.msra.mxu0 0.0
  %933 = vmatprep.mubr.f32.mxu0 0.0
  %934 = vmatmul.mubr.f32.gmra.mrb[0].mxu0 %v846
  %v935 = vpop.f32.mrb[0].mxu0
  %v936 = vadd.f32 %v843, %v935
  %v937 = vpop.f32.mrb[0].mxu0
  %938 = vmatprep.mubr.f32.mxu0 0.0
  %939 = vmatmul.mubr.f32.gmra.mrb[0].mxu0 %v849
  %v940 = vpop.f32.mrb[0].mxu0
  %v941 = vadd.f32 %v843, %v940
  %v942 = vpop.f32.mrb[0].mxu0
  %943 = vmatprep.mubr.f32.mxu0 0.0
  %944 = vmatmul.mubr.f32.gmra.mrb[0].mxu0 %v852
  %v945 = vpop.f32.mrb[0].mxu0
  %v946 = vadd.f32 %v843, %v945
  %v947 = vpop.f32.mrb[0].mxu0
  %948 = vmatprep.mubr.f32.mxu0 0.0
  %949 = vmatmul.mubr.f32.gmra.mrb[0].mxu0 %v855
  %v950 = vpop.f32.mrb[0].mxu0
  %v951 = vadd.f32 %v843, %v950
  %v952 = vpop.f32.mrb[0].mxu0
  %953 = vmatprep.mubr.f32.mxu0 0.0
  %954 = vmatmul.mubr.f32.gmra.mrb[0].mxu0 %v858
  %v955 = vpop.f32.mrb[0].mxu0
  %v956 = vadd.f32 %v843, %v955
  %v957 = vpop.f32.mrb[0].mxu0
  %958 = vmatprep.mubr.f32.mxu0 0.0
  %959 = vmatmul.mubr.f32.gmra.mrb[0].mxu0 %v861
  %v960 = vpop.f32.mrb[0].mxu0
  %v961 = vadd.f32 %v843, %v960
  %v962 = vpop.f32.mrb[0].mxu0
  %963 = vmatprep.mubr.f32.mxu0 0.0
  %964 = vmatmul.mubr.f32.gmra.mrb[0].mxu0 %v864
  %v965 = vpop.f32.mrb[0].mxu0
  %v966 = vadd.f32 %v843, %v965
  %v967 = vpop.f32.mrb[0].mxu0
  %968 = vmatprep.mubr.f32.mxu0 0.0
  %969 = vmatmul.mubr.f32.gmra.mrb[0].mxu0 %v867
  %v970 = vpop.f32.mrb[0].mxu0
  %v971 = vadd.f32 %v843, %v970
  %v972 = vpop.f32.mrb[0].mxu0
  %973 = vdwg.mxu0
  %974 = vst.msk [vmem:[#allocation2] sm:$0xff] %vm183, %v936
  %975 = vst.msk [vmem:[#allocation2 + $0x8] sm:$0xff] %vm183, %v941
  %976 = vst.msk [vmem:[#allocation2 + $0x10] sm:$0xff] %vm183, %v946
  %977 = vst.msk [vmem:[#allocation2 + $0x18] sm:$0xff] %vm183, %v951
  %978 = vst.msk [vmem:[#allocation2 + $0x20] sm:$0xff] %vm183, %v956
  %979 = vst.msk [vmem:[#allocation2 + $0x28] sm:$0xff] %vm183, %v961
  %980 = vst.msk [vmem:[#allocation2 + $0x30] sm:$0xff] %vm183, %v966
  %981 = vst.msk [vmem:[#allocation2 + $0x38] sm:$0xff] %vm183, %v971
  %v982 = vld [vmem:[#allocation2] sm:$0xff]
  %983 = vmatprep.subr.mxu0 0.0
  %984 = vmatpush1.msra.mxu0 %v826
  %985 = vmatprep.subr.mxu0 0.0
  %986 = vmatpush1.msra.mxu0 %v827
  %987 = vmatprep.subr.mxu0 0.0
  %988 = vmatpush1.msra.mxu0 %v828
  %989 = vmatprep.subr.mxu0 0.0
  %990 = vmatpush1.msra.mxu0 %v829
  %991 = vmatprep.subr.mxu0 0.0
  %992 = vmatpush1.msra.mxu0 0.0
  %993 = vmatprep.subr.mxu0 0.0
  %994 = vmatpush1.msra.mxu0 0.0
  %995 = vmatprep.subr.mxu0 0.0
  %996 = vmatpush1.msra.mxu0 0.0
  %997 = vmatprep.subr.mxu0 0.0
  %998 = vmatpush1.msra.mxu0 0.0
  %999 = vmatprep.subr.mxu0 0.0
  %1000 = vmatpush1.msra.mxu0 0.0
  %1001 = vmatprep.subr.mxu0 0.0
  %1002 = vmatpush1.msra.mxu0 0.0
  %1003 = vmatprep.subr.mxu0 0.0
  %1004 = vmatpush1.msra.mxu0 0.0
  %1005 = vmatprep.subr.mxu0 0.0
  %1006 = vmatpush1.msra.mxu0 0.0
  %1007 = vmatprep.subr.mxu0 0.0
  %1008 = vmatpush1.msra.mxu0 0.0
  %1009 = vmatprep.subr.mxu0 0.0
  %1010 = vmatpush1.msra.mxu0 0.0
  %1011 = vmatprep.subr.mxu0 0.0
  %1012 = vmatpush1.msra.mxu0 0.0
  %1013 = vmatprep.subr.mxu0 0.0
  %1014 = vmatpush1.msra.mxu0 0.0
  %1015 = vmatprep.subr.mxu0 0.0
  %1016 = vmatpush1.msra.mxu0 0.0
  %1017 = vmatprep.subr.mxu0 0.0
  %1018 = vmatpush1.msra.mxu0 0.0
  %1019 = vmatprep.subr.mxu0 0.0
  %1020 = vmatpush1.msra.mxu0 0.0
  %1021 = vmatprep.subr.mxu0 0.0
  %1022 = vmatpush1.msra.mxu0 0.0
  %1023 = vmatprep.subr.mxu0 0.0
  %1024 = vmatpush1.msra.mxu0 0.0
  %1025 = vmatprep.subr.mxu0 0.0
  %1026 = vmatpush1.msra.mxu0 0.0
  %1027 = vmatprep.subr.mxu0 0.0
  %1028 = vmatpush1.msra.mxu0 0.0
  %1029 = vmatprep.subr.mxu0 0.0
  %1030 = vmatpush1.msra.mxu0 0.0
  %1031 = vmatprep.subr.mxu0 0.0
  %1032 = vmatpush1.msra.mxu0 0.0
  %1033 = vmatprep.subr.mxu0 0.0
  %1034 = vmatpush1.msra.mxu0 0.0
  %1035 = vmatprep.subr.mxu0 0.0
  %1036 = vmatpush1.msra.mxu0 0.0
  %1037 = vmatprep.subr.mxu0 0.0
  %1038 = vmatpush1.msra.mxu0 0.0
  %1039 = vmatprep.subr.mxu0 0.0
  %1040 = vmatpush1.msra.mxu0 0.0
  %1041 = vmatprep.subr.mxu0 0.0
  %1042 = vmatpush1.msra.mxu0 0.0
  %1043 = vmatprep.subr.mxu0 0.0
  %1044 = vmatpush1.msra.mxu0 0.0
  %1045 = vmatprep.subr.mxu0 0.0
  %1046 = vmatpush1.msra.mxu0 0.0
  %1047 = vmatprep.mubr.f32.mxu0 0.0
  %1048 = vmatmul.mubr.f32.gmra.mrb[0].mxu0 %v194
  %v1049 = vpop.f32.mrb[0].mxu0
  %v1050 = vadd.f32 0.0, %v1049
  %v1051 = vpop.f32.mrb[0].mxu0
  %1052 = vdwg.mxu0
  %v1053 = vadd.f32 %v982, %v1050
  %v1054 = vtanh.pop %v1053
  %v1055 = vld [vmem:[%s269] sm:$0xff]
  %v1057 = vsel %vm183, %v1054, 0
  %1059 = vmatprep.subr.mxu0 0.0
  %1060 = vmatpush1.msra.mxu0 %v826
  %1061 = vmatprep.subr.mxu0 0.0
  %1062 = vmatpush1.msra.mxu0 %v827
  %1063 = vmatprep.subr.mxu0 0.0
  %1064 = vmatpush1.msra.mxu0 %v828
  %1065 = vmatprep.subr.mxu0 0.0
  %1066 = vmatpush1.msra.mxu0 %v829
  %1067 = vmatprep.subr.mxu0 0.0
  %1068 = vmatpush1.msra.mxu0 0.0
  %1069 = vmatprep.subr.mxu0 0.0
  %1070 = vmatpush1.msra.mxu0 0.0
  %1071 = vmatprep.subr.mxu0 0.0
  %1072 = vmatpush1.msra.mxu0 0.0
  %1073 = vmatprep.subr.mxu0 0.0
  %1074 = vmatpush1.msra.mxu0 0.0
  %1075 = vmatprep.subr.mxu0 0.0
  %1076 = vmatpush1.msra.mxu0 0.0
  %1077 = vmatprep.subr.mxu0 0.0
  %1078 = vmatpush1.msra.mxu0 0.0
  %1079 = vmatprep.subr.mxu0 0.0
  %1080 = vmatpush1.msra.mxu0 0.0
  %1081 = vmatprep.subr.mxu0 0.0
  %1082 = vmatpush1.msra.mxu0 0.0
  %1083 = vmatprep.subr.mxu0 0.0
  %1084 = vmatpush1.msra.mxu0 0.0
  %1085 = vmatprep.subr.mxu0 0.0
  %1086 = vmatpush1.msra.mxu0 0.0
  %1087 = vmatprep.subr.mxu0 0.0
  %1088 = vmatpush1.msra.mxu0 0.0
  %1089 = vmatprep.subr.mxu0 0.0
  %1090 = vmatpush1.msra.mxu0 0.0
  %1091 = vmatprep.subr.mxu0 0.0
  %1092 = vmatpush1.msra.mxu0 0.0
  %1093 = vmatprep.subr.mxu0 0.0
  %1094 = vmatpush1.msra.mxu0 0.0
  %1095 = vmatprep.subr.mxu0 0.0
  %1096 = vmatpush1.msra.mxu0 0.0
  %1097 = vmatprep.subr.mxu0 0.0
  %1098 = vmatpush1.msra.mxu0 0.0
  %1099 = vmatprep.subr.mxu0 0.0
  %1100 = vmatpush1.msra.mxu0 0.0
  %1101 = vmatprep.subr.mxu0 0.0
  %1102 = vmatpush1.msra.mxu0 0.0
  %1103 = vmatprep.subr.mxu0 0.0
  %1104 = vmatpush1.msra.mxu0 0.0
  %1105 = vmatprep.subr.mxu0 0.0
  %1106 = vmatpush1.msra.mxu0 0.0
  %1107 = vmatprep.subr.mxu0 0.0
  %1108 = vmatpush1.msra.mxu0 0.0
  %1109 = vmatprep.subr.mxu0 0.0
  %1110 = vmatpush1.msra.mxu0 0.0
  %1111 = vmatprep.subr.mxu0 0.0
  %1112 = vmatpush1.msra.mxu0 0.0
  %1113 = vmatprep.subr.mxu0 0.0
  %1114 = vmatpush1.msra.mxu0 0.0
  %1115 = vmatprep.subr.mxu0 0.0
  %1116 = vmatpush1.msra.mxu0 0.0
  %1117 = vmatprep.subr.mxu0 0.0
  %1118 = vmatpush1.msra.mxu0 0.0
  %1119 = vmatprep.subr.mxu0 0.0
  %1120 = vmatpush1.msra.mxu0 0.0
  %1121 = vmatprep.subr.mxu0 0.0
  %1122 = vmatpush1.msra.mxu0 0.0
  %1123 = vmatprep.mubr.f32.mxu0 0.0
  %1124 = vmatmul.mubr.f32.gmra.mrb[0].mxu0 %v1057
  %v1125 = vpop.f32.mrb[0].mxu0
  %v1126 = vadd.f32 0.0, %v1125
  %v1127 = vpop.f32.mrb[0].mxu0
  %1128 = vdwg.mxu0
  %v1129 = vadd.f32 %v1055, %v1126
  %v1130 = vtanh.pop %v1129
  %v1131 = vld [vmem:[%s348] sm:$0xff]
  %v1133 = vsel %vm183, %v1130, 0
  %1135 = vmatprep.subr.mxu0 0.0
  %1136 = vmatpush1.msra.mxu0 %v826
  %1137 = vmatprep.subr.mxu0 0.0
  %1138 = vmatpush1.msra.mxu0 %v827
  %1139 = vmatprep.subr.mxu0 0.0
  %1140 = vmatpush1.msra.mxu0 %v828
  %1141 = vmatprep.subr.mxu0 0.0
  %1142 = vmatpush1.msra.mxu0 %v829
  %1143 = vmatprep.subr.mxu0 0.0
  %1144 = vmatpush1.msra.mxu0 0.0
  %1145 = vmatprep.subr.mxu0 0.0
  %1146 = vmatpush1.msra.mxu0 0.0
  %1147 = vmatprep.subr.mxu0 0.0
  %1148 = vmatpush1.msra.mxu0 0.0
  %1149 = vmatprep.subr.mxu0 0.0
  %1150 = vmatpush1.msra.mxu0 0.0
  %1151 = vmatprep.subr.mxu0 0.0
  %1152 = vmatpush1.msra.mxu0 0.0
  %1153 = vmatprep.subr.mxu0 0.0
  %1154 = vmatpush1.msra.mxu0 0.0
  %1155 = vmatprep.subr.mxu0 0.0
  %1156 = vmatpush1.msra.mxu0 0.0
  %1157 = vmatprep.subr.mxu0 0.0
  %1158 = vmatpush1.msra.mxu0 0.0
  %1159 = vmatprep.subr.mxu0 0.0
  %1160 = vmatpush1.msra.mxu0 0.0
  %1161 = vmatprep.subr.mxu0 0.0
  %1162 = vmatpush1.msra.mxu0 0.0
  %1163 = vmatprep.subr.mxu0 0.0
  %1164 = vmatpush1.msra.mxu0 0.0
  %1165 = vmatprep.subr.mxu0 0.0
  %1166 = vmatpush1.msra.mxu0 0.0
  %1167 = vmatprep.subr.mxu0 0.0
  %1168 = vmatpush1.msra.mxu0 0.0
  %1169 = vmatprep.subr.mxu0 0.0
  %1170 = vmatpush1.msra.mxu0 0.0
  %1171 = vmatprep.subr.mxu0 0.0
  %1172 = vmatpush1.msra.mxu0 0.0
  %1173 = vmatprep.subr.mxu0 0.0
  %1174 = vmatpush1.msra.mxu0 0.0
  %1175 = vmatprep.subr.mxu0 0.0
  %1176 = vmatpush1.msra.mxu0 0.0
  %1177 = vmatprep.subr.mxu0 0.0
  %1178 = vmatpush1.msra.mxu0 0.0
  %1179 = vmatprep.subr.mxu0 0.0
  %1180 = vmatpush1.msra.mxu0 0.0
  %1181 = vmatprep.subr.mxu0 0.0
  %1182 = vmatpush1.msra.mxu0 0.0
  %1183 = vmatprep.subr.mxu0 0.0
  %1184 = vmatpush1.msra.mxu0 0.0
  %1185 = vmatprep.subr.mxu0 0.0
  %1186 = vmatpush1.msra.mxu0 0.0
  %1187 = vmatprep.subr.mxu0 0.0
  %1188 = vmatpush1.msra.mxu0 0.0
  %1189 = vmatprep.subr.mxu0 0.0
  %1190 = vmatpush1.msra.mxu0 0.0
  %1191 = vmatprep.subr.mxu0 0.0
  %1192 = vmatpush1.msra.mxu0 0.0
  %1193 = vmatprep.subr.mxu0 0.0
  %1194 = vmatpush1.msra.mxu0 0.0
  %1195 = vmatprep.subr.mxu0 0.0
  %1196 = vmatpush1.msra.mxu0 0.0
  %1197 = vmatprep.subr.mxu0 0.0
  %1198 = vmatpush1.msra.mxu0 0.0
  %1199 = vmatprep.mubr.f32.mxu0 0.0
  %1200 = vmatmul.mubr.f32.gmra.mrb[0].mxu0 %v1133
  %v1201 = vpop.f32.mrb[0].mxu0
  %v1202 = vadd.f32 0.0, %v1201
  %v1203 = vpop.f32.mrb[0].mxu0
  %1204 = vdwg.mxu0
  %v1205 = vadd.f32 %v1131, %v1202
  %v1206 = vtanh.pop %v1205
  %v1207 = vld [vmem:[%s427] sm:$0xff]
  %v1209 = vsel %vm183, %v1206, 0
  %1211 = vmatprep.subr.mxu0 0.0
  %1212 = vmatpush1.msra.mxu0 %v826
  %1213 = vmatprep.subr.mxu0 0.0
  %1214 = vmatpush1.msra.mxu0 %v827
  %1215 = vmatprep.subr.mxu0 0.0
  %1216 = vmatpush1.msra.mxu0 %v828
  %1217 = vmatprep.subr.mxu0 0.0
  %1218 = vmatpush1.msra.mxu0 %v829
  %1219 = vmatprep.subr.mxu0 0.0
  %1220 = vmatpush1.msra.mxu0 0.0
  %1221 = vmatprep.subr.mxu0 0.0
  %1222 = vmatpush1.msra.mxu0 0.0
  %1223 = vmatprep.subr.mxu0 0.0
  %1224 = vmatpush1.msra.mxu0 0.0
  %1225 = vmatprep.subr.mxu0 0.0
  %1226 = vmatpush1.msra.mxu0 0.0
  %1227 = vmatprep.subr.mxu0 0.0
  %1228 = vmatpush1.msra.mxu0 0.0
  %1229 = vmatprep.subr.mxu0 0.0
  %1230 = vmatpush1.msra.mxu0 0.0
  %1231 = vmatprep.subr.mxu0 0.0
  %1232 = vmatpush1.msra.mxu0 0.0
  %1233 = vmatprep.subr.mxu0 0.0
  %1234 = vmatpush1.msra.mxu0 0.0
  %1235 = vmatprep.subr.mxu0 0.0
  %1236 = vmatpush1.msra.mxu0 0.0
  %1237 = vmatprep.subr.mxu0 0.0
  %1238 = vmatpush1.msra.mxu0 0.0
  %1239 = vmatprep.subr.mxu0 0.0
  %1240 = vmatpush1.msra.mxu0 0.0
  %1241 = vmatprep.subr.mxu0 0.0
  %1242 = vmatpush1.msra.mxu0 0.0
  %1243 = vmatprep.subr.mxu0 0.0
  %1244 = vmatpush1.msra.mxu0 0.0
  %1245 = vmatprep.subr.mxu0 0.0
  %1246 = vmatpush1.msra.mxu0 0.0
  %1247 = vmatprep.subr.mxu0 0.0
  %1248 = vmatpush1.msra.mxu0 0.0
  %1249 = vmatprep.subr.mxu0 0.0
  %1250 = vmatpush1.msra.mxu0 0.0
  %1251 = vmatprep.subr.mxu0 0.0
  %1252 = vmatpush1.msra.mxu0 0.0
  %1253 = vmatprep.subr.mxu0 0.0
  %1254 = vmatpush1.msra.mxu0 0.0
  %1255 = vmatprep.subr.mxu0 0.0
  %1256 = vmatpush1.msra.mxu0 0.0
  %1257 = vmatprep.subr.mxu0 0.0
  %1258 = vmatpush1.msra.mxu0 0.0
  %1259 = vmatprep.subr.mxu0 0.0
  %1260 = vmatpush1.msra.mxu0 0.0
  %1261 = vmatprep.subr.mxu0 0.0
  %1262 = vmatpush1.msra.mxu0 0.0
  %1263 = vmatprep.subr.mxu0 0.0
  %1264 = vmatpush1.msra.mxu0 0.0
  %1265 = vmatprep.subr.mxu0 0.0
  %1266 = vmatpush1.msra.mxu0 0.0
  %1267 = vmatprep.subr.mxu0 0.0
  %1268 = vmatpush1.msra.mxu0 0.0
  %1269 = vmatprep.subr.mxu0 0.0
  %1270 = vmatpush1.msra.mxu0 0.0
  %1271 = vmatprep.subr.mxu0 0.0
  %1272 = vmatpush1.msra.mxu0 0.0
  %1273 = vmatprep.subr.mxu0 0.0
  %1274 = vmatpush1.msra.mxu0 0.0
  %1275 = vmatprep.mubr.f32.mxu0 0.0
  %1276 = vmatmul.mubr.f32.gmra.mrb[0].mxu0 %v1209
  %v1277 = vpop.f32.mrb[0].mxu0
  %v1278 = vadd.f32 0.0, %v1277
  %v1279 = vpop.f32.mrb[0].mxu0
  %1280 = vdwg.mxu0
  %v1281 = vadd.f32 %v1207, %v1278
  %v1282 = vtanh.pop %v1281
  %v1283 = vld [vmem:[%s506] sm:$0xff]
  %v1285 = vsel %vm183, %v1282, 0
  %1287 = vmatprep.subr.mxu0 0.0
  %1288 = vmatpush1.msra.mxu0 %v826
  %1289 = vmatprep.subr.mxu0 0.0
  %1290 = vmatpush1.msra.mxu0 %v827
  %1291 = vmatprep.subr.mxu0 0.0
  %1292 = vmatpush1.msra.mxu0 %v828
  %1293 = vmatprep.subr.mxu0 0.0
  %1294 = vmatpush1.msra.mxu0 %v829
  %1295 = vmatprep.subr.mxu0 0.0
  %1296 = vmatpush1.msra.mxu0 0.0
  %1297 = vmatprep.subr.mxu0 0.0
  %1298 = vmatpush1.msra.mxu0 0.0
  %1299 = vmatprep.subr.mxu0 0.0
  %1300 = vmatpush1.msra.mxu0 0.0
  %1301 = vmatprep.subr.mxu0 0.0
  %1302 = vmatpush1.msra.mxu0 0.0
  %1303 = vmatprep.subr.mxu0 0.0
  %1304 = vmatpush1.msra.mxu0 0.0
  %1305 = vmatprep.subr.mxu0 0.0
  %1306 = vmatpush1.msra.mxu0 0.0
  %1307 = vmatprep.subr.mxu0 0.0
  %1308 = vmatpush1.msra.mxu0 0.0
  %1309 = vmatprep.subr.mxu0 0.0
  %1310 = vmatpush1.msra.mxu0 0.0
  %1311 = vmatprep.subr.mxu0 0.0
  %1312 = vmatpush1.msra.mxu0 0.0
  %1313 = vmatprep.subr.mxu0 0.0
  %1314 = vmatpush1.msra.mxu0 0.0
  %1315 = vmatprep.subr.mxu0 0.0
  %1316 = vmatpush1.msra.mxu0 0.0
  %1317 = vmatprep.subr.mxu0 0.0
  %1318 = vmatpush1.msra.mxu0 0.0
  %1319 = vmatprep.subr.mxu0 0.0
  %1320 = vmatpush1.msra.mxu0 0.0
  %1321 = vmatprep.subr.mxu0 0.0
  %1322 = vmatpush1.msra.mxu0 0.0
  %1323 = vmatprep.subr.mxu0 0.0
  %1324 = vmatpush1.msra.mxu0 0.0
  %1325 = vmatprep.subr.mxu0 0.0
  %1326 = vmatpush1.msra.mxu0 0.0
  %1327 = vmatprep.subr.mxu0 0.0
  %1328 = vmatpush1.msra.mxu0 0.0
  %1329 = vmatprep.subr.mxu0 0.0
  %1330 = vmatpush1.msra.mxu0 0.0
  %1331 = vmatprep.subr.mxu0 0.0
  %1332 = vmatpush1.msra.mxu0 0.0
  %1333 = vmatprep.subr.mxu0 0.0
  %1334 = vmatpush1.msra.mxu0 0.0
  %1335 = vmatprep.subr.mxu0 0.0
  %1336 = vmatpush1.msra.mxu0 0.0
  %1337 = vmatprep.subr.mxu0 0.0
  %1338 = vmatpush1.msra.mxu0 0.0
  %1339 = vmatprep.subr.mxu0 0.0
  %1340 = vmatpush1.msra.mxu0 0.0
  %1341 = vmatprep.subr.mxu0 0.0
  %1342 = vmatpush1.msra.mxu0 0.0
  %1343 = vmatprep.subr.mxu0 0.0
  %1344 = vmatpush1.msra.mxu0 0.0
  %1345 = vmatprep.subr.mxu0 0.0
  %1346 = vmatpush1.msra.mxu0 0.0
  %1347 = vmatprep.subr.mxu0 0.0
  %1348 = vmatpush1.msra.mxu0 0.0
  %1349 = vmatprep.subr.mxu0 0.0
  %1350 = vmatpush1.msra.mxu0 0.0
  %1351 = vmatprep.mubr.f32.mxu0 0.0
  %1352 = vmatmul.mubr.f32.gmra.mrb[0].mxu0 %v1285
  %v1353 = vpop.f32.mrb[0].mxu0
  %v1354 = vadd.f32 0.0, %v1353
  %v1355 = vpop.f32.mrb[0].mxu0
  %1356 = vdwg.mxu0
  %v1357 = vadd.f32 %v1283, %v1354
  %v1358 = vtanh.pop %v1357
  %v1359 = vld [vmem:[%s585] sm:$0xff]
  %v1361 = vsel %vm183, %v1358, 0
  %1363 = vmatprep.subr.mxu0 0.0
  %1364 = vmatpush1.msra.mxu0 %v826
  %1365 = vmatprep.subr.mxu0 0.0
  %1366 = vmatpush1.msra.mxu0 %v827
  %1367 = vmatprep.subr.mxu0 0.0
  %1368 = vmatpush1.msra.mxu0 %v828
  %1369 = vmatprep.subr.mxu0 0.0
  %1370 = vmatpush1.msra.mxu0 %v829
  %1371 = vmatprep.subr.mxu0 0.0
  %1372 = vmatpush1.msra.mxu0 0.0
  %1373 = vmatprep.subr.mxu0 0.0
  %1374 = vmatpush1.msra.mxu0 0.0
  %1375 = vmatprep.subr.mxu0 0.0
  %1376 = vmatpush1.msra.mxu0 0.0
  %1377 = vmatprep.subr.mxu0 0.0
  %1378 = vmatpush1.msra.mxu0 0.0
  %1379 = vmatprep.subr.mxu0 0.0
  %1380 = vmatpush1.msra.mxu0 0.0
  %1381 = vmatprep.subr.mxu0 0.0
  %1382 = vmatpush1.msra.mxu0 0.0
  %1383 = vmatprep.subr.mxu0 0.0
  %1384 = vmatpush1.msra.mxu0 0.0
  %1385 = vmatprep.subr.mxu0 0.0
  %1386 = vmatpush1.msra.mxu0 0.0
  %1387 = vmatprep.subr.mxu0 0.0
  %1388 = vmatpush1.msra.mxu0 0.0
  %1389 = vmatprep.subr.mxu0 0.0
  %1390 = vmatpush1.msra.mxu0 0.0
  %1391 = vmatprep.subr.mxu0 0.0
  %1392 = vmatpush1.msra.mxu0 0.0
  %1393 = vmatprep.subr.mxu0 0.0
  %1394 = vmatpush1.msra.mxu0 0.0
  %1395 = vmatprep.subr.mxu0 0.0
  %1396 = vmatpush1.msra.mxu0 0.0
  %1397 = vmatprep.subr.mxu0 0.0
  %1398 = vmatpush1.msra.mxu0 0.0
  %1399 = vmatprep.subr.mxu0 0.0
  %1400 = vmatpush1.msra.mxu0 0.0
  %1401 = vmatprep.subr.mxu0 0.0
  %1402 = vmatpush1.msra.mxu0 0.0
  %1403 = vmatprep.subr.mxu0 0.0
  %1404 = vmatpush1.msra.mxu0 0.0
  %1405 = vmatprep.subr.mxu0 0.0
  %1406 = vmatpush1.msra.mxu0 0.0
  %1407 = vmatprep.subr.mxu0 0.0
  %1408 = vmatpush1.msra.mxu0 0.0
  %1409 = vmatprep.subr.mxu0 0.0
  %1410 = vmatpush1.msra.mxu0 0.0
  %1411 = vmatprep.subr.mxu0 0.0
  %1412 = vmatpush1.msra.mxu0 0.0
  %1413 = vmatprep.subr.mxu0 0.0
  %1414 = vmatpush1.msra.mxu0 0.0
  %1415 = vmatprep.subr.mxu0 0.0
  %1416 = vmatpush1.msra.mxu0 0.0
  %1417 = vmatprep.subr.mxu0 0.0
  %1418 = vmatpush1.msra.mxu0 0.0
  %1419 = vmatprep.subr.mxu0 0.0
  %1420 = vmatpush1.msra.mxu0 0.0
  %1421 = vmatprep.subr.mxu0 0.0
  %1422 = vmatpush1.msra.mxu0 0.0
  %1423 = vmatprep.subr.mxu0 0.0
  %1424 = vmatpush1.msra.mxu0 0.0
  %1425 = vmatprep.subr.mxu0 0.0
  %1426 = vmatpush1.msra.mxu0 0.0
  %1427 = vmatprep.mubr.f32.mxu0 0.0
  %1428 = vmatmul.mubr.f32.gmra.mrb[0].mxu0 %v1361
  %v1429 = vpop.f32.mrb[0].mxu0
  %v1430 = vadd.f32 0.0, %v1429
  %v1431 = vpop.f32.mrb[0].mxu0
  %1432 = vdwg.mxu0
  %v1433 = vadd.f32 %v1359, %v1430
  %v1434 = vtanh.pop %v1433
  %v1435 = vld [vmem:[%s664] sm:$0xff]
  %v1437 = vsel %vm183, %v1434, 0
  %1439 = vmatprep.subr.mxu0 0.0
  %1440 = vmatpush1.msra.mxu0 %v826
  %1441 = vmatprep.subr.mxu0 0.0
  %1442 = vmatpush1.msra.mxu0 %v827
  %1443 = vmatprep.subr.mxu0 0.0
  %1444 = vmatpush1.msra.mxu0 %v828
  %1445 = vmatprep.subr.mxu0 0.0
  %1446 = vmatpush1.msra.mxu0 %v829
  %1447 = vmatprep.subr.mxu0 0.0
  %1448 = vmatpush1.msra.mxu0 0.0
  %1449 = vmatprep.subr.mxu0 0.0
  %1450 = vmatpush1.msra.mxu0 0.0
  %1451 = vmatprep.subr.mxu0 0.0
  %1452 = vmatpush1.msra.mxu0 0.0
  %1453 = vmatprep.subr.mxu0 0.0
  %1454 = vmatpush1.msra.mxu0 0.0
  %1455 = vmatprep.subr.mxu0 0.0
  %1456 = vmatpush1.msra.mxu0 0.0
  %1457 = vmatprep.subr.mxu0 0.0
  %1458 = vmatpush1.msra.mxu0 0.0
  %1459 = vmatprep.subr.mxu0 0.0
  %1460 = vmatpush1.msra.mxu0 0.0
  %1461 = vmatprep.subr.mxu0 0.0
  %1462 = vmatpush1.msra.mxu0 0.0
  %1463 = vmatprep.subr.mxu0 0.0
  %1464 = vmatpush1.msra.mxu0 0.0
  %1465 = vmatprep.subr.mxu0 0.0
  %1466 = vmatpush1.msra.mxu0 0.0
  %1467 = vmatprep.subr.mxu0 0.0
  %1468 = vmatpush1.msra.mxu0 0.0
  %1469 = vmatprep.subr.mxu0 0.0
  %1470 = vmatpush1.msra.mxu0 0.0
  %1471 = vmatprep.subr.mxu0 0.0
  %1472 = vmatpush1.msra.mxu0 0.0
  %1473 = vmatprep.subr.mxu0 0.0
  %1474 = vmatpush1.msra.mxu0 0.0
  %1475 = vmatprep.subr.mxu0 0.0
  %1476 = vmatpush1.msra.mxu0 0.0
  %1477 = vmatprep.subr.mxu0 0.0
  %1478 = vmatpush1.msra.mxu0 0.0
  %1479 = vmatprep.subr.mxu0 0.0
  %1480 = vmatpush1.msra.mxu0 0.0
  %1481 = vmatprep.subr.mxu0 0.0
  %1482 = vmatpush1.msra.mxu0 0.0
  %1483 = vmatprep.subr.mxu0 0.0
  %1484 = vmatpush1.msra.mxu0 0.0
  %1485 = vmatprep.subr.mxu0 0.0
  %1486 = vmatpush1.msra.mxu0 0.0
  %1487 = vmatprep.subr.mxu0 0.0
  %1488 = vmatpush1.msra.mxu0 0.0
  %1489 = vmatprep.subr.mxu0 0.0
  %1490 = vmatpush1.msra.mxu0 0.0
  %1491 = vmatprep.subr.mxu0 0.0
  %1492 = vmatpush1.msra.mxu0 0.0
  %1493 = vmatprep.subr.mxu0 0.0
  %1494 = vmatpush1.msra.mxu0 0.0
  %1495 = vmatprep.subr.mxu0 0.0
  %1496 = vmatpush1.msra.mxu0 0.0
  %1497 = vmatprep.subr.mxu0 0.0
  %1498 = vmatpush1.msra.mxu0 0.0
  %1499 = vmatprep.subr.mxu0 0.0
  %1500 = vmatpush1.msra.mxu0 0.0
  %1501 = vmatprep.subr.mxu0 0.0
  %1502 = vmatpush1.msra.mxu0 0.0
  %1503 = vmatprep.mubr.f32.mxu0 0.0
  %1504 = vmatmul.mubr.f32.gmra.mrb[0].mxu0 %v1437
  %v1505 = vpop.f32.mrb[0].mxu0
  %v1506 = vadd.f32 0.0, %v1505
  %v1507 = vpop.f32.mrb[0].mxu0
  %1508 = vdwg.mxu0
  %v1509 = vadd.f32 %v1435, %v1506
  %v1510 = vtanh.pop %v1509
  %v1511 = vld [vmem:[%s743] sm:$0xff]
  %v1513 = vsel %vm183, %v1510, 0
  %1515 = vmatprep.subr.mxu0 0.0
  %1516 = vmatpush1.msra.mxu0 %v826
  %1517 = vmatprep.subr.mxu0 0.0
  %1518 = vmatpush1.msra.mxu0 %v827
  %1519 = vmatprep.subr.mxu0 0.0
  %1520 = vmatpush1.msra.mxu0 %v828
  %1521 = vmatprep.subr.mxu0 0.0
  %1522 = vmatpush1.msra.mxu0 %v829
  %1523 = vmatprep.subr.mxu0 0.0
  %1524 = vmatpush1.msra.mxu0 0.0
  %1525 = vmatprep.subr.mxu0 0.0
  %1526 = vmatpush1.msra.mxu0 0.0
  %1527 = vmatprep.subr.mxu0 0.0
  %1528 = vmatpush1.msra.mxu0 0.0
  %1529 = vmatprep.subr.mxu0 0.0
  %1530 = vmatpush1.msra.mxu0 0.0
  %1531 = vmatprep.subr.mxu0 0.0
  %1532 = vmatpush1.msra.mxu0 0.0
  %1533 = vmatprep.subr.mxu0 0.0
  %1534 = vmatpush1.msra.mxu0 0.0
  %1535 = vmatprep.subr.mxu0 0.0
  %1536 = vmatpush1.msra.mxu0 0.0
  %1537 = vmatprep.subr.mxu0 0.0
  %1538 = vmatpush1.msra.mxu0 0.0
  %1539 = vmatprep.subr.mxu0 0.0
  %1540 = vmatpush1.msra.mxu0 0.0
  %1541 = vmatprep.subr.mxu0 0.0
  %1542 = vmatpush1.msra.mxu0 0.0
  %1543 = vmatprep.subr.mxu0 0.0
  %1544 = vmatpush1.msra.mxu0 0.0
  %1545 = vmatprep.subr.mxu0 0.0
  %1546 = vmatpush1.msra.mxu0 0.0
  %1547 = vmatprep.subr.mxu0 0.0
  %1548 = vmatpush1.msra.mxu0 0.0
  %1549 = vmatprep.subr.mxu0 0.0
  %1550 = vmatpush1.msra.mxu0 0.0
  %1551 = vmatprep.subr.mxu0 0.0
  %1552 = vmatpush1.msra.mxu0 0.0
  %1553 = vmatprep.subr.mxu0 0.0
  %1554 = vmatpush1.msra.mxu0 0.0
  %1555 = vmatprep.subr.mxu0 0.0
  %1556 = vmatpush1.msra.mxu0 0.0
  %1557 = vmatprep.subr.mxu0 0.0
  %1558 = vmatpush1.msra.mxu0 0.0
  %1559 = vmatprep.subr.mxu0 0.0
  %1560 = vmatpush1.msra.mxu0 0.0
  %1561 = vmatprep.subr.mxu0 0.0
  %1562 = vmatpush1.msra.mxu0 0.0
  %1563 = vmatprep.subr.mxu0 0.0
  %1564 = vmatpush1.msra.mxu0 0.0
  %1565 = vmatprep.subr.mxu0 0.0
  %1566 = vmatpush1.msra.mxu0 0.0
  %1567 = vmatprep.subr.mxu0 0.0
  %1568 = vmatpush1.msra.mxu0 0.0
  %1569 = vmatprep.subr.mxu0 0.0
  %1570 = vmatpush1.msra.mxu0 0.0
  %1571 = vmatprep.subr.mxu0 0.0
  %1572 = vmatpush1.msra.mxu0 0.0
  %1573 = vmatprep.subr.mxu0 0.0
  %1574 = vmatpush1.msra.mxu0 0.0
  %1575 = vmatprep.subr.mxu0 0.0
  %1576 = vmatpush1.msra.mxu0 0.0
  %1577 = vmatprep.subr.mxu0 0.0
  %1578 = vmatpush1.msra.mxu0 0.0
  %1579 = vmatprep.mubr.f32.mxu0 0.0
  %1580 = vmatmul.mubr.f32.gmra.mrb[0].mxu0 %v1513
  %v1581 = vpop.f32.mrb[0].mxu0
  %v1582 = vadd.f32 0.0, %v1581
  %v1583 = vpop.f32.mrb[0].mxu0
  %1584 = vdwg.mxu0
  %v1585 = vadd.f32 %v1511, %v1582
  %v1586 = vtanh.pop %v1585
  %v1587 = vld [vmem:[%s7] sm:$0xff]
  %v1588 = vld [vmem:[%s7 + $0x8] sm:$0xff]
  %v1589 = vld [vmem:[%s7 + $0x10] sm:$0xff]
  %v1590 = vld [vmem:[%s7 + $0x18] sm:$0xff]
  %v1591 = vld [vmem:[%s8] sm:$0x1]
  %v1593 = vlaneseq
  %v1594 = vshrl.u32 %v1593, 7
  %v1595 = vsub.s32 0, %v1594
  %v1596 = vrot.slane %v1591, %v1595
  %v1599 = vsel %vm183, %v1586, 0
  %1601 = vmatprep.subr.mxu0 0.0
  %1602 = vmatpush1.msra.mxu0 %v1587
  %1603 = vmatprep.subr.mxu0 0.0
  %1604 = vmatpush1.msra.mxu0 %v1588
  %1605 = vmatprep.subr.mxu0 0.0
  %1606 = vmatpush1.msra.mxu0 %v1589
  %1607 = vmatprep.subr.mxu0 0.0
  %1608 = vmatpush1.msra.mxu0 %v1590
  %1609 = vmatprep.subr.mxu0 0.0
  %1610 = vmatpush1.msra.mxu0 0.0
  %1611 = vmatprep.subr.mxu0 0.0
  %1612 = vmatpush1.msra.mxu0 0.0
  %1613 = vmatprep.subr.mxu0 0.0
  %1614 = vmatpush1.msra.mxu0 0.0
  %1615 = vmatprep.subr.mxu0 0.0
  %1616 = vmatpush1.msra.mxu0 0.0
  %1617 = vmatprep.subr.mxu0 0.0
  %1618 = vmatpush1.msra.mxu0 0.0
  %1619 = vmatprep.subr.mxu0 0.0
  %1620 = vmatpush1.msra.mxu0 0.0
  %1621 = vmatprep.subr.mxu0 0.0
  %1622 = vmatpush1.msra.mxu0 0.0
  %1623 = vmatprep.subr.mxu0 0.0
  %1624 = vmatpush1.msra.mxu0 0.0
  %1625 = vmatprep.subr.mxu0 0.0
  %1626 = vmatpush1.msra.mxu0 0.0
  %1627 = vmatprep.subr.mxu0 0.0
  %1628 = vmatpush1.msra.mxu0 0.0
  %1629 = vmatprep.subr.mxu0 0.0
  %1630 = vmatpush1.msra.mxu0 0.0
  %1631 = vmatprep.subr.mxu0 0.0
  %1632 = vmatpush1.msra.mxu0 0.0
  %1633 = vmatprep.subr.mxu0 0.0
  %1634 = vmatpush1.msra.mxu0 0.0
  %1635 = vmatprep.subr.mxu0 0.0
  %1636 = vmatpush1.msra.mxu0 0.0
  %1637 = vmatprep.subr.mxu0 0.0
  %1638 = vmatpush1.msra.mxu0 0.0
  %1639 = vmatprep.subr.mxu0 0.0
  %1640 = vmatpush1.msra.mxu0 0.0
  %1641 = vmatprep.subr.mxu0 0.0
  %1642 = vmatpush1.msra.mxu0 0.0
  %1643 = vmatprep.subr.mxu0 0.0
  %1644 = vmatpush1.msra.mxu0 0.0
  %1645 = vmatprep.subr.mxu0 0.0
  %1646 = vmatpush1.msra.mxu0 0.0
  %1647 = vmatprep.subr.mxu0 0.0
  %1648 = vmatpush1.msra.mxu0 0.0
  %1649 = vmatprep.subr.mxu0 0.0
  %1650 = vmatpush1.msra.mxu0 0.0
  %1651 = vmatprep.subr.mxu0 0.0
  %1652 = vmatpush1.msra.mxu0 0.0
  %1653 = vmatprep.subr.mxu0 0.0
  %1654 = vmatpush1.msra.mxu0 0.0
  %1655 = vmatprep.subr.mxu0 0.0
  %1656 = vmatpush1.msra.mxu0 0.0
  %1657 = vmatprep.subr.mxu0 0.0
  %1658 = vmatpush1.msra.mxu0 0.0
  %1659 = vmatprep.subr.mxu0 0.0
  %1660 = vmatpush1.msra.mxu0 0.0
  %1661 = vmatprep.subr.mxu0 0.0
  %1662 = vmatpush1.msra.mxu0 0.0
  %1663 = vmatprep.subr.mxu0 0.0
  %1664 = vmatpush1.msra.mxu0 0.0
  %1665 = vmatprep.mubr.f32.mxu0 0.0
  %1666 = vmatmul.mubr.f32.gmra.mrb[0].mxu0 %v1599
  %v1667 = vpop.f32.mrb[0].mxu0
  %v1668 = vadd.f32 %v1596, %v1667
  %v1669 = vpop.f32.mrb[0].mxu0
  %1670 = vdwg.mxu0
  %vm1671 = vcmask 80896
  %1672 = vst.msk [vmem:[%s9] sm:$0xff] %vm1671, %v1668
  // Predicated region
  $region38: #{_rnn_forward_impl.1} parent=0 // pred_check
    _
  $region39: #{_rnn_forward_impl.1} parent=0 // pred_check_branch
    %1674 = sbr.rel (0) target = $region41
  $region40: #{_rnn_forward_impl.1} parent=0 // pred_region
    _
  $region41: #{_rnn_forward_impl.1} parent=0 // pred_fallthru
    _
  // Predicated region
  $region42: #{_rnn_forward_impl.1} parent=0 // pred_check
    _
  $region43: #{_rnn_forward_impl.1} parent=0 // pred_check_branch
    %1676 = sbr.rel (0) target = $region45
  $region44: #{_rnn_forward_impl.1} parent=0 // pred_region
    _
  $region45: #{_rnn_forward_impl.1} parent=0 // pred_fallthru
    _

// kernel: _rnn_forward_impl.1
$region0: #{_rnn_forward_impl.1}
  #allocation0 [shape = 'u32[]', space=smem, size = 0x4, offset = 0x4, fixed_abs, tag = 'smem constant byte address 0x4 - core index']
  #allocation1 [shape = 'u32[144,128]{1,0:T(1,128)}', space=vmem, size = 0x12000, scoped, tag = 'internal scratch']
  #allocation2 [shape = 'f32[64,32]{1,0:T(8,128)}', space=vmem, size = 0x8000, scoped, tag = 'scratch operand']
  #allocation3 [shape = 'f32[64,32]{1,0:T(8,128)}', space=vmem, size = 0x8000, scoped, tag = 'scratch operand']
  %s0 = inlined_call_operand.vmem [shape: f32[1,64,16], index: 0, kind: input, shape index: {}]
  %s1 = inlined_call_operand.vmem [shape: f32[16,32], index: 1, kind: input, shape index: {}]
  %s2 = inlined_call_operand.vmem [shape: f32[32,32], index: 2, kind: input, shape index: {}]
  %s3 = inlined_call_operand.vmem [shape: f32[1,32], index: 3, kind: input, shape index: {}]
  %s4 = inlined_call_operand.vmem [shape: f32[32,32], index: 4, kind: input, shape index: {}]
  %s5 = inlined_call_operand.vmem [shape: f32[32,32], index: 5, kind: input, shape index: {}]
  %s6 = inlined_call_operand.vmem [shape: f32[1,32], index: 6, kind: input, shape index: {}]
  %s7 = inlined_call_operand.vmem [shape: f32[32,10], index: 7, kind: input, shape index: {}]
  %s8 = inlined_call_operand.vmem [shape: f32[1,10], index: 8, kind: input, shape index: {}]
  %s9 = inlined_call_operand.vmem [shape: f32[1,8,10], index: 9, kind: output, shape index: {}]
  %s10 = sld [smem:[#allocation0]]
  $region46: #{_rnn_forward_impl.1} parent=0
    _
  %s12 = ssub.s32 1, %s10
  %s13 = scalar_select 0, %s12, %s10
  // Predicated region
  $region2: #{_rnn_forward_impl.1} parent=0 // pred_check
    _
  $region3: #{_rnn_forward_impl.1} parent=0 // pred_check_branch
    %15 = sbr.rel (0) target = $region5
  $region4: #{_rnn_forward_impl.1} parent=0 // pred_region
    _
  $region5: #{_rnn_forward_impl.1} parent=0 // pred_fallthru
    _
  // Predicated region
  $region6: #{_rnn_forward_impl.1} parent=0 // pred_check
    _
  $region7: #{_rnn_forward_impl.1} parent=0 // pred_check_branch
    %17 = sbr.rel (0) target = $region9
  $region8: #{_rnn_forward_impl.1} parent=0 // pred_region
    _
  $region9: #{_rnn_forward_impl.1} parent=0 // pred_fallthru
    _
  // Predicated region
  $region10: #{_rnn_forward_impl.1} parent=0 // pred_check
    _
  $region11: #{_rnn_forward_impl.1} parent=0 // pred_check_branch
    %19 = sbr.rel (0) target = $region13
  $region12: #{_rnn_forward_impl.1} parent=0 // pred_region
    _
  $region13: #{_rnn_forward_impl.1} parent=0 // pred_fallthru
    _
  // Predicated region
  $region14: #{_rnn_forward_impl.1} parent=0 // pred_check
    _
  $region15: #{_rnn_forward_impl.1} parent=0 // pred_check_branch
    %21 = sbr.rel (0) target = $region17
  $region16: #{_rnn_forward_impl.1} parent=0 // pred_region
    _
  $region17: #{_rnn_forward_impl.1} parent=0 // pred_fallthru
    _
  // Predicated region
  $region18: #{_rnn_forward_impl.1} parent=0 // pred_check
    _
  $region19: #{_rnn_forward_impl.1} parent=0 // pred_check_branch
    %23 = sbr.rel (0) target = $region21
  $region20: #{_rnn_forward_impl.1} parent=0 // pred_region
    _
  $region21: #{_rnn_forward_impl.1} parent=0 // pred_fallthru
    _
  // Predicated region
  $region22: #{_rnn_forward_impl.1} parent=0 // pred_check
    _
  $region23: #{_rnn_forward_impl.1} parent=0 // pred_check_branch
    %25 = sbr.rel (0) target = $region25
  $region24: #{_rnn_forward_impl.1} parent=0 // pred_region
    _
  $region25: #{_rnn_forward_impl.1} parent=0 // pred_fallthru
    _
  // Predicated region
  $region26: #{_rnn_forward_impl.1} parent=0 // pred_check
    _
  $region27: #{_rnn_forward_impl.1} parent=0 // pred_check_branch
    %27 = sbr.rel (0) target = $region29
  $region28: #{_rnn_forward_impl.1} parent=0 // pred_region
    _
  $region29: #{_rnn_forward_impl.1} parent=0 // pred_fallthru
    _
  // Predicated region
  $region30: #{_rnn_forward_impl.1} parent=0 // pred_check
    _
  $region31: #{_rnn_forward_impl.1} parent=0 // pred_check_branch
    %29 = sbr.rel (0) target = $region33
  $region32: #{_rnn_forward_impl.1} parent=0 // pred_region
    _
  $region33: #{_rnn_forward_impl.1} parent=0 // pred_fallthru
    _
  // Predicated region
  $region34: #{_rnn_forward_impl.1} parent=0 // pred_check
    _
  $region35: #{_rnn_forward_impl.1} parent=0 // pred_check_branch
    %31 = sbr.rel (0) target = $region37
  $region36: #{_rnn_forward_impl.1} parent=0 // pred_region
    _
  $region37: #{_rnn_forward_impl.1} parent=0 // pred_fallthru
    _
  %v32 = vld [vmem:[%s1] sm:$0xff]
  %v33 = vld [vmem:[%s1 + $0x8] sm:$0xff]
  %v34 = vld [vmem:[%s2] sm:$0xff]
  %v35 = vld [vmem:[%s2 + $0x8] sm:$0xff]
  %v36 = vld [vmem:[%s2 + $0x10] sm:$0xff]
  %v37 = vld [vmem:[%s2 + $0x18] sm:$0xff]
  %v38 = vld [vmem:[%s3] sm:$0x1]
  %v39 = vld [vmem:[%s0] sm:$0xff]
  %v40 = vld [vmem:[%s0 + $0x8] sm:$0xff]
  %v41 = vld [vmem:[%s0 + $0x10] sm:$0xff]
  %v42 = vld [vmem:[%s0 + $0x18] sm:$0xff]
  %v43 = vld [vmem:[%s0 + $0x20] sm:$0xff]
  %v44 = vld [vmem:[%s0 + $0x28] sm:$0xff]
  %v45 = vld [vmem:[%s0 + $0x30] sm:$0xff]
  %v46 = vld [vmem:[%s0 + $0x38] sm:$0xff]
  %v48 = vlaneseq
  %v49 = vshrl.u32 %v48, 7
  %v50 = vsub.s32 0, %v49
  %v51 = vrot.slane %v38, %v50
  %vm53 = vcmask 130048
  %v55 = vsel %vm53, %v39, 0
  %v58 = vsel %vm53, %v40, 0
  %v61 = vsel %vm53, %v41, 0
  %v64 = vsel %vm53, %v42, 0
  %v67 = vsel %vm53, %v43, 0
  %v70 = vsel %vm53, %v44, 0
  %v73 = vsel %vm53, %v45, 0
  %v76 = vsel %vm53, %v46, 0
  %78 = vmatprep.subr.mxu0 0.0
  %79 = vmatpush1.msra.mxu0 %v32
  %80 = vmatprep.subr.mxu0 0.0
  %81 = vmatpush1.msra.mxu0 %v33
  %82 = vmatprep.subr.mxu0 0.0
  %83 = vmatpush1.msra.mxu0 0.0
  %84 = vmatprep.subr.mxu0 0.0
  %85 = vmatpush1.msra.mxu0 0.0
  %86 = vmatprep.subr.mxu0 0.0
  %87 = vmatpush1.msra.mxu0 0.0
  %88 = vmatprep.subr.mxu0 0.0
  %89 = vmatpush1.msra.mxu0 0.0
  %90 = vmatprep.subr.mxu0 0.0
  %91 = vmatpush1.msra.mxu0 0.0
  %92 = vmatprep.subr.mxu0 0.0
  %93 = vmatpush1.msra.mxu0 0.0
  %94 = vmatprep.subr.mxu0 0.0
  %95 = vmatpush1.msra.mxu0 0.0
  %96 = vmatprep.subr.mxu0 0.0
  %97 = vmatpush1.msra.mxu0 0.0
  %98 = vmatprep.subr.mxu0 0.0
  %99 = vmatpush1.msra.mxu0 0.0
  %100 = vmatprep.subr.mxu0 0.0
  %101 = vmatpush1.msra.mxu0 0.0
  %102 = vmatprep.subr.mxu0 0.0
  %103 = vmatpush1.msra.mxu0 0.0
  %104 = vmatprep.subr.mxu0 0.0
  %105 = vmatpush1.msra.mxu0 0.0
  %106 = vmatprep.subr.mxu0 0.0
  %107 = vmatpush1.msra.mxu0 0.0
  %108 = vmatprep.subr.mxu0 0.0
  %109 = vmatpush1.msra.mxu0 0.0
  %110 = vmatprep.subr.mxu0 0.0
  %111 = vmatpush1.msra.mxu0 0.0
  %112 = vmatprep.subr.mxu0 0.0
  %113 = vmatpush1.msra.mxu0 0.0
  %114 = vmatprep.subr.mxu0 0.0
  %115 = vmatpush1.msra.mxu0 0.0
  %116 = vmatprep.subr.mxu0 0.0
  %117 = vmatpush1.msra.mxu0 0.0
  %118 = vmatprep.subr.mxu0 0.0
  %119 = vmatpush1.msra.mxu0 0.0
  %120 = vmatprep.subr.mxu0 0.0
  %121 = vmatpush1.msra.mxu0 0.0
  %122 = vmatprep.subr.mxu0 0.0
  %123 = vmatpush1.msra.mxu0 0.0
  %124 = vmatprep.subr.mxu0 0.0
  %125 = vmatpush1.msra.mxu0 0.0
  %126 = vmatprep.subr.mxu0 0.0
  %127 = vmatpush1.msra.mxu0 0.0
  %128 = vmatprep.subr.mxu0 0.0
  %129 = vmatpush1.msra.mxu0 0.0
  %130 = vmatprep.subr.mxu0 0.0
  %131 = vmatpush1.msra.mxu0 0.0
  %132 = vmatprep.subr.mxu0 0.0
  %133 = vmatpush1.msra.mxu0 0.0
  %134 = vmatprep.subr.mxu0 0.0
  %135 = vmatpush1.msra.mxu0 0.0
  %136 = vmatprep.subr.mxu0 0.0
  %137 = vmatpush1.msra.mxu0 0.0
  %138 = vmatprep.subr.mxu0 0.0
  %139 = vmatpush1.msra.mxu0 0.0
  %140 = vmatprep.subr.mxu0 0.0
  %141 = vmatpush1.msra.mxu0 0.0
  %142 = vmatprep.mubr.f32.mxu0 0.0
  %143 = vmatmul.mubr.f32.gmra.mrb[0].mxu0 %v55
  %v144 = vpop.f32.mrb[0].mxu0
  %v145 = vadd.f32 %v51, %v144
  %v146 = vpop.f32.mrb[0].mxu0
  %147 = vmatprep.mubr.f32.mxu0 0.0
  %148 = vmatmul.mubr.f32.gmra.mrb[0].mxu0 %v58
  %v149 = vpop.f32.mrb[0].mxu0
  %v150 = vadd.f32 %v51, %v149
  %v151 = vpop.f32.mrb[0].mxu0
  %152 = vmatprep.mubr.f32.mxu0 0.0
  %153 = vmatmul.mubr.f32.gmra.mrb[0].mxu0 %v61
  %v154 = vpop.f32.mrb[0].mxu0
  %v155 = vadd.f32 %v51, %v154
  %v156 = vpop.f32.mrb[0].mxu0
  %157 = vmatprep.mubr.f32.mxu0 0.0
  %158 = vmatmul.mubr.f32.gmra.mrb[0].mxu0 %v64
  %v159 = vpop.f32.mrb[0].mxu0
  %v160 = vadd.f32 %v51, %v159
  %v161 = vpop.f32.mrb[0].mxu0
  %162 = vmatprep.mubr.f32.mxu0 0.0
  %163 = vmatmul.mubr.f32.gmra.mrb[0].mxu0 %v67
  %v164 = vpop.f32.mrb[0].mxu0
  %v165 = vadd.f32 %v51, %v164
  %v166 = vpop.f32.mrb[0].mxu0
  %167 = vmatprep.mubr.f32.mxu0 0.0
  %168 = vmatmul.mubr.f32.gmra.mrb[0].mxu0 %v70
  %v169 = vpop.f32.mrb[0].mxu0
  %v170 = vadd.f32 %v51, %v169
  %v171 = vpop.f32.mrb[0].mxu0
  %172 = vmatprep.mubr.f32.mxu0 0.0
  %173 = vmatmul.mubr.f32.gmra.mrb[0].mxu0 %v73
  %v174 = vpop.f32.mrb[0].mxu0
  %v175 = vadd.f32 %v51, %v174
  %v176 = vpop.f32.mrb[0].mxu0
  %177 = vmatprep.mubr.f32.mxu0 0.0
  %178 = vmatmul.mubr.f32.gmra.mrb[0].mxu0 %v76
  %v179 = vpop.f32.mrb[0].mxu0
  %v180 = vadd.f32 %v51, %v179
  %v181 = vpop.f32.mrb[0].mxu0
  %182 = vdwg.mxu0
  %vm183 = vcmask 261120
  %184 = vst.msk [vmem:[#allocation2] sm:$0xff] %vm183, %v145
  %185 = vst.msk [vmem:[#allocation2 + $0x8] sm:$0xff] %vm183, %v150
  %186 = vst.msk [vmem:[#allocation2 + $0x10] sm:$0xff] %vm183, %v155
  %187 = vst.msk [vmem:[#allocation2 + $0x18] sm:$0xff] %vm183, %v160
  %188 = vst.msk [vmem:[#allocation2 + $0x20] sm:$0xff] %vm183, %v165
  %189 = vst.msk [vmem:[#allocation2 + $0x28] sm:$0xff] %vm183, %v170
  %190 = vst.msk [vmem:[#allocation2 + $0x30] sm:$0xff] %vm183, %v175
  %191 = vst.msk [vmem:[#allocation2 + $0x38] sm:$0xff] %vm183, %v180
  %v192 = vld [vmem:[#allocation2] sm:$0xff]
  %v194 = vsel %vm183, 0.0, 0
  %196 = vmatprep.subr.mxu0 0.0
  %197 = vmatpush1.msra.mxu0 %v34
  %198 = vmatprep.subr.mxu0 0.0
  %199 = vmatpush1.msra.mxu0 %v35
  %200 = vmatprep.subr.mxu0 0.0
  %201 = vmatpush1.msra.mxu0 %v36
  %202 = vmatprep.subr.mxu0 0.0
  %203 = vmatpush1.msra.mxu0 %v37
  %204 = vmatprep.subr.mxu0 0.0
  %205 = vmatpush1.msra.mxu0 0.0
  %206 = vmatprep.subr.mxu0 0.0
  %207 = vmatpush1.msra.mxu0 0.0
  %208 = vmatprep.subr.mxu0 0.0
  %209 = vmatpush1.msra.mxu0 0.0
  %210 = vmatprep.subr.mxu0 0.0
  %211 = vmatpush1.msra.mxu0 0.0
  %212 = vmatprep.subr.mxu0 0.0
  %213 = vmatpush1.msra.mxu0 0.0
  %214 = vmatprep.subr.mxu0 0.0
  %215 = vmatpush1.msra.mxu0 0.0
  %216 = vmatprep.subr.mxu0 0.0
  %217 = vmatpush1.msra.mxu0 0.0
  %218 = vmatprep.subr.mxu0 0.0
  %219 = vmatpush1.msra.mxu0 0.0
  %220 = vmatprep.subr.mxu0 0.0
  %221 = vmatpush1.msra.mxu0 0.0
  %222 = vmatprep.subr.mxu0 0.0
  %223 = vmatpush1.msra.mxu0 0.0
  %224 = vmatprep.subr.mxu0 0.0
  %225 = vmatpush1.msra.mxu0 0.0
  %226 = vmatprep.subr.mxu0 0.0
  %227 = vmatpush1.msra.mxu0 0.0
  %228 = vmatprep.subr.mxu0 0.0
  %229 = vmatpush1.msra.mxu0 0.0
  %230 = vmatprep.subr.mxu0 0.0
  %231 = vmatpush1.msra.mxu0 0.0
  %232 = vmatprep.subr.mxu0 0.0
  %233 = vmatpush1.msra.mxu0 0.0
  %234 = vmatprep.subr.mxu0 0.0
  %235 = vmatpush1.msra.mxu0 0.0
  %236 = vmatprep.subr.mxu0 0.0
  %237 = vmatpush1.msra.mxu0 0.0
  %238 = vmatprep.subr.mxu0 0.0
  %239 = vmatpush1.msra.mxu0 0.0
  %240 = vmatprep.subr.mxu0 0.0
  %241 = vmatpush1.msra.mxu0 0.0
  %242 = vmatprep.subr.mxu0 0.0
  %243 = vmatpush1.msra.mxu0 0.0
  %244 = vmatprep.subr.mxu0 0.0
  %245 = vmatpush1.msra.mxu0 0.0
  %246 = vmatprep.subr.mxu0 0.0
  %247 = vmatpush1.msra.mxu0 0.0
  %248 = vmatprep.subr.mxu0 0.0
  %249 = vmatpush1.msra.mxu0 0.0
  %250 = vmatprep.subr.mxu0 0.0
  %251 = vmatpush1.msra.mxu0 0.0
  %252 = vmatprep.subr.mxu0 0.0
  %253 = vmatpush1.msra.mxu0 0.0
  %254 = vmatprep.subr.mxu0 0.0
  %255 = vmatpush1.msra.mxu0 0.0
  %256 = vmatprep.subr.mxu0 0.0
  %257 = vmatpush1.msra.mxu0 0.0
  %258 = vmatprep.subr.mxu0 0.0
  %259 = vmatpush1.msra.mxu0 0.0
  %260 = vmatprep.mubr.f32.mxu0 0.0
  %261 = vmatmul.mubr.f32.gmra.mrb[0].mxu0 %v194
  %v262 = vpop.f32.mrb[0].mxu0
  %v263 = vadd.f32 0.0, %v262
  %v264 = vpop.f32.mrb[0].mxu0
  %265 = vdwg.mxu0
  %v266 = vadd.f32 %v192, %v263
  %v267 = vtanh.pop %v266
  %268 = vst.msk [vmem:[#allocation3] sm:$0xff] %vm183, %v267
  %s269 = scalar_lea.vmem [#allocation2], 8
  %v270 = vld [vmem:[%s269] sm:$0xff]
  %v272 = vsel %vm183, %v267, 0
  %274 = vmatprep.subr.mxu0 0.0
  %275 = vmatpush1.msra.mxu0 %v34
  %276 = vmatprep.subr.mxu0 0.0
  %277 = vmatpush1.msra.mxu0 %v35
  %278 = vmatprep.subr.mxu0 0.0
  %279 = vmatpush1.msra.mxu0 %v36
  %280 = vmatprep.subr.mxu0 0.0
  %281 = vmatpush1.msra.mxu0 %v37
  %282 = vmatprep.subr.mxu0 0.0
  %283 = vmatpush1.msra.mxu0 0.0
  %284 = vmatprep.subr.mxu0 0.0
  %285 = vmatpush1.msra.mxu0 0.0
  %286 = vmatprep.subr.mxu0 0.0
  %287 = vmatpush1.msra.mxu0 0.0
  %288 = vmatprep.subr.mxu0 0.0
  %289 = vmatpush1.msra.mxu0 0.0
  %290 = vmatprep.subr.mxu0 0.0
  %291 = vmatpush1.msra.mxu0 0.0
  %292 = vmatprep.subr.mxu0 0.0
  %293 = vmatpush1.msra.mxu0 0.0
  %294 = vmatprep.subr.mxu0 0.0
  %295 = vmatpush1.msra.mxu0 0.0
  %296 = vmatprep.subr.mxu0 0.0
  %297 = vmatpush1.msra.mxu0 0.0
  %298 = vmatprep.subr.mxu0 0.0
  %299 = vmatpush1.msra.mxu0 0.0
  %300 = vmatprep.subr.mxu0 0.0
  %301 = vmatpush1.msra.mxu0 0.0
  %302 = vmatprep.subr.mxu0 0.0
  %303 = vmatpush1.msra.mxu0 0.0
  %304 = vmatprep.subr.mxu0 0.0
  %305 = vmatpush1.msra.mxu0 0.0
  %306 = vmatprep.subr.mxu0 0.0
  %307 = vmatpush1.msra.mxu0 0.0
  %308 = vmatprep.subr.mxu0 0.0
  %309 = vmatpush1.msra.mxu0 0.0
  %310 = vmatprep.subr.mxu0 0.0
  %311 = vmatpush1.msra.mxu0 0.0
  %312 = vmatprep.subr.mxu0 0.0
  %313 = vmatpush1.msra.mxu0 0.0
  %314 = vmatprep.subr.mxu0 0.0
  %315 = vmatpush1.msra.mxu0 0.0
  %316 = vmatprep.subr.mxu0 0.0
  %317 = vmatpush1.msra.mxu0 0.0
  %318 = vmatprep.subr.mxu0 0.0
  %319 = vmatpush1.msra.mxu0 0.0
  %320 = vmatprep.subr.mxu0 0.0
  %321 = vmatpush1.msra.mxu0 0.0
  %322 = vmatprep.subr.mxu0 0.0
  %323 = vmatpush1.msra.mxu0 0.0
  %324 = vmatprep.subr.mxu0 0.0
  %325 = vmatpush1.msra.mxu0 0.0
  %326 = vmatprep.subr.mxu0 0.0
  %327 = vmatpush1.msra.mxu0 0.0
  %328 = vmatprep.subr.mxu0 0.0
  %329 = vmatpush1.msra.mxu0 0.0
  %330 = vmatprep.subr.mxu0 0.0
  %331 = vmatpush1.msra.mxu0 0.0
  %332 = vmatprep.subr.mxu0 0.0
  %333 = vmatpush1.msra.mxu0 0.0
  %334 = vmatprep.subr.mxu0 0.0
  %335 = vmatpush1.msra.mxu0 0.0
  %336 = vmatprep.subr.mxu0 0.0
  %337 = vmatpush1.msra.mxu0 0.0
  %338 = vmatprep.mubr.f32.mxu0 0.0
  %339 = vmatmul.mubr.f32.gmra.mrb[0].mxu0 %v272
  %v340 = vpop.f32.mrb[0].mxu0
  %v341 = vadd.f32 0.0, %v340
  %v342 = vpop.f32.mrb[0].mxu0
  %343 = vdwg.mxu0
  %v344 = vadd.f32 %v270, %v341
  %v345 = vtanh.pop %v344
  %s346 = scalar_lea.vmem [#allocation3], 8
  %347 = vst.msk [vmem:[%s346] sm:$0xff] %vm183, %v345
  %s348 = scalar_lea.vmem [#allocation2], 16
  %v349 = vld [vmem:[%s348] sm:$0xff]
  %v351 = vsel %vm183, %v345, 0
  %353 = vmatprep.subr.mxu0 0.0
  %354 = vmatpush1.msra.mxu0 %v34
  %355 = vmatprep.subr.mxu0 0.0
  %356 = vmatpush1.msra.mxu0 %v35
  %357 = vmatprep.subr.mxu0 0.0
  %358 = vmatpush1.msra.mxu0 %v36
  %359 = vmatprep.subr.mxu0 0.0
  %360 = vmatpush1.msra.mxu0 %v37
  %361 = vmatprep.subr.mxu0 0.0
  %362 = vmatpush1.msra.mxu0 0.0
  %363 = vmatprep.subr.mxu0 0.0
  %364 = vmatpush1.msra.mxu0 0.0
  %365 = vmatprep.subr.mxu0 0.0
  %366 = vmatpush1.msra.mxu0 0.0
  %367 = vmatprep.subr.mxu0 0.0
  %368 = vmatpush1.msra.mxu0 0.0
  %369 = vmatprep.subr.mxu0 0.0
  %370 = vmatpush1.msra.mxu0 0.0
  %371 = vmatprep.subr.mxu0 0.0
  %372 = vmatpush1.msra.mxu0 0.0
  %373 = vmatprep.subr.mxu0 0.0
  %374 = vmatpush1.msra.mxu0 0.0
  %375 = vmatprep.subr.mxu0 0.0
  %376 = vmatpush1.msra.mxu0 0.0
  %377 = vmatprep.subr.mxu0 0.0
  %378 = vmatpush1.msra.mxu0 0.0
  %379 = vmatprep.subr.mxu0 0.0
  %380 = vmatpush1.msra.mxu0 0.0
  %381 = vmatprep.subr.mxu0 0.0
  %382 = vmatpush1.msra.mxu0 0.0
  %383 = vmatprep.subr.mxu0 0.0
  %384 = vmatpush1.msra.mxu0 0.0
  %385 = vmatprep.subr.mxu0 0.0
  %386 = vmatpush1.msra.mxu0 0.0
  %387 = vmatprep.subr.mxu0 0.0
  %388 = vmatpush1.msra.mxu0 0.0
  %389 = vmatprep.subr.mxu0 0.0
  %390 = vmatpush1.msra.mxu0 0.0
  %391 = vmatprep.subr.mxu0 0.0
  %392 = vmatpush1.msra.mxu0 0.0
  %393 = vmatprep.subr.mxu0 0.0
  %394 = vmatpush1.msra.mxu0 0.0
  %395 = vmatprep.subr.mxu0 0.0
  %396 = vmatpush1.msra.mxu0 0.0
  %397 = vmatprep.subr.mxu0 0.0
  %398 = vmatpush1.msra.mxu0 0.0
  %399 = vmatprep.subr.mxu0 0.0
  %400 = vmatpush1.msra.mxu0 0.0
  %401 = vmatprep.subr.mxu0 0.0
  %402 = vmatpush1.msra.mxu0 0.0
  %403 = vmatprep.subr.mxu0 0.0
  %404 = vmatpush1.msra.mxu0 0.0
  %405 = vmatprep.subr.mxu0 0.0
  %406 = vmatpush1.msra.mxu0 0.0
  %407 = vmatprep.subr.mxu0 0.0
  %408 = vmatpush1.msra.mxu0 0.0
  %409 = vmatprep.subr.mxu0 0.0
  %410 = vmatpush1.msra.mxu0 0.0
  %411 = vmatprep.subr.mxu0 0.0
  %412 = vmatpush1.msra.mxu0 0.0
  %413 = vmatprep.subr.mxu0 0.0
  %414 = vmatpush1.msra.mxu0 0.0
  %415 = vmatprep.subr.mxu0 0.0
  %416 = vmatpush1.msra.mxu0 0.0
  %417 = vmatprep.mubr.f32.mxu0 0.0
  %418 = vmatmul.mubr.f32.gmra.mrb[0].mxu0 %v351
  %v419 = vpop.f32.mrb[0].mxu0
  %v420 = vadd.f32 0.0, %v419
  %v421 = vpop.f32.mrb[0].mxu0
  %422 = vdwg.mxu0
  %v423 = vadd.f32 %v349, %v420
  %v424 = vtanh.pop %v423
  %s425 = scalar_lea.vmem [#allocation3], 16
  %426 = vst.msk [vmem:[%s425] sm:$0xff] %vm183, %v424
  %s427 = scalar_lea.vmem [#allocation2], 24
  %v428 = vld [vmem:[%s427] sm:$0xff]
  %v430 = vsel %vm183, %v424, 0
  %432 = vmatprep.subr.mxu0 0.0
  %433 = vmatpush1.msra.mxu0 %v34
  %434 = vmatprep.subr.mxu0 0.0
  %435 = vmatpush1.msra.mxu0 %v35
  %436 = vmatprep.subr.mxu0 0.0
  %437 = vmatpush1.msra.mxu0 %v36
  %438 = vmatprep.subr.mxu0 0.0
  %439 = vmatpush1.msra.mxu0 %v37
  %440 = vmatprep.subr.mxu0 0.0
  %441 = vmatpush1.msra.mxu0 0.0
  %442 = vmatprep.subr.mxu0 0.0
  %443 = vmatpush1.msra.mxu0 0.0
  %444 = vmatprep.subr.mxu0 0.0
  %445 = vmatpush1.msra.mxu0 0.0
  %446 = vmatprep.subr.mxu0 0.0
  %447 = vmatpush1.msra.mxu0 0.0
  %448 = vmatprep.subr.mxu0 0.0
  %449 = vmatpush1.msra.mxu0 0.0
  %450 = vmatprep.subr.mxu0 0.0
  %451 = vmatpush1.msra.mxu0 0.0
  %452 = vmatprep.subr.mxu0 0.0
  %453 = vmatpush1.msra.mxu0 0.0
  %454 = vmatprep.subr.mxu0 0.0
  %455 = vmatpush1.msra.mxu0 0.0
  %456 = vmatprep.subr.mxu0 0.0
  %457 = vmatpush1.msra.mxu0 0.0
  %458 = vmatprep.subr.mxu0 0.0
  %459 = vmatpush1.msra.mxu0 0.0
  %460 = vmatprep.subr.mxu0 0.0
  %461 = vmatpush1.msra.mxu0 0.0
  %462 = vmatprep.subr.mxu0 0.0
  %463 = vmatpush1.msra.mxu0 0.0
  %464 = vmatprep.subr.mxu0 0.0
  %465 = vmatpush1.msra.mxu0 0.0
  %466 = vmatprep.subr.mxu0 0.0
  %467 = vmatpush1.msra.mxu0 0.0
  %468 = vmatprep.subr.mxu0 0.0
  %469 = vmatpush1.msra.mxu0 0.0
  %470 = vmatprep.subr.mxu0 0.0
  %471 = vmatpush1.msra.mxu0 0.0
  %472 = vmatprep.subr.mxu0 0.0
  %473 = vmatpush1.msra.mxu0 0.0
  %474 = vmatprep.subr.mxu0 0.0
  %475 = vmatpush1.msra.mxu0 0.0
  %476 = vmatprep.subr.mxu0 0.0
  %477 = vmatpush1.msra.mxu0 0.0
  %478 = vmatprep.subr.mxu0 0.0
  %479 = vmatpush1.msra.mxu0 0.0
  %480 = vmatprep.subr.mxu0 0.0
  %481 = vmatpush1.msra.mxu0 0.0
  %482 = vmatprep.subr.mxu0 0.0
  %483 = vmatpush1.msra.mxu0 0.0
  %484 = vmatprep.subr.mxu0 0.0
  %485 = vmatpush1.msra.mxu0 0.0
  %486 = vmatprep.subr.mxu0 0.0
  %487 = vmatpush1.msra.mxu0 0.0
  %488 = vmatprep.subr.mxu0 0.0
  %489 = vmatpush1.msra.mxu0 0.0
  %490 = vmatprep.subr.mxu0 0.0
  %491 = vmatpush1.msra.mxu0 0.0
  %492 = vmatprep.subr.mxu0 0.0
  %493 = vmatpush1.msra.mxu0 0.0
  %494 = vmatprep.subr.mxu0 0.0
  %495 = vmatpush1.msra.mxu0 0.0
  %496 = vmatprep.mubr.f32.mxu0 0.0
  %497 = vmatmul.mubr.f32.gmra.mrb[0].mxu0 %v430
  %v498 = vpop.f32.mrb[0].mxu0
  %v499 = vadd.f32 0.0, %v498
  %v500 = vpop.f32.mrb[0].mxu0
  %501 = vdwg.mxu0
  %v502 = vadd.f32 %v428, %v499
  %v503 = vtanh.pop %v502
  %s504 = scalar_lea.vmem [#allocation3], 24
  %505 = vst.msk [vmem:[%s504] sm:$0xff] %vm183, %v503
  %s506 = scalar_lea.vmem [#allocation2], 32
  %v507 = vld [vmem:[%s506] sm:$0xff]
  %v509 = vsel %vm183, %v503, 0
  %511 = vmatprep.subr.mxu0 0.0
  %512 = vmatpush1.msra.mxu0 %v34
  %513 = vmatprep.subr.mxu0 0.0
  %514 = vmatpush1.msra.mxu0 %v35
  %515 = vmatprep.subr.mxu0 0.0
  %516 = vmatpush1.msra.mxu0 %v36
  %517 = vmatprep.subr.mxu0 0.0
  %518 = vmatpush1.msra.mxu0 %v37
  %519 = vmatprep.subr.mxu0 0.0
  %520 = vmatpush1.msra.mxu0 0.0
  %521 = vmatprep.subr.mxu0 0.0
  %522 = vmatpush1.msra.mxu0 0.0
  %523 = vmatprep.subr.mxu0 0.0
  %524 = vmatpush1.msra.mxu0 0.0
  %525 = vmatprep.subr.mxu0 0.0
  %526 = vmatpush1.msra.mxu0 0.0
  %527 = vmatprep.subr.mxu0 0.0
  %528 = vmatpush1.msra.mxu0 0.0
  %529 = vmatprep.subr.mxu0 0.0
  %530 = vmatpush1.msra.mxu0 0.0
  %531 = vmatprep.subr.mxu0 0.0
  %532 = vmatpush1.msra.mxu0 0.0
  %533 = vmatprep.subr.mxu0 0.0
  %534 = vmatpush1.msra.mxu0 0.0
  %535 = vmatprep.subr.mxu0 0.0
  %536 = vmatpush1.msra.mxu0 0.0
  %537 = vmatprep.subr.mxu0 0.0
  %538 = vmatpush1.msra.mxu0 0.0
  %539 = vmatprep.subr.mxu0 0.0
  %540 = vmatpush1.msra.mxu0 0.0
  %541 = vmatprep.subr.mxu0 0.0
  %542 = vmatpush1.msra.mxu0 0.0
  %543 = vmatprep.subr.mxu0 0.0
  %544 = vmatpush1.msra.mxu0 0.0
  %545 = vmatprep.subr.mxu0 0.0
  %546 = vmatpush1.msra.mxu0 0.0
  %547 = vmatprep.subr.mxu0 0.0
  %548 = vmatpush1.msra.mxu0 0.0
  %549 = vmatprep.subr.mxu0 0.0
  %550 = vmatpush1.msra.mxu0 0.0
  %551 = vmatprep.subr.mxu0 0.0
  %552 = vmatpush1.msra.mxu0 0.0
  %553 = vmatprep.subr.mxu0 0.0
  %554 = vmatpush1.msra.mxu0 0.0
  %555 = vmatprep.subr.mxu0 0.0
  %556 = vmatpush1.msra.mxu0 0.0
  %557 = vmatprep.subr.mxu0 0.0
  %558 = vmatpush1.msra.mxu0 0.0
  %559 = vmatprep.subr.mxu0 0.0
  %560 = vmatpush1.msra.mxu0 0.0
  %561 = vmatprep.subr.mxu0 0.0
  %562 = vmatpush1.msra.mxu0 0.0
  %563 = vmatprep.subr.mxu0 0.0
  %564 = vmatpush1.msra.mxu0 0.0
  %565 = vmatprep.subr.mxu0 0.0
  %566 = vmatpush1.msra.mxu0 0.0
  %567 = vmatprep.subr.mxu0 0.0
  %568 = vmatpush1.msra.mxu0 0.0
  %569 = vmatprep.subr.mxu0 0.0
  %570 = vmatpush1.msra.mxu0 0.0
  %571 = vmatprep.subr.mxu0 0.0
  %572 = vmatpush1.msra.mxu0 0.0
  %573 = vmatprep.subr.mxu0 0.0
  %574 = vmatpush1.msra.mxu0 0.0
  %575 = vmatprep.mubr.f32.mxu0 0.0
  %576 = vmatmul.mubr.f32.gmra.mrb[0].mxu0 %v509
  %v577 = vpop.f32.mrb[0].mxu0
  %v578 = vadd.f32 0.0, %v577
  %v579 = vpop.f32.mrb[0].mxu0
  %580 = vdwg.mxu0
  %v581 = vadd.f32 %v507, %v578
  %v582 = vtanh.pop %v581
  %s583 = scalar_lea.vmem [#allocation3], 32
  %584 = vst.msk [vmem:[%s583] sm:$0xff] %vm183, %v582
  %s585 = scalar_lea.vmem [#allocation2], 40
  %v586 = vld [vmem:[%s585] sm:$0xff]
  %v588 = vsel %vm183, %v582, 0
  %590 = vmatprep.subr.mxu0 0.0
  %591 = vmatpush1.msra.mxu0 %v34
  %592 = vmatprep.subr.mxu0 0.0
  %593 = vmatpush1.msra.mxu0 %v35
  %594 = vmatprep.subr.mxu0 0.0
  %595 = vmatpush1.msra.mxu0 %v36
  %596 = vmatprep.subr.mxu0 0.0
  %597 = vmatpush1.msra.mxu0 %v37
  %598 = vmatprep.subr.mxu0 0.0
  %599 = vmatpush1.msra.mxu0 0.0
  %600 = vmatprep.subr.mxu0 0.0
  %601 = vmatpush1.msra.mxu0 0.0
  %602 = vmatprep.subr.mxu0 0.0
  %603 = vmatpush1.msra.mxu0 0.0
  %604 = vmatprep.subr.mxu0 0.0
  %605 = vmatpush1.msra.mxu0 0.0
  %606 = vmatprep.subr.mxu0 0.0
  %607 = vmatpush1.msra.mxu0 0.0
  %608 = vmatprep.subr.mxu0 0.0
  %609 = vmatpush1.msra.mxu0 0.0
  %610 = vmatprep.subr.mxu0 0.0
  %611 = vmatpush1.msra.mxu0 0.0
  %612 = vmatprep.subr.mxu0 0.0
  %613 = vmatpush1.msra.mxu0 0.0
  %614 = vmatprep.subr.mxu0 0.0
  %615 = vmatpush1.msra.mxu0 0.0
  %616 = vmatprep.subr.mxu0 0.0
  %617 = vmatpush1.msra.mxu0 0.0
  %618 = vmatprep.subr.mxu0 0.0
  %619 = vmatpush1.msra.mxu0 0.0
  %620 = vmatprep.subr.mxu0 0.0
  %621 = vmatpush1.msra.mxu0 0.0
  %622 = vmatprep.subr.mxu0 0.0
  %623 = vmatpush1.msra.mxu0 0.0
  %624 = vmatprep.subr.mxu0 0.0
  %625 = vmatpush1.msra.mxu0 0.0
  %626 = vmatprep.subr.mxu0 0.0
  %627 = vmatpush1.msra.mxu0 0.0
  %628 = vmatprep.subr.mxu0 0.0
  %629 = vmatpush1.msra.mxu0 0.0
  %630 = vmatprep.subr.mxu0 0.0
  %631 = vmatpush1.msra.mxu0 0.0
  %632 = vmatprep.subr.mxu0 0.0
  %633 = vmatpush1.msra.mxu0 0.0
  %634 = vmatprep.subr.mxu0 0.0
  %635 = vmatpush1.msra.mxu0 0.0
  %636 = vmatprep.subr.mxu0 0.0
  %637 = vmatpush1.msra.mxu0 0.0
  %638 = vmatprep.subr.mxu0 0.0
  %639 = vmatpush1.msra.mxu0 0.0
  %640 = vmatprep.subr.mxu0 0.0
  %641 = vmatpush1.msra.mxu0 0.0
  %642 = vmatprep.subr.mxu0 0.0
  %643 = vmatpush1.msra.mxu0 0.0
  %644 = vmatprep.subr.mxu0 0.0
  %645 = vmatpush1.msra.mxu0 0.0
  %646 = vmatprep.subr.mxu0 0.0
  %647 = vmatpush1.msra.mxu0 0.0
  %648 = vmatprep.subr.mxu0 0.0
  %649 = vmatpush1.msra.mxu0 0.0
  %650 = vmatprep.subr.mxu0 0.0
  %651 = vmatpush1.msra.mxu0 0.0
  %652 = vmatprep.subr.mxu0 0.0
  %653 = vmatpush1.msra.mxu0 0.0
  %654 = vmatprep.mubr.f32.mxu0 0.0
  %655 = vmatmul.mubr.f32.gmra.mrb[0].mxu0 %v588
  %v656 = vpop.f32.mrb[0].mxu0
  %v657 = vadd.f32 0.0, %v656
  %v658 = vpop.f32.mrb[0].mxu0
  %659 = vdwg.mxu0
  %v660 = vadd.f32 %v586, %v657
  %v661 = vtanh.pop %v660
  %s662 = scalar_lea.vmem [#allocation3], 40
  %663 = vst.msk [vmem:[%s662] sm:$0xff] %vm183, %v661
  %s664 = scalar_lea.vmem [#allocation2], 48
  %v665 = vld [vmem:[%s664] sm:$0xff]
  %v667 = vsel %vm183, %v661, 0
  %669 = vmatprep.subr.mxu0 0.0
  %670 = vmatpush1.msra.mxu0 %v34
  %671 = vmatprep.subr.mxu0 0.0
  %672 = vmatpush1.msra.mxu0 %v35
  %673 = vmatprep.subr.mxu0 0.0
  %674 = vmatpush1.msra.mxu0 %v36
  %675 = vmatprep.subr.mxu0 0.0
  %676 = vmatpush1.msra.mxu0 %v37
  %677 = vmatprep.subr.mxu0 0.0
  %678 = vmatpush1.msra.mxu0 0.0
  %679 = vmatprep.subr.mxu0 0.0
  %680 = vmatpush1.msra.mxu0 0.0
  %681 = vmatprep.subr.mxu0 0.0
  %682 = vmatpush1.msra.mxu0 0.0
  %683 = vmatprep.subr.mxu0 0.0
  %684 = vmatpush1.msra.mxu0 0.0
  %685 = vmatprep.subr.mxu0 0.0
  %686 = vmatpush1.msra.mxu0 0.0
  %687 = vmatprep.subr.mxu0 0.0
  %688 = vmatpush1.msra.mxu0 0.0
  %689 = vmatprep.subr.mxu0 0.0
  %690 = vmatpush1.msra.mxu0 0.0
  %691 = vmatprep.subr.mxu0 0.0
  %692 = vmatpush1.msra.mxu0 0.0
  %693 = vmatprep.subr.mxu0 0.0
  %694 = vmatpush1.msra.mxu0 0.0
  %695 = vmatprep.subr.mxu0 0.0
  %696 = vmatpush1.msra.mxu0 0.0
  %697 = vmatprep.subr.mxu0 0.0
  %698 = vmatpush1.msra.mxu0 0.0
  %699 = vmatprep.subr.mxu0 0.0
  %700 = vmatpush1.msra.mxu0 0.0
  %701 = vmatprep.subr.mxu0 0.0
  %702 = vmatpush1.msra.mxu0 0.0
  %703 = vmatprep.subr.mxu0 0.0
  %704 = vmatpush1.msra.mxu0 0.0
  %705 = vmatprep.subr.mxu0 0.0
  %706 = vmatpush1.msra.mxu0 0.0
  %707 = vmatprep.subr.mxu0 0.0
  %708 = vmatpush1.msra.mxu0 0.0
  %709 = vmatprep.subr.mxu0 0.0
  %710 = vmatpush1.msra.mxu0 0.0
  %711 = vmatprep.subr.mxu0 0.0
  %712 = vmatpush1.msra.mxu0 0.0
  %713 = vmatprep.subr.mxu0 0.0
  %714 = vmatpush1.msra.mxu0 0.0
  %715 = vmatprep.subr.mxu0 0.0
  %716 = vmatpush1.msra.mxu0 0.0
  %717 = vmatprep.subr.mxu0 0.0
  %718 = vmatpush1.msra.mxu0 0.0
  %719 = vmatprep.subr.mxu0 0.0
  %720 = vmatpush1.msra.mxu0 0.0
  %721 = vmatprep.subr.mxu0 0.0
  %722 = vmatpush1.msra.mxu0 0.0
  %723 = vmatprep.subr.mxu0 0.0
  %724 = vmatpush1.msra.mxu0 0.0
  %725 = vmatprep.subr.mxu0 0.0
  %726 = vmatpush1.msra.mxu0 0.0
  %727 = vmatprep.subr.mxu0 0.0
  %728 = vmatpush1.msra.mxu0 0.0
  %729 = vmatprep.subr.mxu0 0.0
  %730 = vmatpush1.msra.mxu0 0.0
  %731 = vmatprep.subr.mxu0 0.0
  %732 = vmatpush1.msra.mxu0 0.0
  %733 = vmatprep.mubr.f32.mxu0 0.0
  %734 = vmatmul.mubr.f32.gmra.mrb[0].mxu0 %v667
  %v735 = vpop.f32.mrb[0].mxu0
  %v736 = vadd.f32 0.0, %v735
  %v737 = vpop.f32.mrb[0].mxu0
  %738 = vdwg.mxu0
  %v739 = vadd.f32 %v665, %v736
  %v740 = vtanh.pop %v739
  %s741 = scalar_lea.vmem [#allocation3], 48
  %742 = vst.msk [vmem:[%s741] sm:$0xff] %vm183, %v740
  %s743 = scalar_lea.vmem [#allocation2], 56
  %v744 = vld [vmem:[%s743] sm:$0xff]
  %v746 = vsel %vm183, %v740, 0
  %748 = vmatprep.subr.mxu0 0.0
  %749 = vmatpush1.msra.mxu0 %v34
  %750 = vmatprep.subr.mxu0 0.0
  %751 = vmatpush1.msra.mxu0 %v35
  %752 = vmatprep.subr.mxu0 0.0
  %753 = vmatpush1.msra.mxu0 %v36
  %754 = vmatprep.subr.mxu0 0.0
  %755 = vmatpush1.msra.mxu0 %v37
  %756 = vmatprep.subr.mxu0 0.0
  %757 = vmatpush1.msra.mxu0 0.0
  %758 = vmatprep.subr.mxu0 0.0
  %759 = vmatpush1.msra.mxu0 0.0
  %760 = vmatprep.subr.mxu0 0.0
  %761 = vmatpush1.msra.mxu0 0.0
  %762 = vmatprep.subr.mxu0 0.0
  %763 = vmatpush1.msra.mxu0 0.0
  %764 = vmatprep.subr.mxu0 0.0
  %765 = vmatpush1.msra.mxu0 0.0
  %766 = vmatprep.subr.mxu0 0.0
  %767 = vmatpush1.msra.mxu0 0.0
  %768 = vmatprep.subr.mxu0 0.0
  %769 = vmatpush1.msra.mxu0 0.0
  %770 = vmatprep.subr.mxu0 0.0
  %771 = vmatpush1.msra.mxu0 0.0
  %772 = vmatprep.subr.mxu0 0.0
  %773 = vmatpush1.msra.mxu0 0.0
  %774 = vmatprep.subr.mxu0 0.0
  %775 = vmatpush1.msra.mxu0 0.0
  %776 = vmatprep.subr.mxu0 0.0
  %777 = vmatpush1.msra.mxu0 0.0
  %778 = vmatprep.subr.mxu0 0.0
  %779 = vmatpush1.msra.mxu0 0.0
  %780 = vmatprep.subr.mxu0 0.0
  %781 = vmatpush1.msra.mxu0 0.0
  %782 = vmatprep.subr.mxu0 0.0
  %783 = vmatpush1.msra.mxu0 0.0
  %784 = vmatprep.subr.mxu0 0.0
  %785 = vmatpush1.msra.mxu0 0.0
  %786 = vmatprep.subr.mxu0 0.0
  %787 = vmatpush1.msra.mxu0 0.0
  %788 = vmatprep.subr.mxu0 0.0
  %789 = vmatpush1.msra.mxu0 0.0
  %790 = vmatprep.subr.mxu0 0.0
  %791 = vmatpush1.msra.mxu0 0.0
  %792 = vmatprep.subr.mxu0 0.0
  %793 = vmatpush1.msra.mxu0 0.0
  %794 = vmatprep.subr.mxu0 0.0
  %795 = vmatpush1.msra.mxu0 0.0
  %796 = vmatprep.subr.mxu0 0.0
  %797 = vmatpush1.msra.mxu0 0.0
  %798 = vmatprep.subr.mxu0 0.0
  %799 = vmatpush1.msra.mxu0 0.0
  %800 = vmatprep.subr.mxu0 0.0
  %801 = vmatpush1.msra.mxu0 0.0
  %802 = vmatprep.subr.mxu0 0.0
  %803 = vmatpush1.msra.mxu0 0.0
  %804 = vmatprep.subr.mxu0 0.0
  %805 = vmatpush1.msra.mxu0 0.0
  %806 = vmatprep.subr.mxu0 0.0
  %807 = vmatpush1.msra.mxu0 0.0
  %808 = vmatprep.subr.mxu0 0.0
  %809 = vmatpush1.msra.mxu0 0.0
  %810 = vmatprep.subr.mxu0 0.0
  %811 = vmatpush1.msra.mxu0 0.0
  %812 = vmatprep.mubr.f32.mxu0 0.0
  %813 = vmatmul.mubr.f32.gmra.mrb[0].mxu0 %v746
  %v814 = vpop.f32.mrb[0].mxu0
  %v815 = vadd.f32 0.0, %v814
  %v816 = vpop.f32.mrb[0].mxu0
  %817 = vdwg.mxu0
  %v818 = vadd.f32 %v744, %v815
  %v819 = vtanh.pop %v818
  %s820 = scalar_lea.vmem [#allocation3], 56
  %821 = vst.msk [vmem:[%s820] sm:$0xff] %vm183, %v819
  %v822 = vld [vmem:[%s4] sm:$0xff]
  %v823 = vld [vmem:[%s4 + $0x8] sm:$0xff]
  %v824 = vld [vmem:[%s4 + $0x10] sm:$0xff]
  %v825 = vld [vmem:[%s4 + $0x18] sm:$0xff]
  %v826 = vld [vmem:[%s5] sm:$0xff]
  %v827 = vld [vmem:[%s5 + $0x8] sm:$0xff]
  %v828 = vld [vmem:[%s5 + $0x10] sm:$0xff]
  %v829 = vld [vmem:[%s5 + $0x18] sm:$0xff]
  %v830 = vld [vmem:[%s6] sm:$0x1]
  %v831 = vld [vmem:[#allocation3] sm:$0xff]
  %v832 = vld [vmem:[#allocation3 + $0x8] sm:$0xff]
  %v833 = vld [vmem:[#allocation3 + $0x10] sm:$0xff]
  %v834 = vld [vmem:[#allocation3 + $0x18] sm:$0xff]
  %v835 = vld [vmem:[#allocation3 + $0x20] sm:$0xff]
  %v836 = vld [vmem:[#allocation3 + $0x28] sm:$0xff]
  %v837 = vld [vmem:[#allocation3 + $0x30] sm:$0xff]
  %v838 = vld [vmem:[#allocation3 + $0x38] sm:$0xff]
  %v840 = vlaneseq
  %v841 = vshrl.u32 %v840, 7
  %v842 = vsub.s32 0, %v841
  %v843 = vrot.slane %v830, %v842
  %v846 = vsel %vm183, %v831, 0
  %v849 = vsel %vm183, %v832, 0
  %v852 = vsel %vm183, %v833, 0
  %v855 = vsel %vm183, %v834, 0
  %v858 = vsel %vm183, %v835, 0
  %v861 = vsel %vm183, %v836, 0
  %v864 = vsel %vm183, %v837, 0
  %v867 = vsel %vm183, %v838, 0
  %869 = vmatprep.subr.mxu0 0.0
  %870 = vmatpush1.msra.mxu0 %v822
  %871 = vmatprep.subr.mxu0 0.0
  %872 = vmatpush1.msra.mxu0 %v823
  %873 = vmatprep.subr.mxu0 0.0
  %874 = vmatpush1.msra.mxu0 %v824
  %875 = vmatprep.subr.mxu0 0.0
  %876 = vmatpush1.msra.mxu0 %v825
  %877 = vmatprep.subr.mxu0 0.0
  %878 = vmatpush1.msra.mxu0 0.0
  %879 = vmatprep.subr.mxu0 0.0
  %880 = vmatpush1.msra.mxu0 0.0
  %881 = vmatprep.subr.mxu0 0.0
  %882 = vmatpush1.msra.mxu0 0.0
  %883 = vmatprep.subr.mxu0 0.0
  %884 = vmatpush1.msra.mxu0 0.0
  %885 = vmatprep.subr.mxu0 0.0
  %886 = vmatpush1.msra.mxu0 0.0
  %887 = vmatprep.subr.mxu0 0.0
  %888 = vmatpush1.msra.mxu0 0.0
  %889 = vmatprep.subr.mxu0 0.0
  %890 = vmatpush1.msra.mxu0 0.0
  %891 = vmatprep.subr.mxu0 0.0
  %892 = vmatpush1.msra.mxu0 0.0
  %893 = vmatprep.subr.mxu0 0.0
  %894 = vmatpush1.msra.mxu0 0.0
  %895 = vmatprep.subr.mxu0 0.0
  %896 = vmatpush1.msra.mxu0 0.0
  %897 = vmatprep.subr.mxu0 0.0
  %898 = vmatpush1.msra.mxu0 0.0
  %899 = vmatprep.subr.mxu0 0.0
  %900 = vmatpush1.msra.mxu0 0.0
  %901 = vmatprep.subr.mxu0 0.0
  %902 = vmatpush1.msra.mxu0 0.0
  %903 = vmatprep.subr.mxu0 0.0
  %904 = vmatpush1.msra.mxu0 0.0
  %905 = vmatprep.subr.mxu0 0.0
  %906 = vmatpush1.msra.mxu0 0.0
  %907 = vmatprep.subr.mxu0 0.0
  %908 = vmatpush1.msra.mxu0 0.0
  %909 = vmatprep.subr.mxu0 0.0
  %910 = vmatpush1.msra.mxu0 0.0
  %911 = vmatprep.subr.mxu0 0.0
  %912 = vmatpush1.msra.mxu0 0.0
  %913 = vmatprep.subr.mxu0 0.0
  %914 = vmatpush1.msra.mxu0 0.0
  %915 = vmatprep.subr.mxu0 0.0
  %916 = vmatpush1.msra.mxu0 0.0
  %917 = vmatprep.subr.mxu0 0.0
  %918 = vmatpush1.msra.mxu0 0.0
  %919 = vmatprep.subr.mxu0 0.0
  %920 = vmatpush1.msra.mxu0 0.0
  %921 = vmatprep.subr.mxu0 0.0
  %922 = vmatpush1.msra.mxu0 0.0
  %923 = vmatprep.subr.mxu0 0.0
  %924 = vmatpush1.msra.mxu0 0.0
  %925 = vmatprep.subr.mxu0 0.0
  %926 = vmatpush1.msra.mxu0 0.0
  %927 = vmatprep.subr.mxu0 0.0
  %928 = vmatpush1.msra.mxu0 0.0
  %929 = vmatprep.subr.mxu0 0.0
  %930 = vmatpush1.msra.mxu0 0.0
  %931 = vmatprep.subr.mxu0 0.0
  %932 = vmatpush1.msra.mxu0 0.0
  %933 = vmatprep.mubr.f32.mxu0 0.0
  %934 = vmatmul.mubr.f32.gmra.mrb[0].mxu0 %v846
  %v935 = vpop.f32.mrb[0].mxu0
  %v936 = vadd.f32 %v843, %v935
  %v937 = vpop.f32.mrb[0].mxu0
  %938 = vmatprep.mubr.f32.mxu0 0.0
  %939 = vmatmul.mubr.f32.gmra.mrb[0].mxu0 %v849
  %v940 = vpop.f32.mrb[0].mxu0
  %v941 = vadd.f32 %v843, %v940
  %v942 = vpop.f32.mrb[0].mxu0
  %943 = vmatprep.mubr.f32.mxu0 0.0
  %944 = vmatmul.mubr.f32.gmra.mrb[0].mxu0 %v852
  %v945 = vpop.f32.mrb[0].mxu0
  %v946 = vadd.f32 %v843, %v945
  %v947 = vpop.f32.mrb[0].mxu0
  %948 = vmatprep.mubr.f32.mxu0 0.0
  %949 = vmatmul.mubr.f32.gmra.mrb[0].mxu0 %v855
  %v950 = vpop.f32.mrb[0].mxu0
  %v951 = vadd.f32 %v843, %v950
  %v952 = vpop.f32.mrb[0].mxu0
  %953 = vmatprep.mubr.f32.mxu0 0.0
  %954 = vmatmul.mubr.f32.gmra.mrb[0].mxu0 %v858
  %v955 = vpop.f32.mrb[0].mxu0
  %v956 = vadd.f32 %v843, %v955
  %v957 = vpop.f32.mrb[0].mxu0
  %958 = vmatprep.mubr.f32.mxu0 0.0
  %959 = vmatmul.mubr.f32.gmra.mrb[0].mxu0 %v861
  %v960 = vpop.f32.mrb[0].mxu0
  %v961 = vadd.f32 %v843, %v960
  %v962 = vpop.f32.mrb[0].mxu0
  %963 = vmatprep.mubr.f32.mxu0 0.0
  %964 = vmatmul.mubr.f32.gmra.mrb[0].mxu0 %v864
  %v965 = vpop.f32.mrb[0].mxu0
  %v966 = vadd.f32 %v843, %v965
  %v967 = vpop.f32.mrb[0].mxu0
  %968 = vmatprep.mubr.f32.mxu0 0.0
  %969 = vmatmul.mubr.f32.gmra.mrb[0].mxu0 %v867
  %v970 = vpop.f32.mrb[0].mxu0
  %v971 = vadd.f32 %v843, %v970
  %v972 = vpop.f32.mrb[0].mxu0
  %973 = vdwg.mxu0
  %974 = vst.msk [vmem:[#allocation2] sm:$0xff] %vm183, %v936
  %975 = vst.msk [vmem:[#allocation2 + $0x8] sm:$0xff] %vm183, %v941
  %976 = vst.msk [vmem:[#allocation2 + $0x10] sm:$0xff] %vm183, %v946
  %977 = vst.msk [vmem:[#allocation2 + $0x18] sm:$0xff] %vm183, %v951
  %978 = vst.msk [vmem:[#allocation2 + $0x20] sm:$0xff] %vm183, %v956
  %979 = vst.msk [vmem:[#allocation2 + $0x28] sm:$0xff] %vm183, %v961
  %980 = vst.msk [vmem:[#allocation2 + $0x30] sm:$0xff] %vm183, %v966
  %981 = vst.msk [vmem:[#allocation2 + $0x38] sm:$0xff] %vm183, %v971
  %v982 = vld [vmem:[#allocation2] sm:$0xff]
  %983 = vmatprep.subr.mxu0 0.0
  %984 = vmatpush1.msra.mxu0 %v826
  %985 = vmatprep.subr.mxu0 0.0
  %986 = vmatpush1.msra.mxu0 %v827
  %987 = vmatprep.subr.mxu0 0.0
  %988 = vmatpush1.msra.mxu0 %v828
  %989 = vmatprep.subr.mxu0 0.0
  %990 = vmatpush1.msra.mxu0 %v829
  %991 = vmatprep.subr.mxu0 0.0
  %992 = vmatpush1.msra.mxu0 0.0
  %993 = vmatprep.subr.mxu0 0.0
  %994 = vmatpush1.msra.mxu0 0.0
  %995 = vmatprep.subr.mxu0 0.0
  %996 = vmatpush1.msra.mxu0 0.0
  %997 = vmatprep.subr.mxu0 0.0
  %998 = vmatpush1.msra.mxu0 0.0
  %999 = vmatprep.subr.mxu0 0.0
  %1000 = vmatpush1.msra.mxu0 0.0
  %1001 = vmatprep.subr.mxu0 0.0
  %1002 = vmatpush1.msra.mxu0 0.0
  %1003 = vmatprep.subr.mxu0 0.0
  %1004 = vmatpush1.msra.mxu0 0.0
  %1005 = vmatprep.subr.mxu0 0.0
  %1006 = vmatpush1.msra.mxu0 0.0
  %1007 = vmatprep.subr.mxu0 0.0
  %1008 = vmatpush1.msra.mxu0 0.0
  %1009 = vmatprep.subr.mxu0 0.0
  %1010 = vmatpush1.msra.mxu0 0.0
  %1011 = vmatprep.subr.mxu0 0.0
  %1012 = vmatpush1.msra.mxu0 0.0
  %1013 = vmatprep.subr.mxu0 0.0
  %1014 = vmatpush1.msra.mxu0 0.0
  %1015 = vmatprep.subr.mxu0 0.0
  %1016 = vmatpush1.msra.mxu0 0.0
  %1017 = vmatprep.subr.mxu0 0.0
  %1018 = vmatpush1.msra.mxu0 0.0
  %1019 = vmatprep.subr.mxu0 0.0
  %1020 = vmatpush1.msra.mxu0 0.0
  %1021 = vmatprep.subr.mxu0 0.0
  %1022 = vmatpush1.msra.mxu0 0.0
  %1023 = vmatprep.subr.mxu0 0.0
  %1024 = vmatpush1.msra.mxu0 0.0
  %1025 = vmatprep.subr.mxu0 0.0
  %1026 = vmatpush1.msra.mxu0 0.0
  %1027 = vmatprep.subr.mxu0 0.0
  %1028 = vmatpush1.msra.mxu0 0.0
  %1029 = vmatprep.subr.mxu0 0.0
  %1030 = vmatpush1.msra.mxu0 0.0
  %1031 = vmatprep.subr.mxu0 0.0
  %1032 = vmatpush1.msra.mxu0 0.0
  %1033 = vmatprep.subr.mxu0 0.0
  %1034 = vmatpush1.msra.mxu0 0.0
  %1035 = vmatprep.subr.mxu0 0.0
  %1036 = vmatpush1.msra.mxu0 0.0
  %1037 = vmatprep.subr.mxu0 0.0
  %1038 = vmatpush1.msra.mxu0 0.0
  %1039 = vmatprep.subr.mxu0 0.0
  %1040 = vmatpush1.msra.mxu0 0.0
  %1041 = vmatprep.subr.mxu0 0.0
  %1042 = vmatpush1.msra.mxu0 0.0
  %1043 = vmatprep.subr.mxu0 0.0
  %1044 = vmatpush1.msra.mxu0 0.0
  %1045 = vmatprep.subr.mxu0 0.0
  %1046 = vmatpush1.msra.mxu0 0.0
  %1047 = vmatprep.mubr.f32.mxu0 0.0
  %1048 = vmatmul.mubr.f32.gmra.mrb[0].mxu0 %v194
  %v1049 = vpop.f32.mrb[0].mxu0
  %v1050 = vadd.f32 0.0, %v1049
  %v1051 = vpop.f32.mrb[0].mxu0
  %1052 = vdwg.mxu0
  %v1053 = vadd.f32 %v982, %v1050
  %v1054 = vtanh.pop %v1053
  %v1055 = vld [vmem:[%s269] sm:$0xff]
  %v1057 = vsel %vm183, %v1054, 0
  %1059 = vmatprep.subr.mxu0 0.0
  %1060 = vmatpush1.msra.mxu0 %v826
  %1061 = vmatprep.subr.mxu0 0.0
  %1062 = vmatpush1.msra.mxu0 %v827
  %1063 = vmatprep.subr.mxu0 0.0
  %1064 = vmatpush1.msra.mxu0 %v828
  %1065 = vmatprep.subr.mxu0 0.0
  %1066 = vmatpush1.msra.mxu0 %v829
  %1067 = vmatprep.subr.mxu0 0.0
  %1068 = vmatpush1.msra.mxu0 0.0
  %1069 = vmatprep.subr.mxu0 0.0
  %1070 = vmatpush1.msra.mxu0 0.0
  %1071 = vmatprep.subr.mxu0 0.0
  %1072 = vmatpush1.msra.mxu0 0.0
  %1073 = vmatprep.subr.mxu0 0.0
  %1074 = vmatpush1.msra.mxu0 0.0
  %1075 = vmatprep.subr.mxu0 0.0
  %1076 = vmatpush1.msra.mxu0 0.0
  %1077 = vmatprep.subr.mxu0 0.0
  %1078 = vmatpush1.msra.mxu0 0.0
  %1079 = vmatprep.subr.mxu0 0.0
  %1080 = vmatpush1.msra.mxu0 0.0
  %1081 = vmatprep.subr.mxu0 0.0
  %1082 = vmatpush1.msra.mxu0 0.0
  %1083 = vmatprep.subr.mxu0 0.0
  %1084 = vmatpush1.msra.mxu0 0.0
  %1085 = vmatprep.subr.mxu0 0.0
  %1086 = vmatpush1.msra.mxu0 0.0
  %1087 = vmatprep.subr.mxu0 0.0
  %1088 = vmatpush1.msra.mxu0 0.0
  %1089 = vmatprep.subr.mxu0 0.0
  %1090 = vmatpush1.msra.mxu0 0.0
  %1091 = vmatprep.subr.mxu0 0.0
  %1092 = vmatpush1.msra.mxu0 0.0
  %1093 = vmatprep.subr.mxu0 0.0
  %1094 = vmatpush1.msra.mxu0 0.0
  %1095 = vmatprep.subr.mxu0 0.0
  %1096 = vmatpush1.msra.mxu0 0.0
  %1097 = vmatprep.subr.mxu0 0.0
  %1098 = vmatpush1.msra.mxu0 0.0
  %1099 = vmatprep.subr.mxu0 0.0
  %1100 = vmatpush1.msra.mxu0 0.0
  %1101 = vmatprep.subr.mxu0 0.0
  %1102 = vmatpush1.msra.mxu0 0.0
  %1103 = vmatprep.subr.mxu0 0.0
  %1104 = vmatpush1.msra.mxu0 0.0
  %1105 = vmatprep.subr.mxu0 0.0
  %1106 = vmatpush1.msra.mxu0 0.0
  %1107 = vmatprep.subr.mxu0 0.0
  %1108 = vmatpush1.msra.mxu0 0.0
  %1109 = vmatprep.subr.mxu0 0.0
  %1110 = vmatpush1.msra.mxu0 0.0
  %1111 = vmatprep.subr.mxu0 0.0
  %1112 = vmatpush1.msra.mxu0 0.0
  %1113 = vmatprep.subr.mxu0 0.0
  %1114 = vmatpush1.msra.mxu0 0.0
  %1115 = vmatprep.subr.mxu0 0.0
  %1116 = vmatpush1.msra.mxu0 0.0
  %1117 = vmatprep.subr.mxu0 0.0
  %1118 = vmatpush1.msra.mxu0 0.0
  %1119 = vmatprep.subr.mxu0 0.0
  %1120 = vmatpush1.msra.mxu0 0.0
  %1121 = vmatprep.subr.mxu0 0.0
  %1122 = vmatpush1.msra.mxu0 0.0
  %1123 = vmatprep.mubr.f32.mxu0 0.0
  %1124 = vmatmul.mubr.f32.gmra.mrb[0].mxu0 %v1057
  %v1125 = vpop.f32.mrb[0].mxu0
  %v1126 = vadd.f32 0.0, %v1125
  %v1127 = vpop.f32.mrb[0].mxu0
  %1128 = vdwg.mxu0
  %v1129 = vadd.f32 %v1055, %v1126
  %v1130 = vtanh.pop %v1129
  %v1131 = vld [vmem:[%s348] sm:$0xff]
  %v1133 = vsel %vm183, %v1130, 0
  %1135 = vmatprep.subr.mxu0 0.0
  %1136 = vmatpush1.msra.mxu0 %v826
  %1137 = vmatprep.subr.mxu0 0.0
  %1138 = vmatpush1.msra.mxu0 %v827
  %1139 = vmatprep.subr.mxu0 0.0
  %1140 = vmatpush1.msra.mxu0 %v828
  %1141 = vmatprep.subr.mxu0 0.0
  %1142 = vmatpush1.msra.mxu0 %v829
  %1143 = vmatprep.subr.mxu0 0.0
  %1144 = vmatpush1.msra.mxu0 0.0
  %1145 = vmatprep.subr.mxu0 0.0
  %1146 = vmatpush1.msra.mxu0 0.0
  %1147 = vmatprep.subr.mxu0 0.0
  %1148 = vmatpush1.msra.mxu0 0.0
  %1149 = vmatprep.subr.mxu0 0.0
  %1150 = vmatpush1.msra.mxu0 0.0
  %1151 = vmatprep.subr.mxu0 0.0
  %1152 = vmatpush1.msra.mxu0 0.0
  %1153 = vmatprep.subr.mxu0 0.0
  %1154 = vmatpush1.msra.mxu0 0.0
  %1155 = vmatprep.subr.mxu0 0.0
  %1156 = vmatpush1.msra.mxu0 0.0
  %1157 = vmatprep.subr.mxu0 0.0
  %1158 = vmatpush1.msra.mxu0 0.0
  %1159 = vmatprep.subr.mxu0 0.0
  %1160 = vmatpush1.msra.mxu0 0.0
  %1161 = vmatprep.subr.mxu0 0.0
  %1162 = vmatpush1.msra.mxu0 0.0
  %1163 = vmatprep.subr.mxu0 0.0
  %1164 = vmatpush1.msra.mxu0 0.0
  %1165 = vmatprep.subr.mxu0 0.0
  %1166 = vmatpush1.msra.mxu0 0.0
  %1167 = vmatprep.subr.mxu0 0.0
  %1168 = vmatpush1.msra.mxu0 0.0
  %1169 = vmatprep.subr.mxu0 0.0
  %1170 = vmatpush1.msra.mxu0 0.0
  %1171 = vmatprep.subr.mxu0 0.0
  %1172 = vmatpush1.msra.mxu0 0.0
  %1173 = vmatprep.subr.mxu0 0.0
  %1174 = vmatpush1.msra.mxu0 0.0
  %1175 = vmatprep.subr.mxu0 0.0
  %1176 = vmatpush1.msra.mxu0 0.0
  %1177 = vmatprep.subr.mxu0 0.0
  %1178 = vmatpush1.msra.mxu0 0.0
  %1179 = vmatprep.subr.mxu0 0.0
  %1180 = vmatpush1.msra.mxu0 0.0
  %1181 = vmatprep.subr.mxu0 0.0
  %1182 = vmatpush1.msra.mxu0 0.0
  %1183 = vmatprep.subr.mxu0 0.0
  %1184 = vmatpush1.msra.mxu0 0.0
  %1185 = vmatprep.subr.mxu0 0.0
  %1186 = vmatpush1.msra.mxu0 0.0
  %1187 = vmatprep.subr.mxu0 0.0
  %1188 = vmatpush1.msra.mxu0 0.0
  %1189 = vmatprep.subr.mxu0 0.0
  %1190 = vmatpush1.msra.mxu0 0.0
  %1191 = vmatprep.subr.mxu0 0.0
  %1192 = vmatpush1.msra.mxu0 0.0
  %1193 = vmatprep.subr.mxu0 0.0
  %1194 = vmatpush1.msra.mxu0 0.0
  %1195 = vmatprep.subr.mxu0 0.0
  %1196 = vmatpush1.msra.mxu0 0.0
  %1197 = vmatprep.subr.mxu0 0.0
  %1198 = vmatpush1.msra.mxu0 0.0
  %1199 = vmatprep.mubr.f32.mxu0 0.0
  %1200 = vmatmul.mubr.f32.gmra.mrb[0].mxu0 %v1133
  %v1201 = vpop.f32.mrb[0].mxu0
  %v1202 = vadd.f32 0.0, %v1201
  %v1203 = vpop.f32.mrb[0].mxu0
  %1204 = vdwg.mxu0
  %v1205 = vadd.f32 %v1131, %v1202
  %v1206 = vtanh.pop %v1205
  %v1207 = vld [vmem:[%s427] sm:$0xff]
  %v1209 = vsel %vm183, %v1206, 0
  %1211 = vmatprep.subr.mxu0 0.0
  %1212 = vmatpush1.msra.mxu0 %v826
  %1213 = vmatprep.subr.mxu0 0.0
  %1214 = vmatpush1.msra.mxu0 %v827
  %1215 = vmatprep.subr.mxu0 0.0
  %1216 = vmatpush1.msra.mxu0 %v828
  %1217 = vmatprep.subr.mxu0 0.0
  %1218 = vmatpush1.msra.mxu0 %v829
  %1219 = vmatprep.subr.mxu0 0.0
  %1220 = vmatpush1.msra.mxu0 0.0
  %1221 = vmatprep.subr.mxu0 0.0
  %1222 = vmatpush1.msra.mxu0 0.0
  %1223 = vmatprep.subr.mxu0 0.0
  %1224 = vmatpush1.msra.mxu0 0.0
  %1225 = vmatprep.subr.mxu0 0.0
  %1226 = vmatpush1.msra.mxu0 0.0
  %1227 = vmatprep.subr.mxu0 0.0
  %1228 = vmatpush1.msra.mxu0 0.0
  %1229 = vmatprep.subr.mxu0 0.0
  %1230 = vmatpush1.msra.mxu0 0.0
  %1231 = vmatprep.subr.mxu0 0.0
  %1232 = vmatpush1.msra.mxu0 0.0
  %1233 = vmatprep.subr.mxu0 0.0
  %1234 = vmatpush1.msra.mxu0 0.0
  %1235 = vmatprep.subr.mxu0 0.0
  %1236 = vmatpush1.msra.mxu0 0.0
  %1237 = vmatprep.subr.mxu0 0.0
  %1238 = vmatpush1.msra.mxu0 0.0
  %1239 = vmatprep.subr.mxu0 0.0
  %1240 = vmatpush1.msra.mxu0 0.0
  %1241 = vmatprep.subr.mxu0 0.0
  %1242 = vmatpush1.msra.mxu0 0.0
  %1243 = vmatprep.subr.mxu0 0.0
  %1244 = vmatpush1.msra.mxu0 0.0
  %1245 = vmatprep.subr.mxu0 0.0
  %1246 = vmatpush1.msra.mxu0 0.0
  %1247 = vmatprep.subr.mxu0 0.0
  %1248 = vmatpush1.msra.mxu0 0.0
  %1249 = vmatprep.subr.mxu0 0.0
  %1250 = vmatpush1.msra.mxu0 0.0
  %1251 = vmatprep.subr.mxu0 0.0
  %1252 = vmatpush1.msra.mxu0 0.0
  %1253 = vmatprep.subr.mxu0 0.0
  %1254 = vmatpush1.msra.mxu0 0.0
  %1255 = vmatprep.subr.mxu0 0.0
  %1256 = vmatpush1.msra.mxu0 0.0
  %1257 = vmatprep.subr.mxu0 0.0
  %1258 = vmatpush1.msra.mxu0 0.0
  %1259 = vmatprep.subr.mxu0 0.0
  %1260 = vmatpush1.msra.mxu0 0.0
  %1261 = vmatprep.subr.mxu0 0.0
  %1262 = vmatpush1.msra.mxu0 0.0
  %1263 = vmatprep.subr.mxu0 0.0
  %1264 = vmatpush1.msra.mxu0 0.0
  %1265 = vmatprep.subr.mxu0 0.0
  %1266 = vmatpush1.msra.mxu0 0.0
  %1267 = vmatprep.subr.mxu0 0.0
  %1268 = vmatpush1.msra.mxu0 0.0
  %1269 = vmatprep.subr.mxu0 0.0
  %1270 = vmatpush1.msra.mxu0 0.0
  %1271 = vmatprep.subr.mxu0 0.0
  %1272 = vmatpush1.msra.mxu0 0.0
  %1273 = vmatprep.subr.mxu0 0.0
  %1274 = vmatpush1.msra.mxu0 0.0
  %1275 = vmatprep.mubr.f32.mxu0 0.0
  %1276 = vmatmul.mubr.f32.gmra.mrb[0].mxu0 %v1209
  %v1277 = vpop.f32.mrb[0].mxu0
  %v1278 = vadd.f32 0.0, %v1277
  %v1279 = vpop.f32.mrb[0].mxu0
  %1280 = vdwg.mxu0
  %v1281 = vadd.f32 %v1207, %v1278
  %v1282 = vtanh.pop %v1281
  %v1283 = vld [vmem:[%s506] sm:$0xff]
  %v1285 = vsel %vm183, %v1282, 0
  %1287 = vmatprep.subr.mxu0 0.0
  %1288 = vmatpush1.msra.mxu0 %v826
  %1289 = vmatprep.subr.mxu0 0.0
  %1290 = vmatpush1.msra.mxu0 %v827
  %1291 = vmatprep.subr.mxu0 0.0
  %1292 = vmatpush1.msra.mxu0 %v828
  %1293 = vmatprep.subr.mxu0 0.0
  %1294 = vmatpush1.msra.mxu0 %v829
  %1295 = vmatprep.subr.mxu0 0.0
  %1296 = vmatpush1.msra.mxu0 0.0
  %1297 = vmatprep.subr.mxu0 0.0
  %1298 = vmatpush1.msra.mxu0 0.0
  %1299 = vmatprep.subr.mxu0 0.0
  %1300 = vmatpush1.msra.mxu0 0.0
  %1301 = vmatprep.subr.mxu0 0.0
  %1302 = vmatpush1.msra.mxu0 0.0
  %1303 = vmatprep.subr.mxu0 0.0
  %1304 = vmatpush1.msra.mxu0 0.0
  %1305 = vmatprep.subr.mxu0 0.0
  %1306 = vmatpush1.msra.mxu0 0.0
  %1307 = vmatprep.subr.mxu0 0.0
  %1308 = vmatpush1.msra.mxu0 0.0
  %1309 = vmatprep.subr.mxu0 0.0
  %1310 = vmatpush1.msra.mxu0 0.0
  %1311 = vmatprep.subr.mxu0 0.0
  %1312 = vmatpush1.msra.mxu0 0.0
  %1313 = vmatprep.subr.mxu0 0.0
  %1314 = vmatpush1.msra.mxu0 0.0
  %1315 = vmatprep.subr.mxu0 0.0
  %1316 = vmatpush1.msra.mxu0 0.0
  %1317 = vmatprep.subr.mxu0 0.0
  %1318 = vmatpush1.msra.mxu0 0.0
  %1319 = vmatprep.subr.mxu0 0.0
  %1320 = vmatpush1.msra.mxu0 0.0
  %1321 = vmatprep.subr.mxu0 0.0
  %1322 = vmatpush1.msra.mxu0 0.0
  %1323 = vmatprep.subr.mxu0 0.0
  %1324 = vmatpush1.msra.mxu0 0.0
  %1325 = vmatprep.subr.mxu0 0.0
  %1326 = vmatpush1.msra.mxu0 0.0
  %1327 = vmatprep.subr.mxu0 0.0
  %1328 = vmatpush1.msra.mxu0 0.0
  %1329 = vmatprep.subr.mxu0 0.0
  %1330 = vmatpush1.msra.mxu0 0.0
  %1331 = vmatprep.subr.mxu0 0.0
  %1332 = vmatpush1.msra.mxu0 0.0
  %1333 = vmatprep.subr.mxu0 0.0
  %1334 = vmatpush1.msra.mxu0 0.0
  %1335 = vmatprep.subr.mxu0 0.0
  %1336 = vmatpush1.msra.mxu0 0.0
  %1337 = vmatprep.subr.mxu0 0.0
  %1338 = vmatpush1.msra.mxu0 0.0
  %1339 = vmatprep.subr.mxu0 0.0
  %1340 = vmatpush1.msra.mxu0 0.0
  %1341 = vmatprep.subr.mxu0 0.0
  %1342 = vmatpush1.msra.mxu0 0.0
  %1343 = vmatprep.subr.mxu0 0.0
  %1344 = vmatpush1.msra.mxu0 0.0
  %1345 = vmatprep.subr.mxu0 0.0
  %1346 = vmatpush1.msra.mxu0 0.0
  %1347 = vmatprep.subr.mxu0 0.0
  %1348 = vmatpush1.msra.mxu0 0.0
  %1349 = vmatprep.subr.mxu0 0.0
  %1350 = vmatpush1.msra.mxu0 0.0
  %1351 = vmatprep.mubr.f32.mxu0 0.0
  %1352 = vmatmul.mubr.f32.gmra.mrb[0].mxu0 %v1285
  %v1353 = vpop.f32.mrb[0].mxu0
  %v1354 = vadd.f32 0.0, %v1353
  %v1355 = vpop.f32.mrb[0].mxu0
  %1356 = vdwg.mxu0
  %v1357 = vadd.f32 %v1283, %v1354
  %v1358 = vtanh.pop %v1357
  %v1359 = vld [vmem:[%s585] sm:$0xff]
  %v1361 = vsel %vm183, %v1358, 0
  %1363 = vmatprep.subr.mxu0 0.0
  %1364 = vmatpush1.msra.mxu0 %v826
  %1365 = vmatprep.subr.mxu0 0.0
  %1366 = vmatpush1.msra.mxu0 %v827
  %1367 = vmatprep.subr.mxu0 0.0
  %1368 = vmatpush1.msra.mxu0 %v828
  %1369 = vmatprep.subr.mxu0 0.0
  %1370 = vmatpush1.msra.mxu0 %v829
  %1371 = vmatprep.subr.mxu0 0.0
  %1372 = vmatpush1.msra.mxu0 0.0
  %1373 = vmatprep.subr.mxu0 0.0
  %1374 = vmatpush1.msra.mxu0 0.0
  %1375 = vmatprep.subr.mxu0 0.0
  %1376 = vmatpush1.msra.mxu0 0.0
  %1377 = vmatprep.subr.mxu0 0.0
  %1378 = vmatpush1.msra.mxu0 0.0
  %1379 = vmatprep.subr.mxu0 0.0
  %1380 = vmatpush1.msra.mxu0 0.0
  %1381 = vmatprep.subr.mxu0 0.0
  %1382 = vmatpush1.msra.mxu0 0.0
  %1383 = vmatprep.subr.mxu0 0.0
  %1384 = vmatpush1.msra.mxu0 0.0
  %1385 = vmatprep.subr.mxu0 0.0
  %1386 = vmatpush1.msra.mxu0 0.0
  %1387 = vmatprep.subr.mxu0 0.0
  %1388 = vmatpush1.msra.mxu0 0.0
  %1389 = vmatprep.subr.mxu0 0.0
  %1390 = vmatpush1.msra.mxu0 0.0
  %1391 = vmatprep.subr.mxu0 0.0
  %1392 = vmatpush1.msra.mxu0 0.0
  %1393 = vmatprep.subr.mxu0 0.0
  %1394 = vmatpush1.msra.mxu0 0.0
  %1395 = vmatprep.subr.mxu0 0.0
  %1396 = vmatpush1.msra.mxu0 0.0
  %1397 = vmatprep.subr.mxu0 0.0
  %1398 = vmatpush1.msra.mxu0 0.0
  %1399 = vmatprep.subr.mxu0 0.0
  %1400 = vmatpush1.msra.mxu0 0.0
  %1401 = vmatprep.subr.mxu0 0.0
  %1402 = vmatpush1.msra.mxu0 0.0
  %1403 = vmatprep.subr.mxu0 0.0
  %1404 = vmatpush1.msra.mxu0 0.0
  %1405 = vmatprep.subr.mxu0 0.0
  %1406 = vmatpush1.msra.mxu0 0.0
  %1407 = vmatprep.subr.mxu0 0.0
  %1408 = vmatpush1.msra.mxu0 0.0
  %1409 = vmatprep.subr.mxu0 0.0
  %1410 = vmatpush1.msra.mxu0 0.0
  %1411 = vmatprep.subr.mxu0 0.0
  %1412 = vmatpush1.msra.mxu0 0.0
  %1413 = vmatprep.subr.mxu0 0.0
  %1414 = vmatpush1.msra.mxu0 0.0
  %1415 = vmatprep.subr.mxu0 0.0
  %1416 = vmatpush1.msra.mxu0 0.0
  %1417 = vmatprep.subr.mxu0 0.0
  %1418 = vmatpush1.msra.mxu0 0.0
  %1419 = vmatprep.subr.mxu0 0.0
  %1420 = vmatpush1.msra.mxu0 0.0
  %1421 = vmatprep.subr.mxu0 0.0
  %1422 = vmatpush1.msra.mxu0 0.0
  %1423 = vmatprep.subr.mxu0 0.0
  %1424 = vmatpush1.msra.mxu0 0.0
  %1425 = vmatprep.subr.mxu0 0.0
  %1426 = vmatpush1.msra.mxu0 0.0
  %1427 = vmatprep.mubr.f32.mxu0 0.0
  %1428 = vmatmul.mubr.f32.gmra.mrb[0].mxu0 %v1361
  %v1429 = vpop.f32.mrb[0].mxu0
  %v1430 = vadd.f32 0.0, %v1429
  %v1431 = vpop.f32.mrb[0].mxu0
  %1432 = vdwg.mxu0
  %v1433 = vadd.f32 %v1359, %v1430
  %v1434 = vtanh.pop %v1433
  %v1435 = vld [vmem:[%s664] sm:$0xff]
  %v1437 = vsel %vm183, %v1434, 0
  %1439 = vmatprep.subr.mxu0 0.0
  %1440 = vmatpush1.msra.mxu0 %v826
  %1441 = vmatprep.subr.mxu0 0.0
  %1442 = vmatpush1.msra.mxu0 %v827
  %1443 = vmatprep.subr.mxu0 0.0
  %1444 = vmatpush1.msra.mxu0 %v828
  %1445 = vmatprep.subr.mxu0 0.0
  %1446 = vmatpush1.msra.mxu0 %v829
  %1447 = vmatprep.subr.mxu0 0.0
  %1448 = vmatpush1.msra.mxu0 0.0
  %1449 = vmatprep.subr.mxu0 0.0
  %1450 = vmatpush1.msra.mxu0 0.0
  %1451 = vmatprep.subr.mxu0 0.0
  %1452 = vmatpush1.msra.mxu0 0.0
  %1453 = vmatprep.subr.mxu0 0.0
  %1454 = vmatpush1.msra.mxu0 0.0
  %1455 = vmatprep.subr.mxu0 0.0
  %1456 = vmatpush1.msra.mxu0 0.0
  %1457 = vmatprep.subr.mxu0 0.0
  %1458 = vmatpush1.msra.mxu0 0.0
  %1459 = vmatprep.subr.mxu0 0.0
  %1460 = vmatpush1.msra.mxu0 0.0
  %1461 = vmatprep.subr.mxu0 0.0
  %1462 = vmatpush1.msra.mxu0 0.0
  %1463 = vmatprep.subr.mxu0 0.0
  %1464 = vmatpush1.msra.mxu0 0.0
  %1465 = vmatprep.subr.mxu0 0.0
  %1466 = vmatpush1.msra.mxu0 0.0
  %1467 = vmatprep.subr.mxu0 0.0
  %1468 = vmatpush1.msra.mxu0 0.0
  %1469 = vmatprep.subr.mxu0 0.0
  %1470 = vmatpush1.msra.mxu0 0.0
  %1471 = vmatprep.subr.mxu0 0.0
  %1472 = vmatpush1.msra.mxu0 0.0
  %1473 = vmatprep.subr.mxu0 0.0
  %1474 = vmatpush1.msra.mxu0 0.0
  %1475 = vmatprep.subr.mxu0 0.0
  %1476 = vmatpush1.msra.mxu0 0.0
  %1477 = vmatprep.subr.mxu0 0.0
  %1478 = vmatpush1.msra.mxu0 0.0
  %1479 = vmatprep.subr.mxu0 0.0
  %1480 = vmatpush1.msra.mxu0 0.0
  %1481 = vmatprep.subr.mxu0 0.0
  %1482 = vmatpush1.msra.mxu0 0.0
  %1483 = vmatprep.subr.mxu0 0.0
  %1484 = vmatpush1.msra.mxu0 0.0
  %1485 = vmatprep.subr.mxu0 0.0
  %1486 = vmatpush1.msra.mxu0 0.0
  %1487 = vmatprep.subr.mxu0 0.0
  %1488 = vmatpush1.msra.mxu0 0.0
  %1489 = vmatprep.subr.mxu0 0.0
  %1490 = vmatpush1.msra.mxu0 0.0
  %1491 = vmatprep.subr.mxu0 0.0
  %1492 = vmatpush1.msra.mxu0 0.0
  %1493 = vmatprep.subr.mxu0 0.0
  %1494 = vmatpush1.msra.mxu0 0.0
  %1495 = vmatprep.subr.mxu0 0.0
  %1496 = vmatpush1.msra.mxu0 0.0
  %1497 = vmatprep.subr.mxu0 0.0
  %1498 = vmatpush1.msra.mxu0 0.0
  %1499 = vmatprep.subr.mxu0 0.0
  %1500 = vmatpush1.msra.mxu0 0.0
  %1501 = vmatprep.subr.mxu0 0.0
  %1502 = vmatpush1.msra.mxu0 0.0
  %1503 = vmatprep.mubr.f32.mxu0 0.0
  %1504 = vmatmul.mubr.f32.gmra.mrb[0].mxu0 %v1437
  %v1505 = vpop.f32.mrb[0].mxu0
  %v1506 = vadd.f32 0.0, %v1505
  %v1507 = vpop.f32.mrb[0].mxu0
  %1508 = vdwg.mxu0
  %v1509 = vadd.f32 %v1435, %v1506
  %v1510 = vtanh.pop %v1509
  %v1511 = vld [vmem:[%s743] sm:$0xff]
  %v1513 = vsel %vm183, %v1510, 0
  %1515 = vmatprep.subr.mxu0 0.0
  %1516 = vmatpush1.msra.mxu0 %v826
  %1517 = vmatprep.subr.mxu0 0.0
  %1518 = vmatpush1.msra.mxu0 %v827
  %1519 = vmatprep.subr.mxu0 0.0
  %1520 = vmatpush1.msra.mxu0 %v828
  %1521 = vmatprep.subr.mxu0 0.0
  %1522 = vmatpush1.msra.mxu0 %v829
  %1523 = vmatprep.subr.mxu0 0.0
  %1524 = vmatpush1.msra.mxu0 0.0
  %1525 = vmatprep.subr.mxu0 0.0
  %1526 = vmatpush1.msra.mxu0 0.0
  %1527 = vmatprep.subr.mxu0 0.0
  %1528 = vmatpush1.msra.mxu0 0.0
  %1529 = vmatprep.subr.mxu0 0.0
  %1530 = vmatpush1.msra.mxu0 0.0
  %1531 = vmatprep.subr.mxu0 0.0
  %1532 = vmatpush1.msra.mxu0 0.0
  %1533 = vmatprep.subr.mxu0 0.0
  %1534 = vmatpush1.msra.mxu0 0.0
  %1535 = vmatprep.subr.mxu0 0.0
  %1536 = vmatpush1.msra.mxu0 0.0
  %1537 = vmatprep.subr.mxu0 0.0
  %1538 = vmatpush1.msra.mxu0 0.0
  %1539 = vmatprep.subr.mxu0 0.0
  %1540 = vmatpush1.msra.mxu0 0.0
  %1541 = vmatprep.subr.mxu0 0.0
  %1542 = vmatpush1.msra.mxu0 0.0
  %1543 = vmatprep.subr.mxu0 0.0
  %1544 = vmatpush1.msra.mxu0 0.0
  %1545 = vmatprep.subr.mxu0 0.0
  %1546 = vmatpush1.msra.mxu0 0.0
  %1547 = vmatprep.subr.mxu0 0.0
  %1548 = vmatpush1.msra.mxu0 0.0
  %1549 = vmatprep.subr.mxu0 0.0
  %1550 = vmatpush1.msra.mxu0 0.0
  %1551 = vmatprep.subr.mxu0 0.0
  %1552 = vmatpush1.msra.mxu0 0.0
  %1553 = vmatprep.subr.mxu0 0.0
  %1554 = vmatpush1.msra.mxu0 0.0
  %1555 = vmatprep.subr.mxu0 0.0
  %1556 = vmatpush1.msra.mxu0 0.0
  %1557 = vmatprep.subr.mxu0 0.0
  %1558 = vmatpush1.msra.mxu0 0.0
  %1559 = vmatprep.subr.mxu0 0.0
  %1560 = vmatpush1.msra.mxu0 0.0
  %1561 = vmatprep.subr.mxu0 0.0
  %1562 = vmatpush1.msra.mxu0 0.0
  %1563 = vmatprep.subr.mxu0 0.0
  %1564 = vmatpush1.msra.mxu0 0.0
  %1565 = vmatprep.subr.mxu0 0.0
  %1566 = vmatpush1.msra.mxu0 0.0
  %1567 = vmatprep.subr.mxu0 0.0
  %1568 = vmatpush1.msra.mxu0 0.0
  %1569 = vmatprep.subr.mxu0 0.0
  %1570 = vmatpush1.msra.mxu0 0.0
  %1571 = vmatprep.subr.mxu0 0.0
  %1572 = vmatpush1.msra.mxu0 0.0
  %1573 = vmatprep.subr.mxu0 0.0
  %1574 = vmatpush1.msra.mxu0 0.0
  %1575 = vmatprep.subr.mxu0 0.0
  %1576 = vmatpush1.msra.mxu0 0.0
  %1577 = vmatprep.subr.mxu0 0.0
  %1578 = vmatpush1.msra.mxu0 0.0
  %1579 = vmatprep.mubr.f32.mxu0 0.0
  %1580 = vmatmul.mubr.f32.gmra.mrb[0].mxu0 %v1513
  %v1581 = vpop.f32.mrb[0].mxu0
  %v1582 = vadd.f32 0.0, %v1581
  %v1583 = vpop.f32.mrb[0].mxu0
  %1584 = vdwg.mxu0
  %v1585 = vadd.f32 %v1511, %v1582
  %v1586 = vtanh.pop %v1585
  %v1587 = vld [vmem:[%s7] sm:$0xff]
  %v1588 = vld [vmem:[%s7 + $0x8] sm:$0xff]
  %v1589 = vld [vmem:[%s7 + $0x10] sm:$0xff]
  %v1590 = vld [vmem:[%s7 + $0x18] sm:$0xff]
  %v1591 = vld [vmem:[%s8] sm:$0x1]
  %v1593 = vlaneseq
  %v1594 = vshrl.u32 %v1593, 7
  %v1595 = vsub.s32 0, %v1594
  %v1596 = vrot.slane %v1591, %v1595
  %v1599 = vsel %vm183, %v1586, 0
  %1601 = vmatprep.subr.mxu0 0.0
  %1602 = vmatpush1.msra.mxu0 %v1587
  %1603 = vmatprep.subr.mxu0 0.0
  %1604 = vmatpush1.msra.mxu0 %v1588
  %1605 = vmatprep.subr.mxu0 0.0
  %1606 = vmatpush1.msra.mxu0 %v1589
  %1607 = vmatprep.subr.mxu0 0.0
  %1608 = vmatpush1.msra.mxu0 %v1590
  %1609 = vmatprep.subr.mxu0 0.0
  %1610 = vmatpush1.msra.mxu0 0.0
  %1611 = vmatprep.subr.mxu0 0.0
  %1612 = vmatpush1.msra.mxu0 0.0
  %1613 = vmatprep.subr.mxu0 0.0
  %1614 = vmatpush1.msra.mxu0 0.0
  %1615 = vmatprep.subr.mxu0 0.0
  %1616 = vmatpush1.msra.mxu0 0.0
  %1617 = vmatprep.subr.mxu0 0.0
  %1618 = vmatpush1.msra.mxu0 0.0
  %1619 = vmatprep.subr.mxu0 0.0
  %1620 = vmatpush1.msra.mxu0 0.0
  %1621 = vmatprep.subr.mxu0 0.0
  %1622 = vmatpush1.msra.mxu0 0.0
  %1623 = vmatprep.subr.mxu0 0.0
  %1624 = vmatpush1.msra.mxu0 0.0
  %1625 = vmatprep.subr.mxu0 0.0
  %1626 = vmatpush1.msra.mxu0 0.0
  %1627 = vmatprep.subr.mxu0 0.0
  %1628 = vmatpush1.msra.mxu0 0.0
  %1629 = vmatprep.subr.mxu0 0.0
  %1630 = vmatpush1.msra.mxu0 0.0
  %1631 = vmatprep.subr.mxu0 0.0
  %1632 = vmatpush1.msra.mxu0 0.0
  %1633 = vmatprep.subr.mxu0 0.0
  %1634 = vmatpush1.msra.mxu0 0.0
  %1635 = vmatprep.subr.mxu0 0.0
  %1636 = vmatpush1.msra.mxu0 0.0
  %1637 = vmatprep.subr.mxu0 0.0
  %1638 = vmatpush1.msra.mxu0 0.0
  %1639 = vmatprep.subr.mxu0 0.0
  %1640 = vmatpush1.msra.mxu0 0.0
  %1641 = vmatprep.subr.mxu0 0.0
  %1642 = vmatpush1.msra.mxu0 0.0
  %1643 = vmatprep.subr.mxu0 0.0
  %1644 = vmatpush1.msra.mxu0 0.0
  %1645 = vmatprep.subr.mxu0 0.0
  %1646 = vmatpush1.msra.mxu0 0.0
  %1647 = vmatprep.subr.mxu0 0.0
  %1648 = vmatpush1.msra.mxu0 0.0
  %1649 = vmatprep.subr.mxu0 0.0
  %1650 = vmatpush1.msra.mxu0 0.0
  %1651 = vmatprep.subr.mxu0 0.0
  %1652 = vmatpush1.msra.mxu0 0.0
  %1653 = vmatprep.subr.mxu0 0.0
  %1654 = vmatpush1.msra.mxu0 0.0
  %1655 = vmatprep.subr.mxu0 0.0
  %1656 = vmatpush1.msra.mxu0 0.0
  %1657 = vmatprep.subr.mxu0 0.0
  %1658 = vmatpush1.msra.mxu0 0.0
  %1659 = vmatprep.subr.mxu0 0.0
  %1660 = vmatpush1.msra.mxu0 0.0
  %1661 = vmatprep.subr.mxu0 0.0
  %1662 = vmatpush1.msra.mxu0 0.0
  %1663 = vmatprep.subr.mxu0 0.0
  %1664 = vmatpush1.msra.mxu0 0.0
  %1665 = vmatprep.mubr.f32.mxu0 0.0
  %1666 = vmatmul.mubr.f32.gmra.mrb[0].mxu0 %v1599
  %v1667 = vpop.f32.mrb[0].mxu0
  %v1668 = vadd.f32 %v1596, %v1667
  %v1669 = vpop.f32.mrb[0].mxu0
  %1670 = vdwg.mxu0
  %vm1671 = vcmask 80896
  %1672 = vst.msk [vmem:[%s9] sm:$0xff] %vm1671, %v1668
  // Predicated region
  $region38: #{_rnn_forward_impl.1} parent=0 // pred_check
    _
  $region39: #{_rnn_forward_impl.1} parent=0 // pred_check_branch
    %1674 = sbr.rel (0) target = $region41
  $region40: #{_rnn_forward_impl.1} parent=0 // pred_region
    _
  $region41: #{_rnn_forward_impl.1} parent=0 // pred_fallthru
    _
  // Predicated region
  $region42: #{_rnn_forward_impl.1} parent=0 // pred_check
    _
  $region43: #{_rnn_forward_impl.1} parent=0 // pred_check_branch
    %1676 = sbr.rel (0) target = $region45
  $region44: #{_rnn_forward_impl.1} parent=0 // pred_region
    _
  $region45: #{_rnn_forward_impl.1} parent=0 // pred_fallthru
    _

</llo_original>
